<compile_context>
chip_gen: v5e
topology: v5e:2x2
jax: 0.10.0
libtpu: 0.0.40
codegen_flags: <defaults>
</compile_context>

<pallas_src>
import jax
import jax.numpy as jnp
from jax.experimental import pallas as pl
from jax.experimental.pallas import tpu as pltpu


def basic_block_se(x, conv1_w, bn1, conv2_w, bn2, se_w1, se_b1, se_w2, se_b2,
                   *, eps=1e-5, batch_block=None):
    """BasicBlock(use_se=True, stride=1, downsample=None) forward.

    x:        (B, C, H, W) f32, NCHW (PyTorch layout)
    conv1_w:  (C, C, 3, 3) OIHW, bias-free      conv2_w: (C, C, 3, 3)
    bn1, bn2: tuples (gamma, beta, running_mean, running_var), each (C,)
    se_w1: (C//16, C)   se_b1: (C//16,)   se_w2: (C, C//16)   se_b2: (C,)
    """
    B, C, H, W = x.shape
    assert conv1_w.shape == (C, C, 3, 3) and conv2_w.shape == (C, C, 3, 3), \
        "only stride=1, in_channel == out_channel supported"
    hidden = se_w1.shape[0]
    HW = H * W

    # images per grid step: largest divisor of B up to 8 (amortizes per-step pipeline
    # overhead; for production batches B >> 8 the grid stays long enough for megacore
    # sharding and DMA/compute overlap).
    if batch_block is None:
        batch_block = 1
        for d in range(1, min(B, 8) + 1):
            if B % d == 0:
                batch_block = d
    Bb = batch_block
    assert B % Bb == 0

    # guard width on each side of the flat-spatial y staging buffer: >= W+1 so every
    # shifted 3x3 tap window stays in-bounds, rounded up to 128 so the interior store is
    # lane-aligned.
    G = max(128, -(-(W + 1) // 128) * 128)

    # ----------------- wrapper-side layout plumbing (pure pad / slice / reshape) -----------------
    # conv1 im2col on the UNPADDED flat H*W grid: 9 shifted copies of x, tap-major rows.
    xpad = jnp.pad(x, ((0, 0), (0, 0), (1, 1), (1, 1)))
    xim = jnp.concatenate(
        [xpad[:, :, kh:kh + H, kw:kw + W].reshape(B, C, HW)
         for kh in range(3) for kw in range(3)], axis=1).astype(jnp.bfloat16)     # (B, 9C, HW)

    xid = x.reshape(B, C, HW).astype(jnp.float32)                                 # residual, f32

    # conv kernels flattened tap-major: col = (kh*3+kw)*C + cin  ->  (Cout, 9*Cin)
    w1s = conv1_w.transpose(0, 2, 3, 1).reshape(C, 9 * C).astype(jnp.bfloat16)
    w2s = conv2_w.transpose(0, 2, 3, 1).reshape(C, 9 * C).astype(jnp.float32)

    # eval-mode BatchNorm folded to per-channel scale / bias (inference-time constants)
    def _fold(p):
        g, b, m, v = p
        s = g / jnp.sqrt(v + eps)
        return s, b - m * s

    s1, b1c = _fold(bn1)
    s2, b2c = _fold(bn2)

    # all tiny per-channel vectors merged into one (C, 5 + 2*hidden) slab
    P = 5 + 2 * hidden
    pvec = jnp.concatenate(
        [s1.reshape(C, 1), b1c.reshape(C, 1), s2.reshape(C, 1), b2c.reshape(C, 1),
         se_b2.reshape(C, 1), se_w1.T, se_w2], axis=1).astype(jnp.float32)        # (C, P)
    sb1 = se_b1.reshape(1, hidden).astype(jnp.float32)

    # per-tap edge masks on the flat H*W grid: zero where the shifted source pixel falls
    # outside the image (also kills row-wraparound / guard garbage from the flat shifts).
    rr = jnp.arange(H)
    cc = jnp.arange(W)
    tmask = jnp.stack(
        [((rr + (kh - 1) >= 0) & (rr + (kh - 1) < H)).astype(jnp.float32)[:, None]
         * ((cc + (kw - 1) >= 0) & (cc + (kw - 1) < W)).astype(jnp.float32)[None, :]
         for kh in range(3) for kw in range(3)], axis=0).reshape(9, 1, HW)

    tap_off = [(kh - 1) * W + (kw - 1) for kh in range(3) for kw in range(3)]
    inv_hw = 1.0 / float(HW)

    def kernel(xim_ref, xid_ref, w1_ref, w2_ref, pvec_ref, sb1_ref, tmask_ref,
               o_ref, ybuf_ref, ystk_ref):
        # one-time init: zero the y staging buffer so its guard strips are finite
        # (masked taps would otherwise turn NaN*0 into NaN).  The interior is fully
        # rewritten every image, so this never repeats.
        @pl.when(pl.program_id(0) == 0)
        def _():
            ybuf_ref[...] = jnp.zeros_like(ybuf_ref)

        pv = pvec_ref[...]
        s1v, b1v = pv[:, 0:1], pv[:, 1:2]
        s2v, b2v = pv[:, 2:3], pv[:, 3:4]
        sb2v = pv[:, 4:5]
        sw1t = pv[:, 5:5 + hidden]              # (C, hidden)  fc1 weight, transposed
        sw2 = pv[:, 5 + hidden:5 + 2 * hidden]  # (C, hidden)  fc2 weight
        sb1v = sb1_ref[...]                     # (1, hidden)
        w1 = w1_ref[...]                        # (C, 9C) bf16
        w2 = w2_ref[...]                        # (C, 9C) f32
        tm = tmask_ref[...]                     # (9, 1, HW)

        for i in range(Bb):
            # ---- conv1 + bn1 + relu: one stacked-K (C,9C)@(9C,HW) bf16 MXU matmul ----
            acc1 = jnp.dot(w1, xim_ref[i], preferred_element_type=jnp.float32)
            y = jnp.maximum(acc1 * s1v + b1v, 0.0)                     # (C, HW) f32

            # ---- stage y and build conv2's stacked im2col operand (9C, HW) ----
            ybuf_ref[:, G:G + HW] = y            # lane-aligned interior store
            yb = ybuf_ref[...]                   # (C, 2G + HW)
            for k in range(9):
                off = G + tap_off[k]
                win = yb[:, off:off + HW]
                if tap_off[k] != 0:
                    win = win * tm[k]            # zero out-of-image / row-wrapped taps
                ystk_ref[k * C:(k + 1) * C, :] = win

            # ---- conv2 + bn2: one stacked-K f32 matmul ----
            acc2 = jnp.dot(w2, ystk_ref[...], preferred_element_type=jnp.float32)
            out = acc2 * s2v + b2v

            # ---- residual add + relu ----
            out = jnp.maximum(out + xid_ref[i], 0.0)                   # (C, HW)

            # ---- SE: lane-reduction squeeze + tiny VPU excitation + sigmoid gate ----
            pooled = jnp.sum(out, axis=-1, keepdims=True) * inv_hw                        # (C,1)
            h1 = jnp.maximum(jnp.sum(sw1t * pooled, axis=0, keepdims=True) + sb1v, 0.0)   # (1,h)
            g = jnp.sum(sw2 * h1, axis=-1, keepdims=True) + sb2v                          # (C,1)
            gate = 1.0 / (1.0 + jnp.exp(-g))
            o_ref[i] = (out * gate).astype(o_ref.dtype)

    # advisory cost hint: the two stacked-K 3x3 convs dominate
    flops = int(B * (4 * 9 * C * C * HW + 10 * C * HW + 4 * C * hidden))
    bytes_accessed = int(B * (2 * 9 * C * HW + 4 * C * HW + 4 * C * HW)
                         + 6 * 9 * C * C + 4 * (9 * HW + C * P + hidden))
    cost = pl.CostEstimate(flops=flops, transcendentals=int(B * C),
                           bytes_accessed=bytes_accessed)

    out_flat = pl.pallas_call(
        kernel,
        out_shape=jax.ShapeDtypeStruct((B, C, HW), x.dtype),
        grid_spec=pltpu.PrefetchScalarGridSpec(
            num_scalar_prefetch=0,
            grid=(B // Bb,),
            in_specs=[
                pl.BlockSpec((Bb, 9 * C, HW), lambda g: (g, 0, 0)),   # conv1 im2col (bf16)
                pl.BlockSpec((Bb, C, HW), lambda g: (g, 0, 0)),       # identity (f32)
                pl.BlockSpec((C, 9 * C), lambda g: (0, 0)),           # w1 taps (bf16)
                pl.BlockSpec((C, 9 * C), lambda g: (0, 0)),           # w2 taps (f32)
                pl.BlockSpec((C, P), lambda g: (0, 0)),               # merged per-channel params
                pl.BlockSpec((1, hidden), lambda g: (0, 0)),          # SE fc1 bias
                pl.BlockSpec((9, 1, HW), lambda g: (0, 0, 0)),        # per-tap edge masks
            ],
            out_specs=pl.BlockSpec((Bb, C, HW), lambda g: (g, 0, 0)),
            scratch_shapes=[
                pltpu.VMEM((C, 2 * G + HW), jnp.float32),             # guarded y staging buffer
                pltpu.VMEM((9 * C, HW), jnp.float32),                 # stacked conv2 im2col
            ],
        ),
        compiler_params=pltpu.CompilerParams(
            dimension_semantics=("parallel",)),
        cost_estimate=cost,
    )(xim, xid, w1s, w2s, pvec, sb1, tmask)

    # NCHW result via a pure metadata reshape; no post-kernel slice/copy pass.
    return out_flat.reshape(B, C, H, W)


def basic_block_ref(x, conv1_w, bn1, conv2_w, bn2, se_w1, se_b1, se_w2, se_b2, eps=1e-5):
    """Pure-JAX reference mirroring the PyTorch BasicBlock(use_se=True) forward (eval-mode BN)."""
    hi = jax.lax.Precision.HIGHEST

    def conv3x3(a, w):
        return jax.lax.conv_general_dilated(
            a, w, window_strides=(1, 1), padding=((1, 1), (1, 1)),
            dimension_numbers=("NCHW", "OIHW", "NCHW"), precision=hi)

    def bn(a, p):
        g, b, m, v = p
        return ((a - m[None, :, None, None]) / jnp.sqrt(v + eps)[None, :, None, None]
                * g[None, :, None, None] + b[None, :, None, None])

    out = jax.nn.relu(bn(conv3x3(x, conv1_w), bn1))
    out = bn(conv3x3(out, conv2_w), bn2)
    out = jax.nn.relu(out + x)
    y = jnp.mean(out, axis=(2, 3))                                          # (B, C)
    y = jax.nn.relu(jnp.dot(y, se_w1.T, precision=hi) + se_b1)              # (B, hidden)
    y = jax.nn.sigmoid(jnp.dot(y, se_w2.T, precision=hi) + se_b2)           # (B, C)
    return out * y[:, :, None, None]


if __name__ == "__main__":
    # SELayer(reduction=16) needs in_channel >= 16, so use C=32 -> hidden=2.
    B, C, H, W = 2, 32, 16, 16
    hidden = C // 16

    key = jax.random.PRNGKey(0)
    keys = jax.random.split(key, 15)

    # Round matmul operands to bf16-representable f32 so MXU products are exact regardless
    # of pass structure; only accumulation-order rounding remains.
    def q(a):
        return a.astype(jnp.bfloat16).astype(jnp.float32)

    x = q(jax.random.normal(keys[0], (B, C, H, W), dtype=jnp.float32))
    conv1_w = q(jax.random.normal(keys[1], (C, C, 3, 3), dtype=jnp.float32) * 0.08)
    conv2_w = q(jax.random.normal(keys[2], (C, C, 3, 3), dtype=jnp.float32) * 0.08)

    bn1 = (jax.random.uniform(keys[3], (C,), minval=0.5, maxval=1.5),
           0.1 * jax.random.normal(keys[4], (C,)),
           0.1 * jax.random.normal(keys[5], (C,)),
           jax.random.uniform(keys[6], (C,), minval=0.5, maxval=1.5))
    bn2 = (jax.random.uniform(keys[7], (C,), minval=0.5, maxval=1.5),
           0.1 * jax.random.normal(keys[8], (C,)),
           0.1 * jax.random.normal(keys[9], (C,)),
           jax.random.uniform(keys[10], (C,), minval=0.5, maxval=1.5))

    se_w1 = q(jax.random.normal(keys[11], (hidden, C), dtype=jnp.float32) / jnp.sqrt(float(C)))
    se_b1 = 0.1 * jax.random.normal(keys[12], (hidden,))
    se_w2 = q(jax.random.normal(keys[13], (C, hidden), dtype=jnp.float32) / jnp.sqrt(float(hidden)))
    se_b2 = 0.1 * jax.random.normal(keys[14], (C,))

    out = basic_block_se(x, conv1_w, bn1, conv2_w, bn2, se_w1, se_b1, se_w2, se_b2)
    out = jax.block_until_ready(out)

    ref = basic_block_ref(x, conv1_w, bn1, conv2_w, bn2, se_w1, se_b1, se_w2, se_b2)
    assert out.shape == (B, C, H, W)
    max_err = float(jnp.max(jnp.abs(out - ref)))
    # tolerance covers f32 accumulation-order differences between the stacked-K Pallas
    # matmuls and XLA's fused convolution
    assert jnp.allclose(out, ref, atol=2e-3, rtol=2e-3), \
        f"mismatch vs reference (max|err|={max_err})"

    print("KERNEL_OK")
</pallas_src>

<mosaic_0001>
module attributes {stable_mosaic.version = 11 : i64} {
  func.func @kernel(%arg0: i32, %arg1: memref<2x288x256xbf16, #tpu.memory_space<vmem>>, %arg2: memref<2x32x256xf32, #tpu.memory_space<vmem>>, %arg3: memref<32x288xbf16, #tpu.memory_space<vmem>>, %arg4: memref<32x288xf32, #tpu.memory_space<vmem>>, %arg5: memref<32x9xf32, #tpu.memory_space<vmem>>, %arg6: memref<1x2xf32, #tpu.memory_space<vmem>>, %arg7: memref<9x1x256xf32, #tpu.memory_space<vmem>>, %arg8: memref<2x32x256xf32, #tpu.memory_space<vmem>>, %arg9: memref<32x512xf32, #tpu.memory_space<vmem>>, %arg10: memref<288x256xf32, #tpu.memory_space<vmem>>) attributes {dimension_semantics = [#tpu.dimension_semantics<parallel>], iteration_bounds = array<i64: 1>, scalar_prefetch = 0 : i64, scratch_operands = 2 : i64, tpu.core_type = #tpu.core_type<tc>, window_params = [{transform_indices = @transform_0, window_bounds = array<i64: 2, 288, 256>}, {transform_indices = @transform_1, window_bounds = array<i64: 2, 32, 256>}, {pipeline_mode = #tpu.pipeline_mode<synchronous>, transform_indices = @transform_2, window_bounds = array<i64: 32, 288>}, {pipeline_mode = #tpu.pipeline_mode<synchronous>, transform_indices = @transform_3, window_bounds = array<i64: 32, 288>}, {pipeline_mode = #tpu.pipeline_mode<synchronous>, transform_indices = @transform_4, window_bounds = array<i64: 32, 9>}, {pipeline_mode = #tpu.pipeline_mode<synchronous>, transform_indices = @transform_5, window_bounds = array<i64: 1, 2>}, {pipeline_mode = #tpu.pipeline_mode<synchronous>, transform_indices = @transform_6, window_bounds = array<i64: 9, 1, 256>}, {transform_indices = @transform_7, window_bounds = array<i64: 2, 32, 256>}]} {
    %c0_i32 = arith.constant 0 : i32
    %0 = arith.cmpi eq, %arg0, %c0_i32 : i32
    %1 = arith.extui %0 : i1 to i32
    %c0_i32_0 = arith.constant 0 : i32
    %2 = arith.cmpi ne, %1, %c0_i32_0 : i32
    scf.if %2 {
      %cst_91 = arith.constant 0.000000e+00 : f32
      %215 = vector.broadcast %cst_91 : f32 to vector<32x512xf32>
      %c0_92 = arith.constant 0 : index
      %c0_93 = arith.constant 0 : index
      %216 = vector.load %arg9[%c0_92, %c0_93] : memref<32x512xf32, #tpu.memory_space<vmem>>, vector<32x512xf32>
      tpu.vector_store %arg9[%c0_92, %c0_93], %215 {strides = array<i32>} : memref<32x512xf32, #tpu.memory_space<vmem>>, vector<32x512xf32>,
    } else {
    }
    %c0 = arith.constant 0 : index
    %c0_1 = arith.constant 0 : index
    %3 = vector.load %arg5[%c0, %c0_1] : memref<32x9xf32, #tpu.memory_space<vmem>>, vector<32x9xf32>
    %4 = vector.extract_strided_slice %3 {offsets = [0, 0], sizes = [32, 1], strides = [1, 1]} : vector<32x9xf32> to vector<32x1xf32>
    %5 = vector.extract_strided_slice %3 {offsets = [0, 1], sizes = [32, 1], strides = [1, 1]} : vector<32x9xf32> to vector<32x1xf32>
    %6 = vector.extract_strided_slice %3 {offsets = [0, 2], sizes = [32, 1], strides = [1, 1]} : vector<32x9xf32> to vector<32x1xf32>
    %7 = vector.extract_strided_slice %3 {offsets = [0, 3], sizes = [32, 1], strides = [1, 1]} : vector<32x9xf32> to vector<32x1xf32>
    %8 = vector.extract_strided_slice %3 {offsets = [0, 4], sizes = [32, 1], strides = [1, 1]} : vector<32x9xf32> to vector<32x1xf32>
    %9 = vector.extract_strided_slice %3 {offsets = [0, 5], sizes = [32, 2], strides = [1, 1]} : vector<32x9xf32> to vector<32x2xf32>
    %10 = vector.extract_strided_slice %3 {offsets = [0, 7], sizes = [32, 2], strides = [1, 1]} : vector<32x9xf32> to vector<32x2xf32>
    %c0_2 = arith.constant 0 : index
    %c0_3 = arith.constant 0 : index
    %11 = vector.load %arg6[%c0_2, %c0_3] : memref<1x2xf32, #tpu.memory_space<vmem>>, vector<1x2xf32>
    %c0_4 = arith.constant 0 : index
    %c0_5 = arith.constant 0 : index
    %12 = vector.load %arg3[%c0_4, %c0_5] : memref<32x288xbf16, #tpu.memory_space<vmem>>, vector<32x288xbf16>
    %c0_6 = arith.constant 0 : index
    %c0_7 = arith.constant 0 : index
    %13 = vector.load %arg4[%c0_6, %c0_7] : memref<32x288xf32, #tpu.memory_space<vmem>>, vector<32x288xf32>
    %c0_8 = arith.constant 0 : index
    %c0_9 = arith.constant 0 : index
    %c0_10 = arith.constant 0 : index
    %14 = vector.load %arg7[%c0_8, %c0_9, %c0_10] : memref<9x1x256xf32, #tpu.memory_space<vmem>>, vector<9x1x256xf32>
    %c0_11 = arith.constant 0 : index
    %c0_12 = arith.constant 0 : index
    %c0_13 = arith.constant 0 : index
    %15 = vector.load %arg1[%c0_11, %c0_12, %c0_13] : memref<2x288x256xbf16, #tpu.memory_space<vmem>>, vector<1x288x256xbf16>
    %16 = vector.shape_cast %15 : vector<1x288x256xbf16> to vector<288x256xbf16>
    %cst = arith.constant dense<0.000000e+00> : vector<32x256xf32>
    %17 = tpu.matmul %12, %16, %cst {dimension_numbers = #tpu.dot_dimension_numbers<[1], [0], [0], [1], [0, 0, 1, 1], [], []>} : vector<32x288xbf16>, vector<288x256xbf16>, vector<32x256xf32> -> vector<32x256xf32>
    %18 = vector.broadcast %4 : vector<32x1xf32> to vector<32x256xf32>
    %19 = arith.mulf %17, %18 : vector<32x256xf32>
    %20 = vector.broadcast %5 : vector<32x1xf32> to vector<32x256xf32>
    %21 = arith.addf %19, %20 : vector<32x256xf32>
    %cst_14 = arith.constant 0.000000e+00 : f32
    %22 = vector.broadcast %cst_14 : f32 to vector<32x256xf32>
    %23 = arith.maximumf %21, %22 : vector<32x256xf32>
    %c0_15 = arith.constant 0 : index
    %c128 = arith.constant 128 : index
    %24 = vector.load %arg9[%c0_15, %c128] : memref<32x512xf32, #tpu.memory_space<vmem>>, vector<32x256xf32>
    tpu.vector_store %arg9[%c0_15, %c128], %23 {strides = array<i32>} : memref<32x512xf32, #tpu.memory_space<vmem>>, vector<32x256xf32>,
    %c0_16 = arith.constant 0 : index
    %c0_17 = arith.constant 0 : index
    %25 = vector.load %arg9[%c0_16, %c0_17] : memref<32x512xf32, #tpu.memory_space<vmem>>, vector<32x512xf32>
    %26 = vector.extract_strided_slice %25 {offsets = [0, 111], sizes = [32, 256], strides = [1, 1]} : vector<32x512xf32> to vector<32x256xf32>
    %27 = vector.extract_strided_slice %14 {offsets = [0, 0, 0], sizes = [1, 1, 256], strides = [1, 1, 1]} : vector<9x1x256xf32> to vector<1x1x256xf32>
    %28 = vector.shape_cast %27 : vector<1x1x256xf32> to vector<1x256xf32>
    %29 = vector.broadcast %28 : vector<1x256xf32> to vector<32x256xf32>
    %30 = arith.mulf %26, %29 : vector<32x256xf32>
    %c0_18 = arith.constant 0 : index
    %c0_19 = arith.constant 0 : index
    %31 = vector.load %arg10[%c0_18, %c0_19] : memref<288x256xf32, #tpu.memory_space<vmem>>, vector<32x256xf32>
    tpu.vector_store %arg10[%c0_18, %c0_19], %30 {strides = array<i32>} : memref<288x256xf32, #tpu.memory_space<vmem>>, vector<32x256xf32>,
    %32 = vector.extract_strided_slice %25 {offsets = [0, 112], sizes = [32, 256], strides = [1, 1]} : vector<32x512xf32> to vector<32x256xf32>
    %33 = vector.extract_strided_slice %14 {offsets = [1, 0, 0], sizes = [1, 1, 256], strides = [1, 1, 1]} : vector<9x1x256xf32> to vector<1x1x256xf32>
    %34 = vector.shape_cast %33 : vector<1x1x256xf32> to vector<1x256xf32>
    %35 = vector.broadcast %34 : vector<1x256xf32> to vector<32x256xf32>
    %36 = arith.mulf %32, %35 : vector<32x256xf32>
    %c32 = arith.constant 32 : index
    %c0_20 = arith.constant 0 : index
    %37 = vector.load %arg10[%c32, %c0_20] : memref<288x256xf32, #tpu.memory_space<vmem>>, vector<32x256xf32>
    tpu.vector_store %arg10[%c32, %c0_20], %36 {strides = array<i32>} : memref<288x256xf32, #tpu.memory_space<vmem>>, vector<32x256xf32>,
    %38 = vector.extract_strided_slice %25 {offsets = [0, 113], sizes = [32, 256], strides = [1, 1]} : vector<32x512xf32> to vector<32x256xf32>
    %39 = vector.extract_strided_slice %14 {offsets = [2, 0, 0], sizes = [1, 1, 256], strides = [1, 1, 1]} : vector<9x1x256xf32> to vector<1x1x256xf32>
    %40 = vector.shape_cast %39 : vector<1x1x256xf32> to vector<1x256xf32>
    %41 = vector.broadcast %40 : vector<1x256xf32> to vector<32x256xf32>
    %42 = arith.mulf %38, %41 : vector<32x256xf32>
    %c64 = arith.constant 64 : index
    %c0_21 = arith.constant 0 : index
    %43 = vector.load %arg10[%c64, %c0_21] : memref<288x256xf32, #tpu.memory_space<vmem>>, vector<32x256xf32>
    tpu.vector_store %arg10[%c64, %c0_21], %42 {strides = array<i32>} : memref<288x256xf32, #tpu.memory_space<vmem>>, vector<32x256xf32>,
    %44 = vector.extract_strided_slice %25 {offsets = [0, 127], sizes = [32, 256], strides = [1, 1]} : vector<32x512xf32> to vector<32x256xf32>
    %45 = vector.extract_strided_slice %14 {offsets = [3, 0, 0], sizes = [1, 1, 256], strides = [1, 1, 1]} : vector<9x1x256xf32> to vector<1x1x256xf32>
    %46 = vector.shape_cast %45 : vector<1x1x256xf32> to vector<1x256xf32>
    %47 = vector.broadcast %46 : vector<1x256xf32> to vector<32x256xf32>
    %48 = arith.mulf %44, %47 : vector<32x256xf32>
    %c96 = arith.constant 96 : index
    %c0_22 = arith.constant 0 : index
    %49 = vector.load %arg10[%c96, %c0_22] : memref<288x256xf32, #tpu.memory_space<vmem>>, vector<32x256xf32>
    tpu.vector_store %arg10[%c96, %c0_22], %48 {strides = array<i32>} : memref<288x256xf32, #tpu.memory_space<vmem>>, vector<32x256xf32>,
    %50 = vector.extract_strided_slice %25 {offsets = [0, 128], sizes = [32, 256], strides = [1, 1]} : vector<32x512xf32> to vector<32x256xf32>
    %c128_23 = arith.constant 128 : index
    %c0_24 = arith.constant 0 : index
    %51 = vector.load %arg10[%c128_23, %c0_24] : memref<288x256xf32, #tpu.memory_space<vmem>>, vector<32x256xf32>
    tpu.vector_store %arg10[%c128_23, %c0_24], %50 {strides = array<i32>} : memref<288x256xf32, #tpu.memory_space<vmem>>, vector<32x256xf32>,
    %52 = vector.extract_strided_slice %25 {offsets = [0, 129], sizes = [32, 256], strides = [1, 1]} : vector<32x512xf32> to vector<32x256xf32>
    %53 = vector.extract_strided_slice %14 {offsets = [5, 0, 0], sizes = [1, 1, 256], strides = [1, 1, 1]} : vector<9x1x256xf32> to vector<1x1x256xf32>
    %54 = vector.shape_cast %53 : vector<1x1x256xf32> to vector<1x256xf32>
    %55 = vector.broadcast %54 : vector<1x256xf32> to vector<32x256xf32>
    %56 = arith.mulf %52, %55 : vector<32x256xf32>
    %c160 = arith.constant 160 : index
    %c0_25 = arith.constant 0 : index
    %57 = vector.load %arg10[%c160, %c0_25] : memref<288x256xf32, #tpu.memory_space<vmem>>, vector<32x256xf32>
    tpu.vector_store %arg10[%c160, %c0_25], %56 {strides = array<i32>} : memref<288x256xf32, #tpu.memory_space<vmem>>, vector<32x256xf32>,
    %58 = vector.extract_strided_slice %25 {offsets = [0, 143], sizes = [32, 256], strides = [1, 1]} : vector<32x512xf32> to vector<32x256xf32>
    %59 = vector.extract_strided_slice %14 {offsets = [6, 0, 0], sizes = [1, 1, 256], strides = [1, 1, 1]} : vector<9x1x256xf32> to vector<1x1x256xf32>
    %60 = vector.shape_cast %59 : vector<1x1x256xf32> to vector<1x256xf32>
    %61 = vector.broadcast %60 : vector<1x256xf32> to vector<32x256xf32>
    %62 = arith.mulf %58, %61 : vector<32x256xf32>
    %c192 = arith.constant 192 : index
    %c0_26 = arith.constant 0 : index
    %63 = vector.load %arg10[%c192, %c0_26] : memref<288x256xf32, #tpu.memory_space<vmem>>, vector<32x256xf32>
    tpu.vector_store %arg10[%c192, %c0_26], %62 {strides = array<i32>} : memref<288x256xf32, #tpu.memory_space<vmem>>, vector<32x256xf32>,
    %64 = vector.extract_strided_slice %25 {offsets = [0, 144], sizes = [32, 256], strides = [1, 1]} : vector<32x512xf32> to vector<32x256xf32>
    %65 = vector.extract_strided_slice %14 {offsets = [7, 0, 0], sizes = [1, 1, 256], strides = [1, 1, 1]} : vector<9x1x256xf32> to vector<1x1x256xf32>
    %66 = vector.shape_cast %65 : vector<1x1x256xf32> to vector<1x256xf32>
    %67 = vector.broadcast %66 : vector<1x256xf32> to vector<32x256xf32>
    %68 = arith.mulf %64, %67 : vector<32x256xf32>
    %c224 = arith.constant 224 : index
    %c0_27 = arith.constant 0 : index
    %69 = vector.load %arg10[%c224, %c0_27] : memref<288x256xf32, #tpu.memory_space<vmem>>, vector<32x256xf32>
    tpu.vector_store %arg10[%c224, %c0_27], %68 {strides = array<i32>} : memref<288x256xf32, #tpu.memory_space<vmem>>, vector<32x256xf32>,
    %70 = vector.extract_strided_slice %25 {offsets = [0, 145], sizes = [32, 256], strides = [1, 1]} : vector<32x512xf32> to vector<32x256xf32>
    %71 = vector.extract_strided_slice %14 {offsets = [8, 0, 0], sizes = [1, 1, 256], strides = [1, 1, 1]} : vector<9x1x256xf32> to vector<1x1x256xf32>
    %72 = vector.shape_cast %71 : vector<1x1x256xf32> to vector<1x256xf32>
    %73 = vector.broadcast %72 : vector<1x256xf32> to vector<32x256xf32>
    %74 = arith.mulf %70, %73 : vector<32x256xf32>
    %c256 = arith.constant 256 : index
    %c0_28 = arith.constant 0 : index
    %75 = vector.load %arg10[%c256, %c0_28] : memref<288x256xf32, #tpu.memory_space<vmem>>, vector<32x256xf32>
    tpu.vector_store %arg10[%c256, %c0_28], %74 {strides = array<i32>} : memref<288x256xf32, #tpu.memory_space<vmem>>, vector<32x256xf32>,
    %c0_29 = arith.constant 0 : index
    %c0_30 = arith.constant 0 : index
    %76 = vector.load %arg10[%c0_29, %c0_30] : memref<288x256xf32, #tpu.memory_space<vmem>>, vector<288x256xf32>
    %cst_31 = arith.constant dense<0.000000e+00> : vector<32x256xf32>
    %77 = tpu.matmul %13, %76, %cst_31 {dimension_numbers = #tpu.dot_dimension_numbers<[1], [0], [0], [1], [0, 0, 1, 1], [], []>} : vector<32x288xf32>, vector<288x256xf32>, vector<32x256xf32> -> vector<32x256xf32>
    %78 = vector.broadcast %6 : vector<32x1xf32> to vector<32x256xf32>
    %79 = arith.mulf %77, %78 : vector<32x256xf32>
    %80 = vector.broadcast %7 : vector<32x1xf32> to vector<32x256xf32>
    %81 = arith.addf %79, %80 : vector<32x256xf32>
    %c0_32 = arith.constant 0 : index
    %c0_33 = arith.constant 0 : index
    %c0_34 = arith.constant 0 : index
    %82 = vector.load %arg2[%c0_32, %c0_33, %c0_34] : memref<2x32x256xf32, #tpu.memory_space<vmem>>, vector<1x32x256xf32>
    %83 = vector.shape_cast %82 : vector<1x32x256xf32> to vector<32x256xf32>
    %84 = arith.addf %81, %83 : vector<32x256xf32>
    %cst_35 = arith.constant 0.000000e+00 : f32
    %85 = vector.broadcast %cst_35 : f32 to vector<32x256xf32>
    %86 = arith.maximumf %84, %85 : vector<32x256xf32>
    %cst_36 = arith.constant dense<0.000000e+00> : vector<32xf32>
    %87 = vector.multi_reduction <add>, %86, %cst_36 [1] : vector<32x256xf32> to vector<32xf32>
    %88 = vector.shape_cast %87 : vector<32xf32> to vector<32x1xf32>
    %cst_37 = arith.constant 3.906250e-03 : f32
    %89 = vector.broadcast %cst_37 : f32 to vector<32x1xf32>
    %90 = arith.mulf %88, %89 : vector<32x1xf32>
    %91 = vector.broadcast %90 : vector<32x1xf32> to vector<32x2xf32>
    %92 = arith.mulf %9, %91 : vector<32x2xf32>
    %cst_38 = arith.constant dense<0.000000e+00> : vector<2xf32>
    %93 = vector.multi_reduction <add>, %92, %cst_38 [0] : vector<32x2xf32> to vector<2xf32>
    %94 = vector.shape_cast %93 : vector<2xf32> to vector<1x2xf32>
    %95 = arith.addf %94, %11 : vector<1x2xf32>
    %cst_39 = arith.constant 0.000000e+00 : f32
    %96 = vector.broadcast %cst_39 : f32 to vector<1x2xf32>
    %97 = arith.maximumf %95, %96 : vector<1x2xf32>
    %98 = vector.broadcast %97 : vector<1x2xf32> to vector<32x2xf32>
    %99 = arith.mulf %10, %98 : vector<32x2xf32>
    %cst_40 = arith.constant dense<0.000000e+00> : vector<32xf32>
    %100 = vector.multi_reduction <add>, %99, %cst_40 [1] : vector<32x2xf32> to vector<32xf32>
    %101 = vector.shape_cast %100 : vector<32xf32> to vector<32x1xf32>
    %102 = arith.addf %101, %8 : vector<32x1xf32>
    %cst_41 = arith.constant 0.000000e+00 : f32
    %103 = vector.broadcast %cst_41 : f32 to vector<32x1xf32>
    %104 = arith.subf %103, %102 : vector<32x1xf32>
    %105 = math.exp %104 : vector<32x1xf32>
    %cst_42 = arith.constant 1.000000e+00 : f32
    %106 = vector.broadcast %cst_42 : f32 to vector<32x1xf32>
    %107 = arith.addf %106, %105 : vector<32x1xf32>
    %cst_43 = arith.constant 1.000000e+00 : f32
    %108 = vector.broadcast %cst_43 : f32 to vector<32x1xf32>
    %109 = arith.divf %108, %107 : vector<32x1xf32>
    %110 = vector.broadcast %109 : vector<32x1xf32> to vector<32x256xf32>
    %111 = arith.mulf %86, %110 : vector<32x256xf32>
    %c0_44 = arith.constant 0 : index
    %c0_45 = arith.constant 0 : index
    %c0_46 = arith.constant 0 : index
    %112 = vector.load %arg8[%c0_44, %c0_45, %c0_46] : memref<2x32x256xf32, #tpu.memory_space<vmem>>, vector<1x32x256xf32>
    %113 = vector.shape_cast %112 : vector<1x32x256xf32> to vector<32x256xf32>
    %114 = vector.shape_cast %111 : vector<32x256xf32> to vector<1x32x256xf32>
    tpu.vector_store %arg8[%c0_44, %c0_45, %c0_46], %114 {strides = array<i32>} : memref<2x32x256xf32, #tpu.memory_space<vmem>>, vector<1x32x256xf32>,
    %c1 = arith.constant 1 : index
    %c0_47 = arith.constant 0 : index
    %c0_48 = arith.constant 0 : index
    %115 = vector.load %arg1[%c1, %c0_47, %c0_48] : memref<2x288x256xbf16, #tpu.memory_space<vmem>>, vector<1x288x256xbf16>
    %116 = vector.shape_cast %115 : vector<1x288x256xbf16> to vector<288x256xbf16>
    %cst_49 = arith.constant dense<0.000000e+00> : vector<32x256xf32>
    %117 = tpu.matmul %12, %116, %cst_49 {dimension_numbers = #tpu.dot_dimension_numbers<[1], [0], [0], [1], [0, 0, 1, 1], [], []>} : vector<32x288xbf16>, vector<288x256xbf16>, vector<32x256xf32> -> vector<32x256xf32>
    %118 = vector.broadcast %4 : vector<32x1xf32> to vector<32x256xf32>
    %119 = arith.mulf %117, %118 : vector<32x256xf32>
    %120 = vector.broadcast %5 : vector<32x1xf32> to vector<32x256xf32>
    %121 = arith.addf %119, %120 : vector<32x256xf32>
    %cst_50 = arith.constant 0.000000e+00 : f32
    %122 = vector.broadcast %cst_50 : f32 to vector<32x256xf32>
    %123 = arith.maximumf %121, %122 : vector<32x256xf32>
    %c0_51 = arith.constant 0 : index
    %c128_52 = arith.constant 128 : index
    %124 = vector.load %arg9[%c0_51, %c128_52] : memref<32x512xf32, #tpu.memory_space<vmem>>, vector<32x256xf32>
    tpu.vector_store %arg9[%c0_51, %c128_52], %123 {strides = array<i32>} : memref<32x512xf32, #tpu.memory_space<vmem>>, vector<32x256xf32>,
    %c0_53 = arith.constant 0 : index
    %c0_54 = arith.constant 0 : index
    %125 = vector.load %arg9[%c0_53, %c0_54] : memref<32x512xf32, #tpu.memory_space<vmem>>, vector<32x512xf32>
    %126 = vector.extract_strided_slice %125 {offsets = [0, 111], sizes = [32, 256], strides = [1, 1]} : vector<32x512xf32> to vector<32x256xf32>
    %127 = vector.extract_strided_slice %14 {offsets = [0, 0, 0], sizes = [1, 1, 256], strides = [1, 1, 1]} : vector<9x1x256xf32> to vector<1x1x256xf32>
    %128 = vector.shape_cast %127 : vector<1x1x256xf32> to vector<1x256xf32>
    %129 = vector.broadcast %128 : vector<1x256xf32> to vector<32x256xf32>
    %130 = arith.mulf %126, %129 : vector<32x256xf32>
    %c0_55 = arith.constant 0 : index
    %c0_56 = arith.constant 0 : index
    %131 = vector.load %arg10[%c0_55, %c0_56] : memref<288x256xf32, #tpu.memory_space<vmem>>, vector<32x256xf32>
    tpu.vector_store %arg10[%c0_55, %c0_56], %130 {strides = array<i32>} : memref<288x256xf32, #tpu.memory_space<vmem>>, vector<32x256xf32>,
    %132 = vector.extract_strided_slice %125 {offsets = [0, 112], sizes = [32, 256], strides = [1, 1]} : vector<32x512xf32> to vector<32x256xf32>
    %133 = vector.extract_strided_slice %14 {offsets = [1, 0, 0], sizes = [1, 1, 256], strides = [1, 1, 1]} : vector<9x1x256xf32> to vector<1x1x256xf32>
    %134 = vector.shape_cast %133 : vector<1x1x256xf32> to vector<1x256xf32>
    %135 = vector.broadcast %134 : vector<1x256xf32> to vector<32x256xf32>
    %136 = arith.mulf %132, %135 : vector<32x256xf32>
    %c32_57 = arith.constant 32 : index
    %c0_58 = arith.constant 0 : index
    %137 = vector.load %arg10[%c32_57, %c0_58] : memref<288x256xf32, #tpu.memory_space<vmem>>, vector<32x256xf32>
    tpu.vector_store %arg10[%c32_57, %c0_58], %136 {strides = array<i32>} : memref<288x256xf32, #tpu.memory_space<vmem>>, vector<32x256xf32>,
    %138 = vector.extract_strided_slice %125 {offsets = [0, 113], sizes = [32, 256], strides = [1, 1]} : vector<32x512xf32> to vector<32x256xf32>
    %139 = vector.extract_strided_slice %14 {offsets = [2, 0, 0], sizes = [1, 1, 256], strides = [1, 1, 1]} : vector<9x1x256xf32> to vector<1x1x256xf32>
    %140 = vector.shape_cast %139 : vector<1x1x256xf32> to vector<1x256xf32>
    %141 = vector.broadcast %140 : vector<1x256xf32> to vector<32x256xf32>
    %142 = arith.mulf %138, %141 : vector<32x256xf32>
    %c64_59 = arith.constant 64 : index
    %c0_60 = arith.constant 0 : index
    %143 = vector.load %arg10[%c64_59, %c0_60] : memref<288x256xf32, #tpu.memory_space<vmem>>, vector<32x256xf32>
    tpu.vector_store %arg10[%c64_59, %c0_60], %142 {strides = array<i32>} : memref<288x256xf32, #tpu.memory_space<vmem>>, vector<32x256xf32>,
    %144 = vector.extract_strided_slice %125 {offsets = [0, 127], sizes = [32, 256], strides = [1, 1]} : vector<32x512xf32> to vector<32x256xf32>
    %145 = vector.extract_strided_slice %14 {offsets = [3, 0, 0], sizes = [1, 1, 256], strides = [1, 1, 1]} : vector<9x1x256xf32> to vector<1x1x256xf32>
    %146 = vector.shape_cast %145 : vector<1x1x256xf32> to vector<1x256xf32>
    %147 = vector.broadcast %146 : vector<1x256xf32> to vector<32x256xf32>
    %148 = arith.mulf %144, %147 : vector<32x256xf32>
    %c96_61 = arith.constant 96 : index
    %c0_62 = arith.constant 0 : index
    %149 = vector.load %arg10[%c96_61, %c0_62] : memref<288x256xf32, #tpu.memory_space<vmem>>, vector<32x256xf32>
    tpu.vector_store %arg10[%c96_61, %c0_62], %148 {strides = array<i32>} : memref<288x256xf32, #tpu.memory_space<vmem>>, vector<32x256xf32>,
    %150 = vector.extract_strided_slice %125 {offsets = [0, 128], sizes = [32, 256], strides = [1, 1]} : vector<32x512xf32> to vector<32x256xf32>
    %c128_63 = arith.constant 128 : index
    %c0_64 = arith.constant 0 : index
    %151 = vector.load %arg10[%c128_63, %c0_64] : memref<288x256xf32, #tpu.memory_space<vmem>>, vector<32x256xf32>
    tpu.vector_store %arg10[%c128_63, %c0_64], %150 {strides = array<i32>} : memref<288x256xf32, #tpu.memory_space<vmem>>, vector<32x256xf32>,
    %152 = vector.extract_strided_slice %125 {offsets = [0, 129], sizes = [32, 256], strides = [1, 1]} : vector<32x512xf32> to vector<32x256xf32>
    %153 = vector.extract_strided_slice %14 {offsets = [5, 0, 0], sizes = [1, 1, 256], strides = [1, 1, 1]} : vector<9x1x256xf32> to vector<1x1x256xf32>
    %154 = vector.shape_cast %153 : vector<1x1x256xf32> to vector<1x256xf32>
    %155 = vector.broadcast %154 : vector<1x256xf32> to vector<32x256xf32>
    %156 = arith.mulf %152, %155 : vector<32x256xf32>
    %c160_65 = arith.constant 160 : index
    %c0_66 = arith.constant 0 : index
    %157 = vector.load %arg10[%c160_65, %c0_66] : memref<288x256xf32, #tpu.memory_space<vmem>>, vector<32x256xf32>
    tpu.vector_store %arg10[%c160_65, %c0_66], %156 {strides = array<i32>} : memref<288x256xf32, #tpu.memory_space<vmem>>, vector<32x256xf32>,
    %158 = vector.extract_strided_slice %125 {offsets = [0, 143], sizes = [32, 256], strides = [1, 1]} : vector<32x512xf32> to vector<32x256xf32>
    %159 = vector.extract_strided_slice %14 {offsets = [6, 0, 0], sizes = [1, 1, 256], strides = [1, 1, 1]} : vector<9x1x256xf32> to vector<1x1x256xf32>
    %160 = vector.shape_cast %159 : vector<1x1x256xf32> to vector<1x256xf32>
    %161 = vector.broadcast %160 : vector<1x256xf32> to vector<32x256xf32>
    %162 = arith.mulf %158, %161 : vector<32x256xf32>
    %c192_67 = arith.constant 192 : index
    %c0_68 = arith.constant 0 : index
    %163 = vector.load %arg10[%c192_67, %c0_68] : memref<288x256xf32, #tpu.memory_space<vmem>>, vector<32x256xf32>
    tpu.vector_store %arg10[%c192_67, %c0_68], %162 {strides = array<i32>} : memref<288x256xf32, #tpu.memory_space<vmem>>, vector<32x256xf32>,
    %164 = vector.extract_strided_slice %125 {offsets = [0, 144], sizes = [32, 256], strides = [1, 1]} : vector<32x512xf32> to vector<32x256xf32>
    %165 = vector.extract_strided_slice %14 {offsets = [7, 0, 0], sizes = [1, 1, 256], strides = [1, 1, 1]} : vector<9x1x256xf32> to vector<1x1x256xf32>
    %166 = vector.shape_cast %165 : vector<1x1x256xf32> to vector<1x256xf32>
    %167 = vector.broadcast %166 : vector<1x256xf32> to vector<32x256xf32>
    %168 = arith.mulf %164, %167 : vector<32x256xf32>
    %c224_69 = arith.constant 224 : index
    %c0_70 = arith.constant 0 : index
    %169 = vector.load %arg10[%c224_69, %c0_70] : memref<288x256xf32, #tpu.memory_space<vmem>>, vector<32x256xf32>
    tpu.vector_store %arg10[%c224_69, %c0_70], %168 {strides = array<i32>} : memref<288x256xf32, #tpu.memory_space<vmem>>, vector<32x256xf32>,
    %170 = vector.extract_strided_slice %125 {offsets = [0, 145], sizes = [32, 256], strides = [1, 1]} : vector<32x512xf32> to vector<32x256xf32>
    %171 = vector.extract_strided_slice %14 {offsets = [8, 0, 0], sizes = [1, 1, 256], strides = [1, 1, 1]} : vector<9x1x256xf32> to vector<1x1x256xf32>
    %172 = vector.shape_cast %171 : vector<1x1x256xf32> to vector<1x256xf32>
    %173 = vector.broadcast %172 : vector<1x256xf32> to vector<32x256xf32>
    %174 = arith.mulf %170, %173 : vector<32x256xf32>
    %c256_71 = arith.constant 256 : index
    %c0_72 = arith.constant 0 : index
    %175 = vector.load %arg10[%c256_71, %c0_72] : memref<288x256xf32, #tpu.memory_space<vmem>>, vector<32x256xf32>
    tpu.vector_store %arg10[%c256_71, %c0_72], %174 {strides = array<i32>} : memref<288x256xf32, #tpu.memory_space<vmem>>, vector<32x256xf32>,
    %c0_73 = arith.constant 0 : index
    %c0_74 = arith.constant 0 : index
    %176 = vector.load %arg10[%c0_73, %c0_74] : memref<288x256xf32, #tpu.memory_space<vmem>>, vector<288x256xf32>
    %cst_75 = arith.constant dense<0.000000e+00> : vector<32x256xf32>
    %177 = tpu.matmul %13, %176, %cst_75 {dimension_numbers = #tpu.dot_dimension_numbers<[1], [0], [0], [1], [0, 0, 1, 1], [], []>} : vector<32x288xf32>, vector<288x256xf32>, vector<32x256xf32> -> vector<32x256xf32>
    %178 = vector.broadcast %6 : vector<32x1xf32> to vector<32x256xf32>
    %179 = arith.mulf %177, %178 : vector<32x256xf32>
    %180 = vector.broadcast %7 : vector<32x1xf32> to vector<32x256xf32>
    %181 = arith.addf %179, %180 : vector<32x256xf32>
    %c1_76 = arith.constant 1 : index
    %c0_77 = arith.constant 0 : index
    %c0_78 = arith.constant 0 : index
    %182 = vector.load %arg2[%c1_76, %c0_77, %c0_78] : memref<2x32x256xf32, #tpu.memory_space<vmem>>, vector<1x32x256xf32>
    %183 = vector.shape_cast %182 : vector<1x32x256xf32> to vector<32x256xf32>
    %184 = arith.addf %181, %183 : vector<32x256xf32>
    %cst_79 = arith.constant 0.000000e+00 : f32
    %185 = vector.broadcast %cst_79 : f32 to vector<32x256xf32>
    %186 = arith.maximumf %184, %185 : vector<32x256xf32>
    %cst_80 = arith.constant dense<0.000000e+00> : vector<32xf32>
    %187 = vector.multi_reduction <add>, %186, %cst_80 [1] : vector<32x256xf32> to vector<32xf32>
    %188 = vector.shape_cast %187 : vector<32xf32> to vector<32x1xf32>
    %cst_81 = arith.constant 3.906250e-03 : f32
    %189 = vector.broadcast %cst_81 : f32 to vector<32x1xf32>
    %190 = arith.mulf %188, %189 : vector<32x1xf32>
    %191 = vector.broadcast %190 : vector<32x1xf32> to vector<32x2xf32>
    %192 = arith.mulf %9, %191 : vector<32x2xf32>
    %cst_82 = arith.constant dense<0.000000e+00> : vector<2xf32>
    %193 = vector.multi_reduction <add>, %192, %cst_82 [0] : vector<32x2xf32> to vector<2xf32>
    %194 = vector.shape_cast %193 : vector<2xf32> to vector<1x2xf32>
    %195 = arith.addf %194, %11 : vector<1x2xf32>
    %cst_83 = arith.constant 0.000000e+00 : f32
    %196 = vector.broadcast %cst_83 : f32 to vector<1x2xf32>
    %197 = arith.maximumf %195, %196 : vector<1x2xf32>
    %198 = vector.broadcast %197 : vector<1x2xf32> to vector<32x2xf32>
    %199 = arith.mulf %10, %198 : vector<32x2xf32>
    %cst_84 = arith.constant dense<0.000000e+00> : vector<32xf32>
    %200 = vector.multi_reduction <add>, %199, %cst_84 [1] : vector<32x2xf32> to vector<32xf32>
    %201 = vector.shape_cast %200 : vector<32xf32> to vector<32x1xf32>
    %202 = arith.addf %201, %8 : vector<32x1xf32>
    %cst_85 = arith.constant 0.000000e+00 : f32
    %203 = vector.broadcast %cst_85 : f32 to vector<32x1xf32>
    %204 = arith.subf %203, %202 : vector<32x1xf32>
    %205 = math.exp %204 : vector<32x1xf32>
    %cst_86 = arith.constant 1.000000e+00 : f32
    %206 = vector.broadcast %cst_86 : f32 to vector<32x1xf32>
    %207 = arith.addf %206, %205 : vector<32x1xf32>
    %cst_87 = arith.constant 1.000000e+00 : f32
    %208 = vector.broadcast %cst_87 : f32 to vector<32x1xf32>
    %209 = arith.divf %208, %207 : vector<32x1xf32>
    %210 = vector.broadcast %209 : vector<32x1xf32> to vector<32x256xf32>
    %211 = arith.mulf %186, %210 : vector<32x256xf32>
    %c1_88 = arith.constant 1 : index
    %c0_89 = arith.constant 0 : index
    %c0_90 = arith.constant 0 : index
    %212 = vector.load %arg8[%c1_88, %c0_89, %c0_90] : memref<2x32x256xf32, #tpu.memory_space<vmem>>, vector<1x32x256xf32>
    %213 = vector.shape_cast %212 : vector<1x32x256xf32> to vector<32x256xf32>
    %214 = vector.shape_cast %211 : vector<32x256xf32> to vector<1x32x256xf32>
    tpu.vector_store %arg8[%c1_88, %c0_89, %c0_90], %214 {strides = array<i32>} : memref<2x32x256xf32, #tpu.memory_space<vmem>>, vector<1x32x256xf32>,
    return
  }
  func.func @transform_0(%arg0: i32) -> (i32, i32, i32) {
    %c0_i32 = arith.constant 0 : i32
    %c0_i32_0 = arith.constant 0 : i32
    %c0_i32_1 = arith.constant 0 : i32
    return %arg0, %c0_i32, %c0_i32_0 : i32, i32, i32
  }
  func.func @transform_1(%arg0: i32) -> (i32, i32, i32) {
    %c0_i32 = arith.constant 0 : i32
    %c0_i32_0 = arith.constant 0 : i32
    %c0_i32_1 = arith.constant 0 : i32
    return %arg0, %c0_i32, %c0_i32_0 : i32, i32, i32
  }
  func.func @transform_2(%arg0: i32) -> (i32, i32) {
    %c0_i32 = arith.constant 0 : i32
    %c0_i32_0 = arith.constant 0 : i32
    %c0_i32_1 = arith.constant 0 : i32
    return %c0_i32, %c0_i32_0 : i32, i32
  }
  func.func @transform_3(%arg0: i32) -> (i32, i32) {
    %c0_i32 = arith.constant 0 : i32
    %c0_i32_0 = arith.constant 0 : i32
    %c0_i32_1 = arith.constant 0 : i32
    return %c0_i32, %c0_i32_0 : i32, i32
  }
  func.func @transform_4(%arg0: i32) -> (i32, i32) {
    %c0_i32 = arith.constant 0 : i32
    %c0_i32_0 = arith.constant 0 : i32
    %c0_i32_1 = arith.constant 0 : i32
    return %c0_i32, %c0_i32_0 : i32, i32
  }
  func.func @transform_5(%arg0: i32) -> (i32, i32) {
    %c0_i32 = arith.constant 0 : i32
    %c0_i32_0 = arith.constant 0 : i32
    %c0_i32_1 = arith.constant 0 : i32
    return %c0_i32, %c0_i32_0 : i32, i32
  }
  func.func @transform_6(%arg0: i32) -> (i32, i32, i32) {
    %c0_i32 = arith.constant 0 : i32
    %c0_i32_0 = arith.constant 0 : i32
    %c0_i32_1 = arith.constant 0 : i32
    %c0_i32_2 = arith.constant 0 : i32
    return %c0_i32, %c0_i32_0, %c0_i32_1 : i32, i32, i32
  }
  func.func @transform_7(%arg0: i32) -> (i32, i32, i32) {
    %c0_i32 = arith.constant 0 : i32
    %c0_i32_0 = arith.constant 0 : i32
    %c0_i32_1 = arith.constant 0 : i32
    return %arg0, %c0_i32, %c0_i32_0 : i32, i32, i32
  }
}

</mosaic_0001>

<llo_original>
// kernel: tpu_custom_call.1
$region0: #{tpu_custom_call.1}
  #allocation0 [shape = 'u32[]', space=smem, size = 0x4, offset = 0x4, fixed_abs, tag = 'smem constant byte address 0x4 - core index']
  #allocation1 [shape = 'u32[72,128]{1,0:T(1,128)}', space=vmem, size = 0x9000, scoped, tag = 'internal scratch']
  #allocation2 [shape = 'f32[32,512]{1,0:T(8,128)}', space=vmem, size = 0x10000, scoped, tag = 'scratch operand']
  #allocation3 [shape = 'f32[288,256]{1,0:T(8,128)}', space=vmem, size = 0x48000, scoped, tag = 'scratch operand']
  %s0 = inlined_call_operand.hbm [shape: bf16[2,288,256], index: 0, kind: input, shape index: {}]
  %s1 = inlined_call_operand.hbm [shape: f32[2,32,256], index: 1, kind: input, shape index: {}]
  %s2 = inlined_call_operand.vmem [shape: bf16[32,288], index: 2, kind: input, shape index: {}]
  %s3 = inlined_call_operand.hbm [shape: f32[32,288], index: 3, kind: input, shape index: {}]
  %s4 = inlined_call_operand.vmem [shape: f32[32,9], index: 4, kind: input, shape index: {}]
  %s5 = inlined_call_operand.vmem [shape: f32[1,2], index: 5, kind: input, shape index: {}]
  %s6 = inlined_call_operand.hbm [shape: f32[9,1,256], index: 6, kind: input, shape index: {}]
  %s7 = inlined_call_operand.hbm [shape: f32[2,32,256], index: 7, kind: output, shape index: {}]
  %s8 = sld [smem:[#allocation0]]
  $region58: #{tpu_custom_call.1} parent=0
    _
  %s10 = ssub.s32 1, %s8
  %s11 = scalar_select 0, %s10, %s8
  $region1: #{tpu_custom_call.1} parent=0
    #allocation4 [shape = 'u8[294912]{0}', space=vmem, size = 0x48000, scoped, tag = 'input window, operand 0, single buffered']
    #allocation5 [shape = 's32[1]{0}', space=sflag, size = 0x4, scoped, tag = 'scoped memory for tpu_custom_call.1']
    #allocation6 [shape = 's32[1]{0}', space=sflag, size = 0x4, scoped, tag = 'scoped memory for tpu_custom_call.1']
    #allocation7 [shape = 'u8[65536]{0}', space=vmem, size = 0x10000, scoped, tag = 'input window, operand 1, single buffered']
    #allocation8 [shape = 's32[1]{0}', space=sflag, size = 0x4, scoped, tag = 'scoped memory for tpu_custom_call.1']
    #allocation9 [shape = 'u8[49152]{0}', space=vmem, size = 0xc000, scoped, tag = 'input window, operand 3, single buffered']
    #allocation10 [shape = 'u8[9216]{0}', space=vmem, size = 0x2400, scoped, tag = 'input window, operand 6, single buffered']
    #allocation11 [shape = 's32[1]{0}', space=sflag, size = 0x4, scoped, tag = 'scoped memory for tpu_custom_call.1']
    #allocation12 [shape = 'u8[65536]{0}', space=vmem, size = 0x10000, scoped, tag = 'output window, operand 0, single buffered']
    %12 = vsyncpa [#allocation5], 0
    %13 = vsyncpa [#allocation8], 0
    %14 = vsyncpa [#allocation11], 0
    %15 = vsyncpa [#allocation6], 0
    // Predicated region
    $region2: #{tpu_custom_call.1} parent=1 // pred_check
      _
    $region3: #{tpu_custom_call.1} parent=1 // pred_check_branch
      %17 = sbr.rel (0) target = $region5
    $region4: #{tpu_custom_call.1} parent=1 // pred_region
      %19 = vsyncadd [#allocation5], 0
      %s20 = sshll.u32 %s0, 4
      %s21 = int_to_ptr.hbm [resolvable:$true] %s20
      %s22 = sshll.u32 [#allocation4], 4
      %s23 = int_to_ptr.vmem [resolvable:$true] %s22
      %28 = dma.hbm_to_vmem [thread:$0]  %s21, 9216, %s23, [#allocation5], 128, 128, 8
    $region5: #{tpu_custom_call.1} parent=1 // pred_fallthru
      _
    // Predicated region
    $region6: #{tpu_custom_call.1} parent=1 // pred_check
      _
    $region7: #{tpu_custom_call.1} parent=1 // pred_check_branch
      %30 = sbr.rel (0) target = $region9
    $region8: #{tpu_custom_call.1} parent=1 // pred_region
      %32 = vsyncadd [#allocation8], 0
      %s33 = sshll.u32 %s1, 4
      %s34 = int_to_ptr.hbm [resolvable:$true] %s33
      %s35 = sshll.u32 [#allocation7], 4
      %s36 = int_to_ptr.vmem [resolvable:$true] %s35
      %41 = dma.hbm_to_vmem [thread:$0]  %s34, 2048, %s36, [#allocation8], 256, 256, 16
    $region9: #{tpu_custom_call.1} parent=1 // pred_fallthru
      _
    // Predicated region
    $region10: #{tpu_custom_call.1} parent=1 // pred_check
      _
    $region11: #{tpu_custom_call.1} parent=1 // pred_check_branch
      %43 = sbr.rel (0) target = $region13
    $region12: #{tpu_custom_call.1} parent=1 // pred_region
      _
    $region13: #{tpu_custom_call.1} parent=1 // pred_fallthru
      _
    // Predicated region
    $region14: #{tpu_custom_call.1} parent=1 // pred_check
      _
    $region15: #{tpu_custom_call.1} parent=1 // pred_check_branch
      %45 = sbr.rel (0) target = $region17
    $region16: #{tpu_custom_call.1} parent=1 // pred_region
      %47 = vsyncadd [#allocation8], 0
      %s48 = sshll.u32 %s3, 4
      %s49 = int_to_ptr.hbm [resolvable:$true] %s48
      %s50 = sshll.u32 [#allocation9], 4
      %s51 = int_to_ptr.vmem [resolvable:$true] %s50
      %56 = dma.hbm_to_vmem [thread:$0]  %s49, 1536, %s51, [#allocation8], 384, 384, 24
    $region17: #{tpu_custom_call.1} parent=1 // pred_fallthru
      _
    // Predicated region
    $region18: #{tpu_custom_call.1} parent=1 // pred_check
      _
    $region19: #{tpu_custom_call.1} parent=1 // pred_check_branch
      %58 = sbr.rel (0) target = $region21
    $region20: #{tpu_custom_call.1} parent=1 // pred_region
      _
    $region21: #{tpu_custom_call.1} parent=1 // pred_fallthru
      _
    // Predicated region
    $region22: #{tpu_custom_call.1} parent=1 // pred_check
      _
    $region23: #{tpu_custom_call.1} parent=1 // pred_check_branch
      %60 = sbr.rel (0) target = $region25
    $region24: #{tpu_custom_call.1} parent=1 // pred_region
      _
    $region25: #{tpu_custom_call.1} parent=1 // pred_fallthru
      _
    // Predicated region
    $region26: #{tpu_custom_call.1} parent=1 // pred_check
      _
    $region27: #{tpu_custom_call.1} parent=1 // pred_check_branch
      %62 = sbr.rel (0) target = $region29
    $region28: #{tpu_custom_call.1} parent=1 // pred_region
      %64 = vsyncadd [#allocation11], 0
      %s65 = sshll.u32 %s6, 4
      %s66 = int_to_ptr.hbm [resolvable:$true] %s65
      %s67 = sshll.u32 [#allocation10], 4
      %s68 = int_to_ptr.vmem [resolvable:$true] %s67
      %73 = dma.hbm_to_vmem [thread:$0]  %s66, 288, %s68, [#allocation11], 32, 32, 2
    $region29: #{tpu_custom_call.1} parent=1 // pred_fallthru
      _
    // Predicated region
    $region30: #{tpu_custom_call.1} parent=1 // pred_check
      _
    $region31: #{tpu_custom_call.1} parent=1 // pred_check_branch
      %75 = sbr.rel (0) target = $region33
    $region32: #{tpu_custom_call.1} parent=1 // pred_region
      %77 = dma.done [#allocation5], 9216
    $region33: #{tpu_custom_call.1} parent=1 // pred_fallthru
      _
    // Predicated region
    $region34: #{tpu_custom_call.1} parent=1 // pred_check
      _
    $region35: #{tpu_custom_call.1} parent=1 // pred_check_branch
      %79 = sbr.rel (0) target = $region37
    $region36: #{tpu_custom_call.1} parent=1 // pred_region
      %81 = dma.done [#allocation8], 2048
    $region37: #{tpu_custom_call.1} parent=1 // pred_fallthru
      _
    // Predicated region
    $region38: #{tpu_custom_call.1} parent=1 // pred_check
      _
    $region39: #{tpu_custom_call.1} parent=1 // pred_check_branch
      %83 = sbr.rel (0) target = $region41
    $region40: #{tpu_custom_call.1} parent=1 // pred_region
      %85 = dma.done [#allocation8], 1536
    $region41: #{tpu_custom_call.1} parent=1 // pred_fallthru
      _
    // Predicated region
    $region42: #{tpu_custom_call.1} parent=1 // pred_check
      _
    $region43: #{tpu_custom_call.1} parent=1 // pred_check_branch
      %87 = sbr.rel (0) target = $region45
    $region44: #{tpu_custom_call.1} parent=1 // pred_region
      %89 = dma.done [#allocation11], 288
    $region45: #{tpu_custom_call.1} parent=1 // pred_fallthru
      _
    %p91 = scmp.eq.s32.totalorder 0, 0
    // Predicated region
    $region46: #{tpu_custom_call.1} parent=1 // pred_check
      %p92 = pneg %p91
    $region47: #{tpu_custom_call.1} parent=1 // pred_check_branch
      %94 = sbr.rel (%p92) target = $region49
    $region48: #{tpu_custom_call.1} parent=1 // pred_region
      %95 = vst [vmem:[#allocation2] sm:$0xff] 0.0
      %96 = vst [vmem:[#allocation2 + $0x8] sm:$0xff] 0.0
      %97 = vst [vmem:[#allocation2 + $0x10] sm:$0xff] 0.0
      %98 = vst [vmem:[#allocation2 + $0x18] sm:$0xff] 0.0
      %99 = vst [vmem:[#allocation2 + $0x20] sm:$0xff] 0.0
      %100 = vst [vmem:[#allocation2 + $0x28] sm:$0xff] 0.0
      %101 = vst [vmem:[#allocation2 + $0x30] sm:$0xff] 0.0
      %102 = vst [vmem:[#allocation2 + $0x38] sm:$0xff] 0.0
      %103 = vst [vmem:[#allocation2 + $0x40] sm:$0xff] 0.0
      %104 = vst [vmem:[#allocation2 + $0x48] sm:$0xff] 0.0
      %105 = vst [vmem:[#allocation2 + $0x50] sm:$0xff] 0.0
      %106 = vst [vmem:[#allocation2 + $0x58] sm:$0xff] 0.0
      %107 = vst [vmem:[#allocation2 + $0x60] sm:$0xff] 0.0
      %108 = vst [vmem:[#allocation2 + $0x68] sm:$0xff] 0.0
      %109 = vst [vmem:[#allocation2 + $0x70] sm:$0xff] 0.0
      %110 = vst [vmem:[#allocation2 + $0x78] sm:$0xff] 0.0
    $region49: #{tpu_custom_call.1} parent=1 // pred_fallthru
      _
    %v111 = vld [vmem:[%s4] sm:$0xff]
    %v112 = vld [vmem:[%s4 + $0x8] sm:$0xff]
    %v113 = vld [vmem:[%s4 + $0x10] sm:$0xff]
    %v114 = vld [vmem:[%s4 + $0x18] sm:$0xff]
    %v115 = vld [vmem:[%s5] sm:$0x1]
    %v116 = vld [vmem:[%s2] sm:$0xff]
    %v117 = vld [vmem:[%s2 + $0x8] sm:$0xf]
    %v118 = vld [vmem:[%s2 + $0xc] sm:$0xff]
    %v119 = vld [vmem:[%s2 + $0x14] sm:$0xf]
    %v120 = vld [vmem:[%s2 + $0x18] sm:$0xff]
    %v121 = vld [vmem:[%s2 + $0x20] sm:$0xf]
    %v122 = vld [vmem:[%s2 + $0x24] sm:$0xff]
    %v123 = vld [vmem:[%s2 + $0x2c] sm:$0xf]
    %v124 = vld [vmem:[#allocation9] sm:$0xff]
    %v125 = vld [vmem:[#allocation9 + $0x8] sm:$0xff]
    %v126 = vld [vmem:[#allocation9 + $0x10] sm:$0xff]
    %v127 = vld [vmem:[#allocation9 + $0x18] sm:$0xff]
    %v128 = vld [vmem:[#allocation9 + $0x20] sm:$0xff]
    %v129 = vld [vmem:[#allocation9 + $0x28] sm:$0xff]
    %v130 = vld [vmem:[#allocation9 + $0x30] sm:$0xff]
    %v131 = vld [vmem:[#allocation9 + $0x38] sm:$0xff]
    %v132 = vld [vmem:[#allocation9 + $0x40] sm:$0xff]
    %v133 = vld [vmem:[#allocation9 + $0x48] sm:$0xff]
    %v134 = vld [vmem:[#allocation9 + $0x50] sm:$0xff]
    %v135 = vld [vmem:[#allocation9 + $0x58] sm:$0xff]
    %v136 = vld [vmem:[#allocation10] sm:$0x3]
    %v137 = vld [vmem:[#allocation10 + $0x2] sm:$0x3]
    %v138 = vld [vmem:[#allocation10 + $0x4] sm:$0x3]
    %v139 = vld [vmem:[#allocation10 + $0x6] sm:$0x3]
    %v140 = vld [vmem:[#allocation10 + $0xa] sm:$0x3]
    %v141 = vld [vmem:[#allocation10 + $0xc] sm:$0x3]
    %v142 = vld [vmem:[#allocation10 + $0xe] sm:$0x3]
    %v143 = vld [vmem:[#allocation10 + $0x10] sm:$0x3]
    %v144 = vld [vmem:[#allocation4] sm:$0xff]
    %v145 = vld [vmem:[#allocation4 + $0x8] sm:$0xff]
    %v146 = vld [vmem:[#allocation4 + $0x10] sm:$0xff]
    %v147 = vld [vmem:[#allocation4 + $0x18] sm:$0xff]
    %v148 = vld [vmem:[#allocation4 + $0x20] sm:$0xff]
    %v149 = vld [vmem:[#allocation4 + $0x28] sm:$0xff]
    %v150 = vld [vmem:[#allocation4 + $0x30] sm:$0xff]
    %v151 = vld [vmem:[#allocation4 + $0x38] sm:$0xff]
    %v152 = vld [vmem:[#allocation4 + $0x40] sm:$0xff]
    %v153 = vld [vmem:[#allocation4 + $0x48] sm:$0xff]
    %v154 = vld [vmem:[#allocation4 + $0x50] sm:$0xff]
    %v155 = vld [vmem:[#allocation4 + $0x58] sm:$0xff]
    %v156 = vld [vmem:[#allocation4 + $0x60] sm:$0xff]
    %v157 = vld [vmem:[#allocation4 + $0x68] sm:$0xff]
    %v158 = vld [vmem:[#allocation4 + $0x70] sm:$0xff]
    %v159 = vld [vmem:[#allocation4 + $0x78] sm:$0xff]
    %v160 = vld [vmem:[#allocation4 + $0x80] sm:$0xff]
    %v161 = vld [vmem:[#allocation4 + $0x88] sm:$0xff]
    %v162 = vld [vmem:[#allocation4 + $0x90] sm:$0xff]
    %v163 = vld [vmem:[#allocation4 + $0x98] sm:$0xff]
    %v164 = vld [vmem:[#allocation4 + $0xa0] sm:$0xff]
    %v165 = vld [vmem:[#allocation4 + $0xa8] sm:$0xff]
    %v166 = vld [vmem:[#allocation4 + $0xb0] sm:$0xff]
    %v167 = vld [vmem:[#allocation4 + $0xb8] sm:$0xff]
    %v168 = vld [vmem:[#allocation4 + $0xc0] sm:$0xff]
    %v169 = vld [vmem:[#allocation4 + $0xc8] sm:$0xff]
    %v170 = vld [vmem:[#allocation4 + $0xd0] sm:$0xff]
    %v171 = vld [vmem:[#allocation4 + $0xd8] sm:$0xff]
    %v172 = vld [vmem:[#allocation4 + $0xe0] sm:$0xff]
    %v173 = vld [vmem:[#allocation4 + $0xe8] sm:$0xff]
    %v174 = vld [vmem:[#allocation4 + $0xf0] sm:$0xff]
    %v175 = vld [vmem:[#allocation4 + $0xf8] sm:$0xff]
    %v176 = vld [vmem:[#allocation4 + $0x100] sm:$0xff]
    %v177 = vld [vmem:[#allocation4 + $0x108] sm:$0xff]
    %v178 = vld [vmem:[#allocation4 + $0x110] sm:$0xff]
    %v179 = vld [vmem:[#allocation4 + $0x118] sm:$0xff]
    %v188 = vunpack.c.l.b16 %v116
    %v189 = vunpack.c.h.b16 %v116
    %v190 = vunpack.c.l.b16 %v117
    %v191 = vunpack.c.l.b16 %v118
    %v192 = vunpack.c.h.b16 %v118
    %v193 = vunpack.c.l.b16 %v119
    %v194 = vunpack.c.l.b16 %v120
    %v195 = vunpack.c.h.b16 %v120
    %v196 = vunpack.c.l.b16 %v121
    %v197 = vunpack.c.l.b16 %v122
    %v198 = vunpack.c.h.b16 %v122
    %v199 = vunpack.c.l.b16 %v123
    %v200 = vpack.c.b16 %v191, %v188
    %v201 = vpack.c.b16 %v192, %v189
    %v202 = vpack.c.b16 %v193, %v190
    %v203 = vpack.c.b16 %v197, %v194
    %v204 = vpack.c.b16 %v198, %v195
    %v205 = vpack.c.b16 %v199, %v196
    %v246 = vunpack.c.l.b16 %v144
    %v247 = vunpack.c.h.b16 %v144
    %v248 = vunpack.c.l.b16 %v145
    %v249 = vunpack.c.h.b16 %v145
    %v250 = vunpack.c.l.b16 %v146
    %v251 = vunpack.c.h.b16 %v146
    %v252 = vunpack.c.l.b16 %v147
    %v253 = vunpack.c.h.b16 %v147
    %v254 = vunpack.c.l.b16 %v148
    %v255 = vunpack.c.h.b16 %v148
    %v256 = vunpack.c.l.b16 %v149
    %v257 = vunpack.c.h.b16 %v149
    %v258 = vunpack.c.l.b16 %v150
    %v259 = vunpack.c.h.b16 %v150
    %v260 = vunpack.c.l.b16 %v151
    %v261 = vunpack.c.h.b16 %v151
    %v262 = vunpack.c.l.b16 %v152
    %v263 = vunpack.c.h.b16 %v152
    %v264 = vunpack.c.l.b16 %v153
    %v265 = vunpack.c.h.b16 %v153
    %v266 = vunpack.c.l.b16 %v154
    %v267 = vunpack.c.h.b16 %v154
    %v268 = vunpack.c.l.b16 %v155
    %v269 = vunpack.c.h.b16 %v155
    %v270 = vunpack.c.l.b16 %v156
    %v271 = vunpack.c.h.b16 %v156
    %v272 = vunpack.c.l.b16 %v157
    %v273 = vunpack.c.h.b16 %v157
    %v274 = vunpack.c.l.b16 %v158
    %v275 = vunpack.c.h.b16 %v158
    %v276 = vunpack.c.l.b16 %v159
    %v277 = vunpack.c.h.b16 %v159
    %v278 = vunpack.c.l.b16 %v160
    %v279 = vunpack.c.h.b16 %v160
    %v280 = vunpack.c.l.b16 %v161
    %v281 = vunpack.c.h.b16 %v161
    %v282 = vunpack.c.l.b16 %v162
    %v283 = vunpack.c.h.b16 %v162
    %v284 = vunpack.c.l.b16 %v163
    %v285 = vunpack.c.h.b16 %v163
    %v286 = vunpack.c.l.b16 %v164
    %v287 = vunpack.c.h.b16 %v164
    %v288 = vunpack.c.l.b16 %v165
    %v289 = vunpack.c.h.b16 %v165
    %v290 = vunpack.c.l.b16 %v166
    %v291 = vunpack.c.h.b16 %v166
    %v292 = vunpack.c.l.b16 %v167
    %v293 = vunpack.c.h.b16 %v167
    %v294 = vunpack.c.l.b16 %v168
    %v295 = vunpack.c.h.b16 %v168
    %v296 = vunpack.c.l.b16 %v169
    %v297 = vunpack.c.h.b16 %v169
    %v298 = vunpack.c.l.b16 %v170
    %v299 = vunpack.c.h.b16 %v170
    %v300 = vunpack.c.l.b16 %v171
    %v301 = vunpack.c.h.b16 %v171
    %v302 = vunpack.c.l.b16 %v172
    %v303 = vunpack.c.h.b16 %v172
    %v304 = vunpack.c.l.b16 %v173
    %v305 = vunpack.c.h.b16 %v173
    %v306 = vunpack.c.l.b16 %v174
    %v307 = vunpack.c.h.b16 %v174
    %v308 = vunpack.c.l.b16 %v175
    %v309 = vunpack.c.h.b16 %v175
    %v310 = vunpack.c.l.b16 %v176
    %v311 = vunpack.c.h.b16 %v176
    %v312 = vunpack.c.l.b16 %v177
    %v313 = vunpack.c.h.b16 %v177
    %v314 = vunpack.c.l.b16 %v178
    %v315 = vunpack.c.h.b16 %v178
    %v316 = vunpack.c.l.b16 %v179
    %v317 = vunpack.c.h.b16 %v179
    %v318 = vpack.c.b16 %v248, %v246
    %v319 = vpack.c.b16 %v249, %v247
    %v320 = vpack.c.b16 %v252, %v250
    %v321 = vpack.c.b16 %v253, %v251
    %v322 = vpack.c.b16 %v256, %v254
    %v323 = vpack.c.b16 %v257, %v255
    %v324 = vpack.c.b16 %v260, %v258
    %v325 = vpack.c.b16 %v261, %v259
    %v326 = vpack.c.b16 %v264, %v262
    %v327 = vpack.c.b16 %v265, %v263
    %v328 = vpack.c.b16 %v268, %v266
    %v329 = vpack.c.b16 %v269, %v267
    %v330 = vpack.c.b16 %v272, %v270
    %v331 = vpack.c.b16 %v273, %v271
    %v332 = vpack.c.b16 %v276, %v274
    %v333 = vpack.c.b16 %v277, %v275
    %v334 = vpack.c.b16 %v280, %v278
    %v335 = vpack.c.b16 %v281, %v279
    %v336 = vpack.c.b16 %v284, %v282
    %v337 = vpack.c.b16 %v285, %v283
    %v338 = vpack.c.b16 %v288, %v286
    %v339 = vpack.c.b16 %v289, %v287
    %v340 = vpack.c.b16 %v292, %v290
    %v341 = vpack.c.b16 %v293, %v291
    %v342 = vpack.c.b16 %v296, %v294
    %v343 = vpack.c.b16 %v297, %v295
    %v344 = vpack.c.b16 %v300, %v298
    %v345 = vpack.c.b16 %v301, %v299
    %v346 = vpack.c.b16 %v304, %v302
    %v347 = vpack.c.b16 %v305, %v303
    %v348 = vpack.c.b16 %v308, %v306
    %v349 = vpack.c.b16 %v309, %v307
    %v350 = vpack.c.b16 %v312, %v310
    %v351 = vpack.c.b16 %v313, %v311
    %v352 = vpack.c.b16 %v316, %v314
    %v353 = vpack.c.b16 %v317, %v315
    %vm390 = vcmask 261120
    %v392 = vsel %vm390, %v202, 0
    %v395 = vsel %vm390, %v205, 0
    %397 = vmatpush.bf16.msra.mxu0 %v332
    %398 = vmatpush.bf16.msra.mxu0 %v330
    %399 = vmatpush.bf16.msra.mxu0 %v328
    %400 = vmatpush.bf16.msra.mxu0 %v326
    %401 = vmatpush.bf16.msra.mxu0 %v324
    %402 = vmatpush.bf16.msra.mxu0 %v322
    %403 = vmatpush.bf16.msra.mxu0 %v320
    %404 = vmatpush.bf16.msra.mxu0 %v318
    %405 = vmatmul.bf16.gmra.mxu0 %v200
    %v406 = vpop.f32.mrf.mxu0
    %v407 = vadd.f32 0.0, %v406
    %v408 = vpop.f32.mrf.mxu0
    %v409 = vadd.f32 0.0, %v408
    %410 = vmatmul.bf16.gmra.mxu0 %v203
    %v411 = vpop.f32.mrf.mxu0
    %v412 = vadd.f32 0.0, %v411
    %v413 = vpop.f32.mrf.mxu0
    %v414 = vadd.f32 0.0, %v413
    %415 = vdwg.mxu0
    %416 = vmatpush.bf16.msra.mxu0 %v348
    %417 = vmatpush.bf16.msra.mxu0 %v346
    %418 = vmatpush.bf16.msra.mxu0 %v344
    %419 = vmatpush.bf16.msra.mxu0 %v342
    %420 = vmatpush.bf16.msra.mxu0 %v340
    %421 = vmatpush.bf16.msra.mxu0 %v338
    %422 = vmatpush.bf16.msra.mxu0 %v336
    %423 = vmatpush.bf16.msra.mxu0 %v334
    %424 = vmatmul.bf16.gmra.mxu0 %v201
    %v425 = vpop.f32.mrf.mxu0
    %v426 = vadd.f32 %v407, %v425
    %v427 = vpop.f32.mrf.mxu0
    %v428 = vadd.f32 %v409, %v427
    %429 = vmatmul.bf16.gmra.mxu0 %v204
    %v430 = vpop.f32.mrf.mxu0
    %v431 = vadd.f32 %v412, %v430
    %v432 = vpop.f32.mrf.mxu0
    %v433 = vadd.f32 %v414, %v432
    %434 = vdwg.mxu0
    %435 = vmatpush.bf16.msra.mxu0 0
    %436 = vmatpush.bf16.msra.mxu0 0
    %437 = vmatpush.bf16.msra.mxu0 0
    %438 = vmatpush.bf16.msra.mxu0 0
    %439 = vmatpush.bf16.msra.mxu0 0
    %440 = vmatpush.bf16.msra.mxu0 0
    %441 = vmatpush.bf16.msra.mxu0 %v352
    %442 = vmatpush.bf16.msra.mxu0 %v350
    %443 = vmatmul.bf16.gmra.mxu0 %v392
    %v444 = vpop.f32.mrf.mxu0
    %v445 = vadd.f32 %v426, %v444
    %v446 = vpop.f32.mrf.mxu0
    %v447 = vadd.f32 %v428, %v446
    %448 = vmatmul.bf16.gmra.mxu0 %v395
    %v449 = vpop.f32.mrf.mxu0
    %v450 = vadd.f32 %v431, %v449
    %v451 = vpop.f32.mrf.mxu0
    %v452 = vadd.f32 %v433, %v451
    %453 = vdwg.mxu0
    %454 = vmatpush.bf16.msra.mxu0 %v333
    %455 = vmatpush.bf16.msra.mxu0 %v331
    %456 = vmatpush.bf16.msra.mxu0 %v329
    %457 = vmatpush.bf16.msra.mxu0 %v327
    %458 = vmatpush.bf16.msra.mxu0 %v325
    %459 = vmatpush.bf16.msra.mxu0 %v323
    %460 = vmatpush.bf16.msra.mxu0 %v321
    %461 = vmatpush.bf16.msra.mxu0 %v319
    %462 = vmatmul.bf16.gmra.mxu0 %v200
    %v463 = vpop.f32.mrf.mxu0
    %v464 = vadd.f32 0.0, %v463
    %v465 = vpop.f32.mrf.mxu0
    %v466 = vadd.f32 0.0, %v465
    %467 = vmatmul.bf16.gmra.mxu0 %v203
    %v468 = vpop.f32.mrf.mxu0
    %v469 = vadd.f32 0.0, %v468
    %v470 = vpop.f32.mrf.mxu0
    %v471 = vadd.f32 0.0, %v470
    %472 = vdwg.mxu0
    %473 = vmatpush.bf16.msra.mxu0 %v349
    %474 = vmatpush.bf16.msra.mxu0 %v347
    %475 = vmatpush.bf16.msra.mxu0 %v345
    %476 = vmatpush.bf16.msra.mxu0 %v343
    %477 = vmatpush.bf16.msra.mxu0 %v341
    %478 = vmatpush.bf16.msra.mxu0 %v339
    %479 = vmatpush.bf16.msra.mxu0 %v337
    %480 = vmatpush.bf16.msra.mxu0 %v335
    %481 = vmatmul.bf16.gmra.mxu0 %v201
    %v482 = vpop.f32.mrf.mxu0
    %v483 = vadd.f32 %v464, %v482
    %v484 = vpop.f32.mrf.mxu0
    %v485 = vadd.f32 %v466, %v484
    %486 = vmatmul.bf16.gmra.mxu0 %v204
    %v487 = vpop.f32.mrf.mxu0
    %v488 = vadd.f32 %v469, %v487
    %v489 = vpop.f32.mrf.mxu0
    %v490 = vadd.f32 %v471, %v489
    %491 = vdwg.mxu0
    %492 = vmatpush.bf16.msra.mxu0 0
    %493 = vmatpush.bf16.msra.mxu0 0
    %494 = vmatpush.bf16.msra.mxu0 0
    %495 = vmatpush.bf16.msra.mxu0 0
    %496 = vmatpush.bf16.msra.mxu0 0
    %497 = vmatpush.bf16.msra.mxu0 0
    %498 = vmatpush.bf16.msra.mxu0 %v353
    %499 = vmatpush.bf16.msra.mxu0 %v351
    %500 = vmatmul.bf16.gmra.mxu0 %v392
    %v501 = vpop.f32.mrf.mxu0
    %v502 = vadd.f32 %v483, %v501
    %v503 = vpop.f32.mrf.mxu0
    %v504 = vadd.f32 %v485, %v503
    %505 = vmatmul.bf16.gmra.mxu0 %v395
    %v506 = vpop.f32.mrf.mxu0
    %v507 = vadd.f32 %v488, %v506
    %v508 = vpop.f32.mrf.mxu0
    %v509 = vadd.f32 %v490, %v508
    %510 = vdwg.mxu0
    %512 = vset.pattern.permute.xlu0 0
    %513 = vperm.xlu0 %512, %v111
    %v514 = vpop.permute.xlu0 %513
    %517 = vset.pattern.permute.xlu0 0
    %518 = vperm.xlu0 %517, %v112
    %v519 = vpop.permute.xlu0 %518
    %522 = vset.pattern.permute.xlu0 0
    %523 = vperm.xlu0 %522, %v113
    %v524 = vpop.permute.xlu0 %523
    %527 = vset.pattern.permute.xlu0 0
    %528 = vperm.xlu0 %527, %v114
    %v529 = vpop.permute.xlu0 %528
    %v531 = vmul.f32 %v445, %v514
    %v532 = vmul.f32 %v502, %v514
    %v533 = vmul.f32 %v447, %v519
    %v534 = vmul.f32 %v504, %v519
    %v535 = vmul.f32 %v450, %v524
    %v536 = vmul.f32 %v507, %v524
    %v537 = vmul.f32 %v452, %v529
    %v538 = vmul.f32 %v509, %v529
    %539 = vset.pattern.permute.xlu0 1
    %540 = vperm.xlu0 %539, %v111
    %v541 = vpop.permute.xlu0 %540
    %543 = vset.pattern.permute.xlu0 1
    %544 = vperm.xlu0 %543, %v112
    %v545 = vpop.permute.xlu0 %544
    %547 = vset.pattern.permute.xlu0 1
    %548 = vperm.xlu0 %547, %v113
    %v549 = vpop.permute.xlu0 %548
    %551 = vset.pattern.permute.xlu0 1
    %552 = vperm.xlu0 %551, %v114
    %v553 = vpop.permute.xlu0 %552
    %v555 = vadd.f32 %v531, %v541
    %v556 = vadd.f32 %v532, %v541
    %v557 = vadd.f32 %v533, %v545
    %v558 = vadd.f32 %v534, %v545
    %v559 = vadd.f32 %v535, %v549
    %v560 = vadd.f32 %v536, %v549
    %v561 = vadd.f32 %v537, %v553
    %v562 = vadd.f32 %v538, %v553
    %v563 = vmax.f32 %v555, 0.0
    %v564 = vmax.f32 %v556, 0.0
    %v565 = vmax.f32 %v557, 0.0
    %v566 = vmax.f32 %v558, 0.0
    %v567 = vmax.f32 %v559, 0.0
    %v568 = vmax.f32 %v560, 0.0
    %v569 = vmax.f32 %v561, 0.0
    %v570 = vmax.f32 %v562, 0.0
    %571 = vst [vmem:[#allocation2 + $0x8] sm:$0xff] %v563
    %572 = vst [vmem:[#allocation2 + $0x10] sm:$0xff] %v564
    %573 = vst [vmem:[#allocation2 + $0x28] sm:$0xff] %v565
    %574 = vst [vmem:[#allocation2 + $0x30] sm:$0xff] %v566
    %575 = vst [vmem:[#allocation2 + $0x48] sm:$0xff] %v567
    %576 = vst [vmem:[#allocation2 + $0x50] sm:$0xff] %v568
    %577 = vst [vmem:[#allocation2 + $0x68] sm:$0xff] %v569
    %578 = vst [vmem:[#allocation2 + $0x70] sm:$0xff] %v570
    %v579 = vld [vmem:[#allocation2] sm:$0xff]
    %v580 = vld [vmem:[#allocation2 + $0x8] sm:$0xff]
    %v581 = vld [vmem:[#allocation2 + $0x10] sm:$0xff]
    %v582 = vld [vmem:[#allocation2 + $0x18] sm:$0xff]
    %v583 = vld [vmem:[#allocation2 + $0x20] sm:$0xff]
    %v584 = vld [vmem:[#allocation2 + $0x28] sm:$0xff]
    %v585 = vld [vmem:[#allocation2 + $0x30] sm:$0xff]
    %v586 = vld [vmem:[#allocation2 + $0x38] sm:$0xff]
    %v587 = vld [vmem:[#allocation2 + $0x40] sm:$0xff]
    %v588 = vld [vmem:[#allocation2 + $0x48] sm:$0xff]
    %v589 = vld [vmem:[#allocation2 + $0x50] sm:$0xff]
    %v590 = vld [vmem:[#allocation2 + $0x58] sm:$0xff]
    %v591 = vld [vmem:[#allocation2 + $0x60] sm:$0xff]
    %v592 = vld [vmem:[#allocation2 + $0x68] sm:$0xff]
    %v593 = vld [vmem:[#allocation2 + $0x70] sm:$0xff]
    %v594 = vld [vmem:[#allocation2 + $0x78] sm:$0xff]
    %v596 = vperm.slane %v136, 0
    %v597 = vperm.slane %v136, 1
    %598 = vrot.lane.b32.xlu0 %v596, 111
    %v599 = vpop.permute.xlu0 %598
    %600 = vrot.lane.b32.xlu0 %v597, 111
    %v601 = vpop.permute.xlu0 %600
    %vm602 = vcmask 908288
    %v603 = vsel %vm602, %v599, %v601
    %v607 = vmul.f32 %v579, %v599
    %v608 = vmul.f32 %v580, %v603
    %v609 = vmul.f32 %v581, %v601
    %v610 = vmul.f32 %v583, %v599
    %v611 = vmul.f32 %v584, %v603
    %v612 = vmul.f32 %v585, %v601
    %v613 = vmul.f32 %v587, %v599
    %v614 = vmul.f32 %v588, %v603
    %v615 = vmul.f32 %v589, %v601
    %v616 = vmul.f32 %v591, %v599
    %v617 = vmul.f32 %v592, %v603
    %v618 = vmul.f32 %v593, %v601
    %631 = vrot.lane.b32.xlu0 %v607, 17
    %v632 = vpop.permute.xlu0 %631
    %633 = vrot.lane.b32.xlu0 %v608, 17
    %v634 = vpop.permute.xlu0 %633
    %635 = vrot.lane.b32.xlu0 %v609, 17
    %v636 = vpop.permute.xlu0 %635
    %637 = vrot.lane.b32.xlu0 %v610, 17
    %v638 = vpop.permute.xlu0 %637
    %639 = vrot.lane.b32.xlu0 %v611, 17
    %v640 = vpop.permute.xlu0 %639
    %641 = vrot.lane.b32.xlu0 %v612, 17
    %v642 = vpop.permute.xlu0 %641
    %643 = vrot.lane.b32.xlu0 %v613, 17
    %v644 = vpop.permute.xlu0 %643
    %645 = vrot.lane.b32.xlu0 %v614, 17
    %v646 = vpop.permute.xlu0 %645
    %647 = vrot.lane.b32.xlu0 %v615, 17
    %v648 = vpop.permute.xlu0 %647
    %649 = vrot.lane.b32.xlu0 %v616, 17
    %v650 = vpop.permute.xlu0 %649
    %651 = vrot.lane.b32.xlu0 %v617, 17
    %v652 = vpop.permute.xlu0 %651
    %653 = vrot.lane.b32.xlu0 %v618, 17
    %v654 = vpop.permute.xlu0 %653
    %vm655 = vcmask 138240
    %v656 = vsel %vm655, %v632, %v634
    %v657 = vsel %vm655, %v634, %v636
    %v658 = vsel %vm655, %v638, %v640
    %v659 = vsel %vm655, %v640, %v642
    %v660 = vsel %vm655, %v644, %v646
    %v661 = vsel %vm655, %v646, %v648
    %v662 = vsel %vm655, %v650, %v652
    %v663 = vsel %vm655, %v652, %v654
    %672 = vst [vmem:[#allocation3] sm:$0xff] %v656
    %673 = vst [vmem:[#allocation3 + $0x8] sm:$0xff] %v657
    %674 = vst [vmem:[#allocation3 + $0x10] sm:$0xff] %v658
    %675 = vst [vmem:[#allocation3 + $0x18] sm:$0xff] %v659
    %676 = vst [vmem:[#allocation3 + $0x20] sm:$0xff] %v660
    %677 = vst [vmem:[#allocation3 + $0x28] sm:$0xff] %v661
    %678 = vst [vmem:[#allocation3 + $0x30] sm:$0xff] %v662
    %679 = vst [vmem:[#allocation3 + $0x38] sm:$0xff] %v663
    %v681 = vperm.slane %v137, 0
    %v682 = vperm.slane %v137, 1
    %683 = vrot.lane.b32.xlu0 %v681, 112
    %v684 = vpop.permute.xlu0 %683
    %685 = vrot.lane.b32.xlu0 %v682, 112
    %v686 = vpop.permute.xlu0 %685
    %vm687 = vcmask 916480
    %v688 = vsel %vm687, %v684, %v686
    %v692 = vmul.f32 %v579, %v684
    %v693 = vmul.f32 %v580, %v688
    %v694 = vmul.f32 %v581, %v686
    %v695 = vmul.f32 %v583, %v684
    %v696 = vmul.f32 %v584, %v688
    %v697 = vmul.f32 %v585, %v686
    %v698 = vmul.f32 %v587, %v684
    %v699 = vmul.f32 %v588, %v688
    %v700 = vmul.f32 %v589, %v686
    %v701 = vmul.f32 %v591, %v684
    %v702 = vmul.f32 %v592, %v688
    %v703 = vmul.f32 %v593, %v686
    %716 = vrot.lane.b32.xlu0 %v692, 16
    %v717 = vpop.permute.xlu0 %716
    %718 = vrot.lane.b32.xlu0 %v693, 16
    %v719 = vpop.permute.xlu0 %718
    %720 = vrot.lane.b32.xlu0 %v694, 16
    %v721 = vpop.permute.xlu0 %720
    %722 = vrot.lane.b32.xlu0 %v695, 16
    %v723 = vpop.permute.xlu0 %722
    %724 = vrot.lane.b32.xlu0 %v696, 16
    %v725 = vpop.permute.xlu0 %724
    %726 = vrot.lane.b32.xlu0 %v697, 16
    %v727 = vpop.permute.xlu0 %726
    %728 = vrot.lane.b32.xlu0 %v698, 16
    %v729 = vpop.permute.xlu0 %728
    %730 = vrot.lane.b32.xlu0 %v699, 16
    %v731 = vpop.permute.xlu0 %730
    %732 = vrot.lane.b32.xlu0 %v700, 16
    %v733 = vpop.permute.xlu0 %732
    %734 = vrot.lane.b32.xlu0 %v701, 16
    %v735 = vpop.permute.xlu0 %734
    %736 = vrot.lane.b32.xlu0 %v702, 16
    %v737 = vpop.permute.xlu0 %736
    %738 = vrot.lane.b32.xlu0 %v703, 16
    %v739 = vpop.permute.xlu0 %738
    %vm740 = vcmask 130048
    %v741 = vsel %vm740, %v717, %v719
    %v742 = vsel %vm740, %v719, %v721
    %v743 = vsel %vm740, %v723, %v725
    %v744 = vsel %vm740, %v725, %v727
    %v745 = vsel %vm740, %v729, %v731
    %v746 = vsel %vm740, %v731, %v733
    %v747 = vsel %vm740, %v735, %v737
    %v748 = vsel %vm740, %v737, %v739
    %757 = vst [vmem:[#allocation3 + $0x40] sm:$0xff] %v741
    %758 = vst [vmem:[#allocation3 + $0x48] sm:$0xff] %v742
    %759 = vst [vmem:[#allocation3 + $0x50] sm:$0xff] %v743
    %760 = vst [vmem:[#allocation3 + $0x58] sm:$0xff] %v744
    %761 = vst [vmem:[#allocation3 + $0x60] sm:$0xff] %v745
    %762 = vst [vmem:[#allocation3 + $0x68] sm:$0xff] %v746
    %763 = vst [vmem:[#allocation3 + $0x70] sm:$0xff] %v747
    %764 = vst [vmem:[#allocation3 + $0x78] sm:$0xff] %v748
    %v766 = vperm.slane %v138, 0
    %v767 = vperm.slane %v138, 1
    %768 = vrot.lane.b32.xlu0 %v766, 113
    %v769 = vpop.permute.xlu0 %768
    %770 = vrot.lane.b32.xlu0 %v767, 113
    %v771 = vpop.permute.xlu0 %770
    %vm772 = vcmask 924672
    %v773 = vsel %vm772, %v769, %v771
    %v777 = vmul.f32 %v579, %v769
    %v778 = vmul.f32 %v580, %v773
    %v779 = vmul.f32 %v581, %v771
    %v780 = vmul.f32 %v583, %v769
    %v781 = vmul.f32 %v584, %v773
    %v782 = vmul.f32 %v585, %v771
    %v783 = vmul.f32 %v587, %v769
    %v784 = vmul.f32 %v588, %v773
    %v785 = vmul.f32 %v589, %v771
    %v786 = vmul.f32 %v591, %v769
    %v787 = vmul.f32 %v592, %v773
    %v788 = vmul.f32 %v593, %v771
    %801 = vrot.lane.b32.xlu0 %v777, 15
    %v802 = vpop.permute.xlu0 %801
    %803 = vrot.lane.b32.xlu0 %v778, 15
    %v804 = vpop.permute.xlu0 %803
    %805 = vrot.lane.b32.xlu0 %v779, 15
    %v806 = vpop.permute.xlu0 %805
    %807 = vrot.lane.b32.xlu0 %v780, 15
    %v808 = vpop.permute.xlu0 %807
    %809 = vrot.lane.b32.xlu0 %v781, 15
    %v810 = vpop.permute.xlu0 %809
    %811 = vrot.lane.b32.xlu0 %v782, 15
    %v812 = vpop.permute.xlu0 %811
    %813 = vrot.lane.b32.xlu0 %v783, 15
    %v814 = vpop.permute.xlu0 %813
    %815 = vrot.lane.b32.xlu0 %v784, 15
    %v816 = vpop.permute.xlu0 %815
    %817 = vrot.lane.b32.xlu0 %v785, 15
    %v818 = vpop.permute.xlu0 %817
    %819 = vrot.lane.b32.xlu0 %v786, 15
    %v820 = vpop.permute.xlu0 %819
    %821 = vrot.lane.b32.xlu0 %v787, 15
    %v822 = vpop.permute.xlu0 %821
    %823 = vrot.lane.b32.xlu0 %v788, 15
    %v824 = vpop.permute.xlu0 %823
    %vm825 = vcmask 121856
    %v826 = vsel %vm825, %v802, %v804
    %v827 = vsel %vm825, %v804, %v806
    %v828 = vsel %vm825, %v808, %v810
    %v829 = vsel %vm825, %v810, %v812
    %v830 = vsel %vm825, %v814, %v816
    %v831 = vsel %vm825, %v816, %v818
    %v832 = vsel %vm825, %v820, %v822
    %v833 = vsel %vm825, %v822, %v824
    %842 = vst [vmem:[#allocation3 + $0x80] sm:$0xff] %v826
    %843 = vst [vmem:[#allocation3 + $0x88] sm:$0xff] %v827
    %844 = vst [vmem:[#allocation3 + $0x90] sm:$0xff] %v828
    %845 = vst [vmem:[#allocation3 + $0x98] sm:$0xff] %v829
    %846 = vst [vmem:[#allocation3 + $0xa0] sm:$0xff] %v830
    %847 = vst [vmem:[#allocation3 + $0xa8] sm:$0xff] %v831
    %848 = vst [vmem:[#allocation3 + $0xb0] sm:$0xff] %v832
    %849 = vst [vmem:[#allocation3 + $0xb8] sm:$0xff] %v833
    %v851 = vperm.slane %v139, 0
    %v852 = vperm.slane %v139, 1
    %853 = vrot.lane.b32.xlu0 %v851, 127
    %v854 = vpop.permute.xlu0 %853
    %855 = vrot.lane.b32.xlu0 %v852, 127
    %v856 = vpop.permute.xlu0 %855
    %vm857 = vcmask 1039360
    %v858 = vsel %vm857, %v854, %v856
    %v862 = vmul.f32 %v579, %v854
    %v863 = vmul.f32 %v580, %v858
    %v864 = vmul.f32 %v581, %v856
    %v865 = vmul.f32 %v583, %v854
    %v866 = vmul.f32 %v584, %v858
    %v867 = vmul.f32 %v585, %v856
    %v868 = vmul.f32 %v587, %v854
    %v869 = vmul.f32 %v588, %v858
    %v870 = vmul.f32 %v589, %v856
    %v871 = vmul.f32 %v591, %v854
    %v872 = vmul.f32 %v592, %v858
    %v873 = vmul.f32 %v593, %v856
    %886 = vrot.lane.b32.xlu0 %v862, 1
    %v887 = vpop.permute.xlu0 %886
    %888 = vrot.lane.b32.xlu0 %v863, 1
    %v889 = vpop.permute.xlu0 %888
    %890 = vrot.lane.b32.xlu0 %v864, 1
    %v891 = vpop.permute.xlu0 %890
    %892 = vrot.lane.b32.xlu0 %v865, 1
    %v893 = vpop.permute.xlu0 %892
    %894 = vrot.lane.b32.xlu0 %v866, 1
    %v895 = vpop.permute.xlu0 %894
    %896 = vrot.lane.b32.xlu0 %v867, 1
    %v897 = vpop.permute.xlu0 %896
    %898 = vrot.lane.b32.xlu0 %v868, 1
    %v899 = vpop.permute.xlu0 %898
    %900 = vrot.lane.b32.xlu0 %v869, 1
    %v901 = vpop.permute.xlu0 %900
    %902 = vrot.lane.b32.xlu0 %v870, 1
    %v903 = vpop.permute.xlu0 %902
    %904 = vrot.lane.b32.xlu0 %v871, 1
    %v905 = vpop.permute.xlu0 %904
    %906 = vrot.lane.b32.xlu0 %v872, 1
    %v907 = vpop.permute.xlu0 %906
    %908 = vrot.lane.b32.xlu0 %v873, 1
    %v909 = vpop.permute.xlu0 %908
    %vm910 = vcmask 7168
    %v911 = vsel %vm910, %v887, %v889
    %v912 = vsel %vm910, %v889, %v891
    %v913 = vsel %vm910, %v893, %v895
    %v914 = vsel %vm910, %v895, %v897
    %v915 = vsel %vm910, %v899, %v901
    %v916 = vsel %vm910, %v901, %v903
    %v917 = vsel %vm910, %v905, %v907
    %v918 = vsel %vm910, %v907, %v909
    %927 = vst [vmem:[#allocation3 + $0xc0] sm:$0xff] %v911
    %928 = vst [vmem:[#allocation3 + $0xc8] sm:$0xff] %v912
    %929 = vst [vmem:[#allocation3 + $0xd0] sm:$0xff] %v913
    %930 = vst [vmem:[#allocation3 + $0xd8] sm:$0xff] %v914
    %931 = vst [vmem:[#allocation3 + $0xe0] sm:$0xff] %v915
    %932 = vst [vmem:[#allocation3 + $0xe8] sm:$0xff] %v916
    %933 = vst [vmem:[#allocation3 + $0xf0] sm:$0xff] %v917
    %934 = vst [vmem:[#allocation3 + $0xf8] sm:$0xff] %v918
    %935 = vst [vmem:[#allocation3 + $0x100] sm:$0xff] %v580
    %936 = vst [vmem:[#allocation3 + $0x108] sm:$0xff] %v581
    %937 = vst [vmem:[#allocation3 + $0x110] sm:$0xff] %v584
    %938 = vst [vmem:[#allocation3 + $0x118] sm:$0xff] %v585
    %939 = vst [vmem:[#allocation3 + $0x120] sm:$0xff] %v588
    %940 = vst [vmem:[#allocation3 + $0x128] sm:$0xff] %v589
    %941 = vst [vmem:[#allocation3 + $0x130] sm:$0xff] %v592
    %942 = vst [vmem:[#allocation3 + $0x138] sm:$0xff] %v593
    %v944 = vperm.slane %v140, 0
    %v945 = vperm.slane %v140, 1
    %946 = vrot.lane.b32.xlu0 %v944, 1
    %v947 = vpop.permute.xlu0 %946
    %948 = vrot.lane.b32.xlu0 %v945, 1
    %v949 = vpop.permute.xlu0 %948
    %v950 = vsel %vm910, %v947, %v949
    %v954 = vmul.f32 %v580, %v947
    %v955 = vmul.f32 %v581, %v950
    %v956 = vmul.f32 %v582, %v949
    %v957 = vmul.f32 %v584, %v947
    %v958 = vmul.f32 %v585, %v950
    %v959 = vmul.f32 %v586, %v949
    %v960 = vmul.f32 %v588, %v947
    %v961 = vmul.f32 %v589, %v950
    %v962 = vmul.f32 %v590, %v949
    %v963 = vmul.f32 %v592, %v947
    %v964 = vmul.f32 %v593, %v950
    %v965 = vmul.f32 %v594, %v949
    %978 = vrot.lane.b32.xlu0 %v954, 127
    %v979 = vpop.permute.xlu0 %978
    %980 = vrot.lane.b32.xlu0 %v955, 127
    %v981 = vpop.permute.xlu0 %980
    %982 = vrot.lane.b32.xlu0 %v956, 127
    %v983 = vpop.permute.xlu0 %982
    %984 = vrot.lane.b32.xlu0 %v957, 127
    %v985 = vpop.permute.xlu0 %984
    %986 = vrot.lane.b32.xlu0 %v958, 127
    %v987 = vpop.permute.xlu0 %986
    %988 = vrot.lane.b32.xlu0 %v959, 127
    %v989 = vpop.permute.xlu0 %988
    %990 = vrot.lane.b32.xlu0 %v960, 127
    %v991 = vpop.permute.xlu0 %990
    %992 = vrot.lane.b32.xlu0 %v961, 127
    %v993 = vpop.permute.xlu0 %992
    %994 = vrot.lane.b32.xlu0 %v962, 127
    %v995 = vpop.permute.xlu0 %994
    %996 = vrot.lane.b32.xlu0 %v963, 127
    %v997 = vpop.permute.xlu0 %996
    %998 = vrot.lane.b32.xlu0 %v964, 127
    %v999 = vpop.permute.xlu0 %998
    %1000 = vrot.lane.b32.xlu0 %v965, 127
    %v1001 = vpop.permute.xlu0 %1000
    %v1002 = vsel %vm857, %v979, %v981
    %v1003 = vsel %vm857, %v981, %v983
    %v1004 = vsel %vm857, %v985, %v987
    %v1005 = vsel %vm857, %v987, %v989
    %v1006 = vsel %vm857, %v991, %v993
    %v1007 = vsel %vm857, %v993, %v995
    %v1008 = vsel %vm857, %v997, %v999
    %v1009 = vsel %vm857, %v999, %v1001
    %1018 = vst [vmem:[#allocation3 + $0x140] sm:$0xff] %v1002
    %1019 = vst [vmem:[#allocation3 + $0x148] sm:$0xff] %v1003
    %1020 = vst [vmem:[#allocation3 + $0x150] sm:$0xff] %v1004
    %1021 = vst [vmem:[#allocation3 + $0x158] sm:$0xff] %v1005
    %1022 = vst [vmem:[#allocation3 + $0x160] sm:$0xff] %v1006
    %1023 = vst [vmem:[#allocation3 + $0x168] sm:$0xff] %v1007
    %1024 = vst [vmem:[#allocation3 + $0x170] sm:$0xff] %v1008
    %1025 = vst [vmem:[#allocation3 + $0x178] sm:$0xff] %v1009
    %v1027 = vperm.slane %v141, 0
    %v1028 = vperm.slane %v141, 1
    %1029 = vrot.lane.b32.xlu0 %v1027, 15
    %v1030 = vpop.permute.xlu0 %1029
    %1031 = vrot.lane.b32.xlu0 %v1028, 15
    %v1032 = vpop.permute.xlu0 %1031
    %v1033 = vsel %vm825, %v1030, %v1032
    %v1037 = vmul.f32 %v580, %v1030
    %v1038 = vmul.f32 %v581, %v1033
    %v1039 = vmul.f32 %v582, %v1032
    %v1040 = vmul.f32 %v584, %v1030
    %v1041 = vmul.f32 %v585, %v1033
    %v1042 = vmul.f32 %v586, %v1032
    %v1043 = vmul.f32 %v588, %v1030
    %v1044 = vmul.f32 %v589, %v1033
    %v1045 = vmul.f32 %v590, %v1032
    %v1046 = vmul.f32 %v592, %v1030
    %v1047 = vmul.f32 %v593, %v1033
    %v1048 = vmul.f32 %v594, %v1032
    %1061 = vrot.lane.b32.xlu0 %v1037, 113
    %v1062 = vpop.permute.xlu0 %1061
    %1063 = vrot.lane.b32.xlu0 %v1038, 113
    %v1064 = vpop.permute.xlu0 %1063
    %1065 = vrot.lane.b32.xlu0 %v1039, 113
    %v1066 = vpop.permute.xlu0 %1065
    %1067 = vrot.lane.b32.xlu0 %v1040, 113
    %v1068 = vpop.permute.xlu0 %1067
    %1069 = vrot.lane.b32.xlu0 %v1041, 113
    %v1070 = vpop.permute.xlu0 %1069
    %1071 = vrot.lane.b32.xlu0 %v1042, 113
    %v1072 = vpop.permute.xlu0 %1071
    %1073 = vrot.lane.b32.xlu0 %v1043, 113
    %v1074 = vpop.permute.xlu0 %1073
    %1075 = vrot.lane.b32.xlu0 %v1044, 113
    %v1076 = vpop.permute.xlu0 %1075
    %1077 = vrot.lane.b32.xlu0 %v1045, 113
    %v1078 = vpop.permute.xlu0 %1077
    %1079 = vrot.lane.b32.xlu0 %v1046, 113
    %v1080 = vpop.permute.xlu0 %1079
    %1081 = vrot.lane.b32.xlu0 %v1047, 113
    %v1082 = vpop.permute.xlu0 %1081
    %1083 = vrot.lane.b32.xlu0 %v1048, 113
    %v1084 = vpop.permute.xlu0 %1083
    %v1085 = vsel %vm772, %v1062, %v1064
    %v1086 = vsel %vm772, %v1064, %v1066
    %v1087 = vsel %vm772, %v1068, %v1070
    %v1088 = vsel %vm772, %v1070, %v1072
    %v1089 = vsel %vm772, %v1074, %v1076
    %v1090 = vsel %vm772, %v1076, %v1078
    %v1091 = vsel %vm772, %v1080, %v1082
    %v1092 = vsel %vm772, %v1082, %v1084
    %1101 = vst [vmem:[#allocation3 + $0x180] sm:$0xff] %v1085
    %1102 = vst [vmem:[#allocation3 + $0x188] sm:$0xff] %v1086
    %1103 = vst [vmem:[#allocation3 + $0x190] sm:$0xff] %v1087
    %1104 = vst [vmem:[#allocation3 + $0x198] sm:$0xff] %v1088
    %1105 = vst [vmem:[#allocation3 + $0x1a0] sm:$0xff] %v1089
    %1106 = vst [vmem:[#allocation3 + $0x1a8] sm:$0xff] %v1090
    %1107 = vst [vmem:[#allocation3 + $0x1b0] sm:$0xff] %v1091
    %1108 = vst [vmem:[#allocation3 + $0x1b8] sm:$0xff] %v1092
    %v1110 = vperm.slane %v142, 0
    %v1111 = vperm.slane %v142, 1
    %1112 = vrot.lane.b32.xlu0 %v1110, 16
    %v1113 = vpop.permute.xlu0 %1112
    %1114 = vrot.lane.b32.xlu0 %v1111, 16
    %v1115 = vpop.permute.xlu0 %1114
    %v1116 = vsel %vm740, %v1113, %v1115
    %v1120 = vmul.f32 %v580, %v1113
    %v1121 = vmul.f32 %v581, %v1116
    %v1122 = vmul.f32 %v582, %v1115
    %v1123 = vmul.f32 %v584, %v1113
    %v1124 = vmul.f32 %v585, %v1116
    %v1125 = vmul.f32 %v586, %v1115
    %v1126 = vmul.f32 %v588, %v1113
    %v1127 = vmul.f32 %v589, %v1116
    %v1128 = vmul.f32 %v590, %v1115
    %v1129 = vmul.f32 %v592, %v1113
    %v1130 = vmul.f32 %v593, %v1116
    %v1131 = vmul.f32 %v594, %v1115
    %1144 = vrot.lane.b32.xlu0 %v1120, 112
    %v1145 = vpop.permute.xlu0 %1144
    %1146 = vrot.lane.b32.xlu0 %v1121, 112
    %v1147 = vpop.permute.xlu0 %1146
    %1148 = vrot.lane.b32.xlu0 %v1122, 112
    %v1149 = vpop.permute.xlu0 %1148
    %1150 = vrot.lane.b32.xlu0 %v1123, 112
    %v1151 = vpop.permute.xlu0 %1150
    %1152 = vrot.lane.b32.xlu0 %v1124, 112
    %v1153 = vpop.permute.xlu0 %1152
    %1154 = vrot.lane.b32.xlu0 %v1125, 112
    %v1155 = vpop.permute.xlu0 %1154
    %1156 = vrot.lane.b32.xlu0 %v1126, 112
    %v1157 = vpop.permute.xlu0 %1156
    %1158 = vrot.lane.b32.xlu0 %v1127, 112
    %v1159 = vpop.permute.xlu0 %1158
    %1160 = vrot.lane.b32.xlu0 %v1128, 112
    %v1161 = vpop.permute.xlu0 %1160
    %1162 = vrot.lane.b32.xlu0 %v1129, 112
    %v1163 = vpop.permute.xlu0 %1162
    %1164 = vrot.lane.b32.xlu0 %v1130, 112
    %v1165 = vpop.permute.xlu0 %1164
    %1166 = vrot.lane.b32.xlu0 %v1131, 112
    %v1167 = vpop.permute.xlu0 %1166
    %v1168 = vsel %vm687, %v1145, %v1147
    %v1169 = vsel %vm687, %v1147, %v1149
    %v1170 = vsel %vm687, %v1151, %v1153
    %v1171 = vsel %vm687, %v1153, %v1155
    %v1172 = vsel %vm687, %v1157, %v1159
    %v1173 = vsel %vm687, %v1159, %v1161
    %v1174 = vsel %vm687, %v1163, %v1165
    %v1175 = vsel %vm687, %v1165, %v1167
    %1184 = vst [vmem:[#allocation3 + $0x1c0] sm:$0xff] %v1168
    %1185 = vst [vmem:[#allocation3 + $0x1c8] sm:$0xff] %v1169
    %1186 = vst [vmem:[#allocation3 + $0x1d0] sm:$0xff] %v1170
    %1187 = vst [vmem:[#allocation3 + $0x1d8] sm:$0xff] %v1171
    %1188 = vst [vmem:[#allocation3 + $0x1e0] sm:$0xff] %v1172
    %1189 = vst [vmem:[#allocation3 + $0x1e8] sm:$0xff] %v1173
    %1190 = vst [vmem:[#allocation3 + $0x1f0] sm:$0xff] %v1174
    %1191 = vst [vmem:[#allocation3 + $0x1f8] sm:$0xff] %v1175
    %v1193 = vperm.slane %v143, 0
    %v1194 = vperm.slane %v143, 1
    %1195 = vrot.lane.b32.xlu0 %v1193, 17
    %v1196 = vpop.permute.xlu0 %1195
    %1197 = vrot.lane.b32.xlu0 %v1194, 17
    %v1198 = vpop.permute.xlu0 %1197
    %v1199 = vsel %vm655, %v1196, %v1198
    %v1203 = vmul.f32 %v580, %v1196
    %v1204 = vmul.f32 %v581, %v1199
    %v1205 = vmul.f32 %v582, %v1198
    %v1206 = vmul.f32 %v584, %v1196
    %v1207 = vmul.f32 %v585, %v1199
    %v1208 = vmul.f32 %v586, %v1198
    %v1209 = vmul.f32 %v588, %v1196
    %v1210 = vmul.f32 %v589, %v1199
    %v1211 = vmul.f32 %v590, %v1198
    %v1212 = vmul.f32 %v592, %v1196
    %v1213 = vmul.f32 %v593, %v1199
    %v1214 = vmul.f32 %v594, %v1198
    %1227 = vrot.lane.b32.xlu0 %v1203, 111
    %v1228 = vpop.permute.xlu0 %1227
    %1229 = vrot.lane.b32.xlu0 %v1204, 111
    %v1230 = vpop.permute.xlu0 %1229
    %1231 = vrot.lane.b32.xlu0 %v1205, 111
    %v1232 = vpop.permute.xlu0 %1231
    %1233 = vrot.lane.b32.xlu0 %v1206, 111
    %v1234 = vpop.permute.xlu0 %1233
    %1235 = vrot.lane.b32.xlu0 %v1207, 111
    %v1236 = vpop.permute.xlu0 %1235
    %1237 = vrot.lane.b32.xlu0 %v1208, 111
    %v1238 = vpop.permute.xlu0 %1237
    %1239 = vrot.lane.b32.xlu0 %v1209, 111
    %v1240 = vpop.permute.xlu0 %1239
    %1241 = vrot.lane.b32.xlu0 %v1210, 111
    %v1242 = vpop.permute.xlu0 %1241
    %1243 = vrot.lane.b32.xlu0 %v1211, 111
    %v1244 = vpop.permute.xlu0 %1243
    %1245 = vrot.lane.b32.xlu0 %v1212, 111
    %v1246 = vpop.permute.xlu0 %1245
    %1247 = vrot.lane.b32.xlu0 %v1213, 111
    %v1248 = vpop.permute.xlu0 %1247
    %1249 = vrot.lane.b32.xlu0 %v1214, 111
    %v1250 = vpop.permute.xlu0 %1249
    %v1251 = vsel %vm602, %v1228, %v1230
    %v1252 = vsel %vm602, %v1230, %v1232
    %v1253 = vsel %vm602, %v1234, %v1236
    %v1254 = vsel %vm602, %v1236, %v1238
    %v1255 = vsel %vm602, %v1240, %v1242
    %v1256 = vsel %vm602, %v1242, %v1244
    %v1257 = vsel %vm602, %v1246, %v1248
    %v1258 = vsel %vm602, %v1248, %v1250
    %1267 = vst [vmem:[#allocation3 + $0x200] sm:$0xff] %v1251
    %1268 = vst [vmem:[#allocation3 + $0x208] sm:$0xff] %v1252
    %1269 = vst [vmem:[#allocation3 + $0x210] sm:$0xff] %v1253
    %1270 = vst [vmem:[#allocation3 + $0x218] sm:$0xff] %v1254
    %1271 = vst [vmem:[#allocation3 + $0x220] sm:$0xff] %v1255
    %1272 = vst [vmem:[#allocation3 + $0x228] sm:$0xff] %v1256
    %1273 = vst [vmem:[#allocation3 + $0x230] sm:$0xff] %v1257
    %1274 = vst [vmem:[#allocation3 + $0x238] sm:$0xff] %v1258
    %v1275 = vld [vmem:[#allocation3] sm:$0xff]
    %v1276 = vld [vmem:[#allocation3 + $0x8] sm:$0xff]
    %v1277 = vld [vmem:[#allocation3 + $0x10] sm:$0xff]
    %v1278 = vld [vmem:[#allocation3 + $0x18] sm:$0xff]
    %v1279 = vld [vmem:[#allocation3 + $0x20] sm:$0xff]
    %v1280 = vld [vmem:[#allocation3 + $0x28] sm:$0xff]
    %v1281 = vld [vmem:[#allocation3 + $0x30] sm:$0xff]
    %v1282 = vld [vmem:[#allocation3 + $0x38] sm:$0xff]
    %v1283 = vld [vmem:[#allocation3 + $0x40] sm:$0xff]
    %v1284 = vld [vmem:[#allocation3 + $0x48] sm:$0xff]
    %v1285 = vld [vmem:[#allocation3 + $0x50] sm:$0xff]
    %v1286 = vld [vmem:[#allocation3 + $0x58] sm:$0xff]
    %v1287 = vld [vmem:[#allocation3 + $0x60] sm:$0xff]
    %v1288 = vld [vmem:[#allocation3 + $0x68] sm:$0xff]
    %v1289 = vld [vmem:[#allocation3 + $0x70] sm:$0xff]
    %v1290 = vld [vmem:[#allocation3 + $0x78] sm:$0xff]
    %v1291 = vld [vmem:[#allocation3 + $0x80] sm:$0xff]
    %v1292 = vld [vmem:[#allocation3 + $0x88] sm:$0xff]
    %v1293 = vld [vmem:[#allocation3 + $0x90] sm:$0xff]
    %v1294 = vld [vmem:[#allocation3 + $0x98] sm:$0xff]
    %v1295 = vld [vmem:[#allocation3 + $0xa0] sm:$0xff]
    %v1296 = vld [vmem:[#allocation3 + $0xa8] sm:$0xff]
    %v1297 = vld [vmem:[#allocation3 + $0xb0] sm:$0xff]
    %v1298 = vld [vmem:[#allocation3 + $0xb8] sm:$0xff]
    %v1299 = vld [vmem:[#allocation3 + $0xc0] sm:$0xff]
    %v1300 = vld [vmem:[#allocation3 + $0xc8] sm:$0xff]
    %v1301 = vld [vmem:[#allocation3 + $0xd0] sm:$0xff]
    %v1302 = vld [vmem:[#allocation3 + $0xd8] sm:$0xff]
    %v1303 = vld [vmem:[#allocation3 + $0xe0] sm:$0xff]
    %v1304 = vld [vmem:[#allocation3 + $0xe8] sm:$0xff]
    %v1305 = vld [vmem:[#allocation3 + $0xf0] sm:$0xff]
    %v1306 = vld [vmem:[#allocation3 + $0xf8] sm:$0xff]
    %v1307 = vld [vmem:[#allocation3 + $0x100] sm:$0xff]
    %v1308 = vld [vmem:[#allocation3 + $0x108] sm:$0xff]
    %v1309 = vld [vmem:[#allocation3 + $0x110] sm:$0xff]
    %v1310 = vld [vmem:[#allocation3 + $0x118] sm:$0xff]
    %v1311 = vld [vmem:[#allocation3 + $0x120] sm:$0xff]
    %v1312 = vld [vmem:[#allocation3 + $0x128] sm:$0xff]
    %v1313 = vld [vmem:[#allocation3 + $0x130] sm:$0xff]
    %v1314 = vld [vmem:[#allocation3 + $0x138] sm:$0xff]
    %v1315 = vld [vmem:[#allocation3 + $0x140] sm:$0xff]
    %v1316 = vld [vmem:[#allocation3 + $0x148] sm:$0xff]
    %v1317 = vld [vmem:[#allocation3 + $0x150] sm:$0xff]
    %v1318 = vld [vmem:[#allocation3 + $0x158] sm:$0xff]
    %v1319 = vld [vmem:[#allocation3 + $0x160] sm:$0xff]
    %v1320 = vld [vmem:[#allocation3 + $0x168] sm:$0xff]
    %v1321 = vld [vmem:[#allocation3 + $0x170] sm:$0xff]
    %v1322 = vld [vmem:[#allocation3 + $0x178] sm:$0xff]
    %v1323 = vld [vmem:[#allocation3 + $0x180] sm:$0xff]
    %v1324 = vld [vmem:[#allocation3 + $0x188] sm:$0xff]
    %v1325 = vld [vmem:[#allocation3 + $0x190] sm:$0xff]
    %v1326 = vld [vmem:[#allocation3 + $0x198] sm:$0xff]
    %v1327 = vld [vmem:[#allocation3 + $0x1a0] sm:$0xff]
    %v1328 = vld [vmem:[#allocation3 + $0x1a8] sm:$0xff]
    %v1329 = vld [vmem:[#allocation3 + $0x1b0] sm:$0xff]
    %v1330 = vld [vmem:[#allocation3 + $0x1b8] sm:$0xff]
    %v1331 = vld [vmem:[#allocation3 + $0x1c0] sm:$0xff]
    %v1332 = vld [vmem:[#allocation3 + $0x1c8] sm:$0xff]
    %v1333 = vld [vmem:[#allocation3 + $0x1d0] sm:$0xff]
    %v1334 = vld [vmem:[#allocation3 + $0x1d8] sm:$0xff]
    %v1335 = vld [vmem:[#allocation3 + $0x1e0] sm:$0xff]
    %v1336 = vld [vmem:[#allocation3 + $0x1e8] sm:$0xff]
    %v1337 = vld [vmem:[#allocation3 + $0x1f0] sm:$0xff]
    %v1338 = vld [vmem:[#allocation3 + $0x1f8] sm:$0xff]
    %v1339 = vld [vmem:[#allocation3 + $0x200] sm:$0xff]
    %v1340 = vld [vmem:[#allocation3 + $0x208] sm:$0xff]
    %v1341 = vld [vmem:[#allocation3 + $0x210] sm:$0xff]
    %v1342 = vld [vmem:[#allocation3 + $0x218] sm:$0xff]
    %v1343 = vld [vmem:[#allocation3 + $0x220] sm:$0xff]
    %v1344 = vld [vmem:[#allocation3 + $0x228] sm:$0xff]
    %v1345 = vld [vmem:[#allocation3 + $0x230] sm:$0xff]
    %v1346 = vld [vmem:[#allocation3 + $0x238] sm:$0xff]
    %v1348 = vsel %vm390, %v126, 0
    %v1351 = vsel %vm390, %v129, 0
    %v1354 = vsel %vm390, %v132, 0
    %v1357 = vsel %vm390, %v135, 0
    %1359 = vmatpush.msra.mxu0 %v1305
    %1360 = vmatpush.msra.mxu0 %v1303
    %1361 = vmatpush.msra.mxu0 %v1301
    %1362 = vmatpush.msra.mxu0 %v1299
    %1363 = vmatpush.msra.mxu0 %v1297
    %1364 = vmatpush.msra.mxu0 %v1295
    %1365 = vmatpush.msra.mxu0 %v1293
    %1366 = vmatpush.msra.mxu0 %v1291
    %1367 = vmatpush.msra.mxu0 %v1289
    %1368 = vmatpush.msra.mxu0 %v1287
    %1369 = vmatpush.msra.mxu0 %v1285
    %1370 = vmatpush.msra.mxu0 %v1283
    %1371 = vmatpush.msra.mxu0 %v1281
    %1372 = vmatpush.msra.mxu0 %v1279
    %1373 = vmatpush.msra.mxu0 %v1277
    %1374 = vmatpush.msra.mxu0 %v1275
    %1375 = vmatmul.f32.gmra.mxu0 %v124
    %v1376 = vpop.f32.mrf.mxu0
    %v1377 = vadd.f32 0.0, %v1376
    %1378 = vmatmul.f32.gmra.mxu0 %v127
    %v1379 = vpop.f32.mrf.mxu0
    %v1380 = vadd.f32 0.0, %v1379
    %1381 = vmatmul.f32.gmra.mxu0 %v130
    %v1382 = vpop.f32.mrf.mxu0
    %v1383 = vadd.f32 0.0, %v1382
    %1384 = vmatmul.f32.gmra.mxu0 %v133
    %v1385 = vpop.f32.mrf.mxu0
    %v1386 = vadd.f32 0.0, %v1385
    %1387 = vdwg.mxu0
    %1388 = vmatpush.msra.mxu0 %v1337
    %1389 = vmatpush.msra.mxu0 %v1335
    %1390 = vmatpush.msra.mxu0 %v1333
    %1391 = vmatpush.msra.mxu0 %v1331
    %1392 = vmatpush.msra.mxu0 %v1329
    %1393 = vmatpush.msra.mxu0 %v1327
    %1394 = vmatpush.msra.mxu0 %v1325
    %1395 = vmatpush.msra.mxu0 %v1323
    %1396 = vmatpush.msra.mxu0 %v1321
    %1397 = vmatpush.msra.mxu0 %v1319
    %1398 = vmatpush.msra.mxu0 %v1317
    %1399 = vmatpush.msra.mxu0 %v1315
    %1400 = vmatpush.msra.mxu0 %v1313
    %1401 = vmatpush.msra.mxu0 %v1311
    %1402 = vmatpush.msra.mxu0 %v1309
    %1403 = vmatpush.msra.mxu0 %v1307
    %1404 = vmatmul.f32.gmra.mxu0 %v125
    %v1405 = vpop.f32.mrf.mxu0
    %v1406 = vadd.f32 %v1377, %v1405
    %1407 = vmatmul.f32.gmra.mxu0 %v128
    %v1408 = vpop.f32.mrf.mxu0
    %v1409 = vadd.f32 %v1380, %v1408
    %1410 = vmatmul.f32.gmra.mxu0 %v131
    %v1411 = vpop.f32.mrf.mxu0
    %v1412 = vadd.f32 %v1383, %v1411
    %1413 = vmatmul.f32.gmra.mxu0 %v134
    %v1414 = vpop.f32.mrf.mxu0
    %v1415 = vadd.f32 %v1386, %v1414
    %1416 = vdwg.mxu0
    %1417 = vmatpush.msra.mxu0 0.0
    %1418 = vmatpush.msra.mxu0 0.0
    %1419 = vmatpush.msra.mxu0 0.0
    %1420 = vmatpush.msra.mxu0 0.0
    %1421 = vmatpush.msra.mxu0 0.0
    %1422 = vmatpush.msra.mxu0 0.0
    %1423 = vmatpush.msra.mxu0 0.0
    %1424 = vmatpush.msra.mxu0 0.0
    %1425 = vmatpush.msra.mxu0 0.0
    %1426 = vmatpush.msra.mxu0 0.0
    %1427 = vmatpush.msra.mxu0 0.0
    %1428 = vmatpush.msra.mxu0 0.0
    %1429 = vmatpush.msra.mxu0 %v1345
    %1430 = vmatpush.msra.mxu0 %v1343
    %1431 = vmatpush.msra.mxu0 %v1341
    %1432 = vmatpush.msra.mxu0 %v1339
    %1433 = vmatmul.f32.gmra.mxu0 %v1348
    %v1434 = vpop.f32.mrf.mxu0
    %v1435 = vadd.f32 %v1406, %v1434
    %1436 = vmatmul.f32.gmra.mxu0 %v1351
    %v1437 = vpop.f32.mrf.mxu0
    %v1438 = vadd.f32 %v1409, %v1437
    %1439 = vmatmul.f32.gmra.mxu0 %v1354
    %v1440 = vpop.f32.mrf.mxu0
    %v1441 = vadd.f32 %v1412, %v1440
    %1442 = vmatmul.f32.gmra.mxu0 %v1357
    %v1443 = vpop.f32.mrf.mxu0
    %v1444 = vadd.f32 %v1415, %v1443
    %1445 = vdwg.mxu0
    %1446 = vmatpush.msra.mxu0 %v1306
    %1447 = vmatpush.msra.mxu0 %v1304
    %1448 = vmatpush.msra.mxu0 %v1302
    %1449 = vmatpush.msra.mxu0 %v1300
    %1450 = vmatpush.msra.mxu0 %v1298
    %1451 = vmatpush.msra.mxu0 %v1296
    %1452 = vmatpush.msra.mxu0 %v1294
    %1453 = vmatpush.msra.mxu0 %v1292
    %1454 = vmatpush.msra.mxu0 %v1290
    %1455 = vmatpush.msra.mxu0 %v1288
    %1456 = vmatpush.msra.mxu0 %v1286
    %1457 = vmatpush.msra.mxu0 %v1284
    %1458 = vmatpush.msra.mxu0 %v1282
    %1459 = vmatpush.msra.mxu0 %v1280
    %1460 = vmatpush.msra.mxu0 %v1278
    %1461 = vmatpush.msra.mxu0 %v1276
    %1462 = vmatmul.f32.gmra.mxu0 %v124
    %v1463 = vpop.f32.mrf.mxu0
    %v1464 = vadd.f32 0.0, %v1463
    %1465 = vmatmul.f32.gmra.mxu0 %v127
    %v1466 = vpop.f32.mrf.mxu0
    %v1467 = vadd.f32 0.0, %v1466
    %1468 = vmatmul.f32.gmra.mxu0 %v130
    %v1469 = vpop.f32.mrf.mxu0
    %v1470 = vadd.f32 0.0, %v1469
    %1471 = vmatmul.f32.gmra.mxu0 %v133
    %v1472 = vpop.f32.mrf.mxu0
    %v1473 = vadd.f32 0.0, %v1472
    %1474 = vdwg.mxu0
    %1475 = vmatpush.msra.mxu0 %v1338
    %1476 = vmatpush.msra.mxu0 %v1336
    %1477 = vmatpush.msra.mxu0 %v1334
    %1478 = vmatpush.msra.mxu0 %v1332
    %1479 = vmatpush.msra.mxu0 %v1330
    %1480 = vmatpush.msra.mxu0 %v1328
    %1481 = vmatpush.msra.mxu0 %v1326
    %1482 = vmatpush.msra.mxu0 %v1324
    %1483 = vmatpush.msra.mxu0 %v1322
    %1484 = vmatpush.msra.mxu0 %v1320
    %1485 = vmatpush.msra.mxu0 %v1318
    %1486 = vmatpush.msra.mxu0 %v1316
    %1487 = vmatpush.msra.mxu0 %v1314
    %1488 = vmatpush.msra.mxu0 %v1312
    %1489 = vmatpush.msra.mxu0 %v1310
    %1490 = vmatpush.msra.mxu0 %v1308
    %1491 = vmatmul.f32.gmra.mxu0 %v125
    %v1492 = vpop.f32.mrf.mxu0
    %v1493 = vadd.f32 %v1464, %v1492
    %1494 = vmatmul.f32.gmra.mxu0 %v128
    %v1495 = vpop.f32.mrf.mxu0
    %v1496 = vadd.f32 %v1467, %v1495
    %1497 = vmatmul.f32.gmra.mxu0 %v131
    %v1498 = vpop.f32.mrf.mxu0
    %v1499 = vadd.f32 %v1470, %v1498
    %1500 = vmatmul.f32.gmra.mxu0 %v134
    %v1501 = vpop.f32.mrf.mxu0
    %v1502 = vadd.f32 %v1473, %v1501
    %1503 = vdwg.mxu0
    %1504 = vmatpush.msra.mxu0 0.0
    %1505 = vmatpush.msra.mxu0 0.0
    %1506 = vmatpush.msra.mxu0 0.0
    %1507 = vmatpush.msra.mxu0 0.0
    %1508 = vmatpush.msra.mxu0 0.0
    %1509 = vmatpush.msra.mxu0 0.0
    %1510 = vmatpush.msra.mxu0 0.0
    %1511 = vmatpush.msra.mxu0 0.0
    %1512 = vmatpush.msra.mxu0 0.0
    %1513 = vmatpush.msra.mxu0 0.0
    %1514 = vmatpush.msra.mxu0 0.0
    %1515 = vmatpush.msra.mxu0 0.0
    %1516 = vmatpush.msra.mxu0 %v1346
    %1517 = vmatpush.msra.mxu0 %v1344
    %1518 = vmatpush.msra.mxu0 %v1342
    %1519 = vmatpush.msra.mxu0 %v1340
    %1520 = vmatmul.f32.gmra.mxu0 %v1348
    %v1521 = vpop.f32.mrf.mxu0
    %v1522 = vadd.f32 %v1493, %v1521
    %1523 = vmatmul.f32.gmra.mxu0 %v1351
    %v1524 = vpop.f32.mrf.mxu0
    %v1525 = vadd.f32 %v1496, %v1524
    %1526 = vmatmul.f32.gmra.mxu0 %v1354
    %v1527 = vpop.f32.mrf.mxu0
    %v1528 = vadd.f32 %v1499, %v1527
    %1529 = vmatmul.f32.gmra.mxu0 %v1357
    %v1530 = vpop.f32.mrf.mxu0
    %v1531 = vadd.f32 %v1502, %v1530
    %1532 = vdwg.mxu0
    %1533 = vset.pattern.permute.xlu0 2
    %1534 = vperm.xlu0 %1533, %v111
    %v1535 = vpop.permute.xlu0 %1534
    %1537 = vset.pattern.permute.xlu0 2
    %1538 = vperm.xlu0 %1537, %v112
    %v1539 = vpop.permute.xlu0 %1538
    %1541 = vset.pattern.permute.xlu0 2
    %1542 = vperm.xlu0 %1541, %v113
    %v1543 = vpop.permute.xlu0 %1542
    %1545 = vset.pattern.permute.xlu0 2
    %1546 = vperm.xlu0 %1545, %v114
    %v1547 = vpop.permute.xlu0 %1546
    %v1549 = vmul.f32 %v1435, %v1535
    %v1550 = vmul.f32 %v1522, %v1535
    %v1551 = vmul.f32 %v1438, %v1539
    %v1552 = vmul.f32 %v1525, %v1539
    %v1553 = vmul.f32 %v1441, %v1543
    %v1554 = vmul.f32 %v1528, %v1543
    %v1555 = vmul.f32 %v1444, %v1547
    %v1556 = vmul.f32 %v1531, %v1547
    %1557 = vset.pattern.permute.xlu0 3
    %1558 = vperm.xlu0 %1557, %v111
    %v1559 = vpop.permute.xlu0 %1558
    %1561 = vset.pattern.permute.xlu0 3
    %1562 = vperm.xlu0 %1561, %v112
    %v1563 = vpop.permute.xlu0 %1562
    %1565 = vset.pattern.permute.xlu0 3
    %1566 = vperm.xlu0 %1565, %v113
    %v1567 = vpop.permute.xlu0 %1566
    %1569 = vset.pattern.permute.xlu0 3
    %1570 = vperm.xlu0 %1569, %v114
    %v1571 = vpop.permute.xlu0 %1570
    %v1573 = vadd.f32 %v1549, %v1559
    %v1574 = vadd.f32 %v1550, %v1559
    %v1575 = vadd.f32 %v1551, %v1563
    %v1576 = vadd.f32 %v1552, %v1563
    %v1577 = vadd.f32 %v1553, %v1567
    %v1578 = vadd.f32 %v1554, %v1567
    %v1579 = vadd.f32 %v1555, %v1571
    %v1580 = vadd.f32 %v1556, %v1571
    %v1581 = vld [vmem:[#allocation7] sm:$0xff]
    %v1582 = vld [vmem:[#allocation7 + $0x8] sm:$0xff]
    %v1583 = vld [vmem:[#allocation7 + $0x10] sm:$0xff]
    %v1584 = vld [vmem:[#allocation7 + $0x18] sm:$0xff]
    %v1585 = vld [vmem:[#allocation7 + $0x20] sm:$0xff]
    %v1586 = vld [vmem:[#allocation7 + $0x28] sm:$0xff]
    %v1587 = vld [vmem:[#allocation7 + $0x30] sm:$0xff]
    %v1588 = vld [vmem:[#allocation7 + $0x38] sm:$0xff]
    %v1589 = vadd.f32 %v1573, %v1581
    %v1590 = vadd.f32 %v1574, %v1582
    %v1591 = vadd.f32 %v1575, %v1583
    %v1592 = vadd.f32 %v1576, %v1584
    %v1593 = vadd.f32 %v1577, %v1585
    %v1594 = vadd.f32 %v1578, %v1586
    %v1595 = vadd.f32 %v1579, %v1587
    %v1596 = vadd.f32 %v1580, %v1588
    %v1597 = vmax.f32 %v1589, 0.0
    %v1598 = vmax.f32 %v1590, 0.0
    %v1599 = vmax.f32 %v1591, 0.0
    %v1600 = vmax.f32 %v1592, 0.0
    %v1601 = vmax.f32 %v1593, 0.0
    %v1602 = vmax.f32 %v1594, 0.0
    %v1603 = vmax.f32 %v1595, 0.0
    %v1604 = vmax.f32 %v1596, 0.0
    %v1605 = vadd.f32 %v1597, %v1598
    %1606 = vadd.xlane.f32.xlu0 %v1605
    %v1607 = vpop.xlane.xlu0 %1606
    %v1608 = vadd.f32 %v1599, %v1600
    %1609 = vadd.xlane.f32.xlu0 %v1608
    %v1610 = vpop.xlane.xlu0 %1609
    %v1611 = vadd.f32 %v1601, %v1602
    %1612 = vadd.xlane.f32.xlu0 %v1611
    %v1613 = vpop.xlane.xlu0 %1612
    %v1614 = vadd.f32 %v1603, %v1604
    %1615 = vadd.xlane.f32.xlu0 %v1614
    %v1616 = vpop.xlane.xlu0 %1615
    %v1617 = vmul.f32 %v1607, 0.00390625
    %v1618 = vmul.f32 %v1610, 0.00390625
    %v1619 = vmul.f32 %v1613, 0.00390625
    %v1620 = vmul.f32 %v1616, 0.00390625
    %v1621 = vmul.f32 %v111, %v1617
    %v1622 = vmul.f32 %v112, %v1618
    %v1623 = vmul.f32 %v113, %v1619
    %v1624 = vmul.f32 %v114, %v1620
    %vm1625 = vcmask 56360
    %v1626 = vsel %vm1625, %v1621, 0.0
    %v1627 = vsel %vm1625, %v1622, 0.0
    %v1628 = vadd.f32 %v1626, %v1627
    %v1629 = vsel %vm1625, %v1623, 0.0
    %v1630 = vadd.f32 %v1628, %v1629
    %v1631 = vsel %vm1625, %v1624, 0.0
    %v1632 = vadd.f32 %v1630, %v1631
    %v1633 = vrot.slane %v1632, 4
    %v1634 = vadd.f32 %v1632, %v1633
    %v1635 = vrot.slane %v1634, 2
    %v1636 = vadd.f32 %v1634, %v1635
    %v1637 = vrot.slane %v1636, 1
    %v1638 = vadd.f32 %v1636, %v1637
    %v1640 = vperm.slane %v115, 0
    %1641 = vrot.lane.b32.xlu0 %v1640, 5
    %v1642 = vpop.permute.xlu0 %1641
    %v1644 = vadd.f32 %v1638, %v1642
    %v1645 = vmax.f32 %v1644, 0.0
    %v1646 = vperm.slane %v1645, 0
    %1648 = vrot.lane.b32.xlu0 %v1646, 2
    %v1649 = vpop.permute.xlu0 %1648
    %v1651 = vmul.f32 %v111, %v1649
    %v1652 = vmul.f32 %v112, %v1649
    %v1653 = vmul.f32 %v113, %v1649
    %v1654 = vmul.f32 %v114, %v1649
    %1659 = vrot.lane.b32.xlu0 %v1651, 121
    %v1660 = vpop.permute.xlu0 %1659
    %1661 = vrot.lane.b32.xlu0 %v1652, 121
    %v1662 = vpop.permute.xlu0 %1661
    %1663 = vrot.lane.b32.xlu0 %v1653, 121
    %v1664 = vpop.permute.xlu0 %1663
    %1665 = vrot.lane.b32.xlu0 %v1654, 121
    %v1666 = vpop.permute.xlu0 %1665
    %vm1671 = vcmask 15360
    %v1672 = vsel %vm1671, %v1660, 0.0
    %1673 = vadd.xlane.f32.xlu0 %v1672
    %v1674 = vpop.xlane.xlu0 %1673
    %v1675 = vsel %vm1671, %v1662, 0.0
    %1676 = vadd.xlane.f32.xlu0 %v1675
    %v1677 = vpop.xlane.xlu0 %1676
    %v1678 = vsel %vm1671, %v1664, 0.0
    %1679 = vadd.xlane.f32.xlu0 %v1678
    %v1680 = vpop.xlane.xlu0 %1679
    %v1681 = vsel %vm1671, %v1666, 0.0
    %1682 = vadd.xlane.f32.xlu0 %v1681
    %v1683 = vpop.xlane.xlu0 %1682
    %v1684 = vadd.f32 %v1674, %v111
    %v1685 = vadd.f32 %v1677, %v112
    %v1686 = vadd.f32 %v1680, %v113
    %v1687 = vadd.f32 %v1683, %v114
    %v1688 = vsub.f32 0.0, %v1684
    %v1689 = vsub.f32 0.0, %v1685
    %v1690 = vsub.f32 0.0, %v1686
    %v1691 = vsub.f32 0.0, %v1687
    %v1692 = vmul.f32 %v1688, 1.442695
    %v1693 = vpow.pop %v1692
    %v1694 = vmul.f32 %v1689, 1.442695
    %v1695 = vpow.pop %v1694
    %v1696 = vmul.f32 %v1690, 1.442695
    %v1697 = vpow.pop %v1696
    %v1698 = vmul.f32 %v1691, 1.442695
    %v1699 = vpow.pop %v1698
    %v1700 = vadd.f32 %v1693, 1.0
    %v1701 = vadd.f32 %v1695, 1.0
    %v1702 = vadd.f32 %v1697, 1.0
    %v1703 = vadd.f32 %v1699, 1.0
    %v1704 = vrcp.pop %v1700
    %v1705 = vmul.f32 %v1700, %v1704
    %v1706 = vsub.f32 1.0, %v1705
    %v1707 = vmul.f32 %v1704, %v1706
    %v1708 = vadd.f32 %v1704, %v1707
    %vm1709 = vweird.f32 %v1700
    %vm1710 = vweird.f32 %v1704
    %vm1711 = vmor %vm1709, %vm1710
    %v1712 = vsel %vm1711, %v1704, %v1708
    %v1713 = vand.u32 2147483647, %v1700
    %vm1714 = vcmp.eq.f32.partialorder %v1713, 8.507059e+37
    %v1715 = vand.u32 %v1700, 2147483648
    %v1716 = vor.u32 1.1754944e-38, %v1715
    %v1717 = vsel %vm1714, %v1716, %v1712
    %v1718 = vmul.f32 1.0, %v1717
    %v1719 = vrcp.pop %v1701
    %v1720 = vmul.f32 %v1701, %v1719
    %v1721 = vsub.f32 1.0, %v1720
    %v1722 = vmul.f32 %v1719, %v1721
    %v1723 = vadd.f32 %v1719, %v1722
    %vm1724 = vweird.f32 %v1701
    %vm1725 = vweird.f32 %v1719
    %vm1726 = vmor %vm1724, %vm1725
    %v1727 = vsel %vm1726, %v1719, %v1723
    %v1728 = vand.u32 2147483647, %v1701
    %vm1729 = vcmp.eq.f32.partialorder %v1728, 8.507059e+37
    %v1730 = vand.u32 %v1701, 2147483648
    %v1731 = vor.u32 1.1754944e-38, %v1730
    %v1732 = vsel %vm1729, %v1731, %v1727
    %v1733 = vmul.f32 1.0, %v1732
    %v1734 = vrcp.pop %v1702
    %v1735 = vmul.f32 %v1702, %v1734
    %v1736 = vsub.f32 1.0, %v1735
    %v1737 = vmul.f32 %v1734, %v1736
    %v1738 = vadd.f32 %v1734, %v1737
    %vm1739 = vweird.f32 %v1702
    %vm1740 = vweird.f32 %v1734
    %vm1741 = vmor %vm1739, %vm1740
    %v1742 = vsel %vm1741, %v1734, %v1738
    %v1743 = vand.u32 2147483647, %v1702
    %vm1744 = vcmp.eq.f32.partialorder %v1743, 8.507059e+37
    %v1745 = vand.u32 %v1702, 2147483648
    %v1746 = vor.u32 1.1754944e-38, %v1745
    %v1747 = vsel %vm1744, %v1746, %v1742
    %v1748 = vmul.f32 1.0, %v1747
    %v1749 = vrcp.pop %v1703
    %v1750 = vmul.f32 %v1703, %v1749
    %v1751 = vsub.f32 1.0, %v1750
    %v1752 = vmul.f32 %v1749, %v1751
    %v1753 = vadd.f32 %v1749, %v1752
    %vm1754 = vweird.f32 %v1703
    %vm1755 = vweird.f32 %v1749
    %vm1756 = vmor %vm1754, %vm1755
    %v1757 = vsel %vm1756, %v1749, %v1753
    %v1758 = vand.u32 2147483647, %v1703
    %vm1759 = vcmp.eq.f32.partialorder %v1758, 8.507059e+37
    %v1760 = vand.u32 %v1703, 2147483648
    %v1761 = vor.u32 1.1754944e-38, %v1760
    %v1762 = vsel %vm1759, %v1761, %v1757
    %v1763 = vmul.f32 1.0, %v1762
    %1765 = vset.pattern.permute.xlu0 4
    %1766 = vperm.xlu0 %1765, %v1718
    %v1767 = vpop.permute.xlu0 %1766
    %1770 = vset.pattern.permute.xlu0 4
    %1771 = vperm.xlu0 %1770, %v1733
    %v1772 = vpop.permute.xlu0 %1771
    %1775 = vset.pattern.permute.xlu0 4
    %1776 = vperm.xlu0 %1775, %v1748
    %v1777 = vpop.permute.xlu0 %1776
    %1780 = vset.pattern.permute.xlu0 4
    %1781 = vperm.xlu0 %1780, %v1763
    %v1782 = vpop.permute.xlu0 %1781
    %v1784 = vmul.f32 %v1597, %v1767
    %v1785 = vmul.f32 %v1598, %v1767
    %v1786 = vmul.f32 %v1599, %v1772
    %v1787 = vmul.f32 %v1600, %v1772
    %v1788 = vmul.f32 %v1601, %v1777
    %v1789 = vmul.f32 %v1602, %v1777
    %v1790 = vmul.f32 %v1603, %v1782
    %v1791 = vmul.f32 %v1604, %v1782
    %1792 = vst [vmem:[#allocation12] sm:$0xff] %v1784
    %1793 = vst [vmem:[#allocation12 + $0x8] sm:$0xff] %v1785
    %1794 = vst [vmem:[#allocation12 + $0x10] sm:$0xff] %v1786
    %1795 = vst [vmem:[#allocation12 + $0x18] sm:$0xff] %v1787
    %1796 = vst [vmem:[#allocation12 + $0x20] sm:$0xff] %v1788
    %1797 = vst [vmem:[#allocation12 + $0x28] sm:$0xff] %v1789
    %1798 = vst [vmem:[#allocation12 + $0x30] sm:$0xff] %v1790
    %1799 = vst [vmem:[#allocation12 + $0x38] sm:$0xff] %v1791
    %s1800 = scalar_lea.vmem [#allocation4], 288
    %v1801 = vld [vmem:[%s1800] sm:$0xff]
    %v1802 = vld [vmem:[%s1800 + $0x8] sm:$0xff]
    %v1803 = vld [vmem:[%s1800 + $0x10] sm:$0xff]
    %v1804 = vld [vmem:[%s1800 + $0x18] sm:$0xff]
    %v1805 = vld [vmem:[%s1800 + $0x20] sm:$0xff]
    %v1806 = vld [vmem:[%s1800 + $0x28] sm:$0xff]
    %v1807 = vld [vmem:[%s1800 + $0x30] sm:$0xff]
    %v1808 = vld [vmem:[%s1800 + $0x38] sm:$0xff]
    %v1809 = vld [vmem:[%s1800 + $0x40] sm:$0xff]
    %v1810 = vld [vmem:[%s1800 + $0x48] sm:$0xff]
    %v1811 = vld [vmem:[%s1800 + $0x50] sm:$0xff]
    %v1812 = vld [vmem:[%s1800 + $0x58] sm:$0xff]
    %v1813 = vld [vmem:[%s1800 + $0x60] sm:$0xff]
    %v1814 = vld [vmem:[%s1800 + $0x68] sm:$0xff]
    %v1815 = vld [vmem:[%s1800 + $0x70] sm:$0xff]
    %v1816 = vld [vmem:[%s1800 + $0x78] sm:$0xff]
    %v1817 = vld [vmem:[%s1800 + $0x80] sm:$0xff]
    %v1818 = vld [vmem:[%s1800 + $0x88] sm:$0xff]
    %v1819 = vld [vmem:[%s1800 + $0x90] sm:$0xff]
    %v1820 = vld [vmem:[%s1800 + $0x98] sm:$0xff]
    %v1821 = vld [vmem:[%s1800 + $0xa0] sm:$0xff]
    %v1822 = vld [vmem:[%s1800 + $0xa8] sm:$0xff]
    %v1823 = vld [vmem:[%s1800 + $0xb0] sm:$0xff]
    %v1824 = vld [vmem:[%s1800 + $0xb8] sm:$0xff]
    %v1825 = vld [vmem:[%s1800 + $0xc0] sm:$0xff]
    %v1826 = vld [vmem:[%s1800 + $0xc8] sm:$0xff]
    %v1827 = vld [vmem:[%s1800 + $0xd0] sm:$0xff]
    %v1828 = vld [vmem:[%s1800 + $0xd8] sm:$0xff]
    %v1829 = vld [vmem:[%s1800 + $0xe0] sm:$0xff]
    %v1830 = vld [vmem:[%s1800 + $0xe8] sm:$0xff]
    %v1831 = vld [vmem:[%s1800 + $0xf0] sm:$0xff]
    %v1832 = vld [vmem:[%s1800 + $0xf8] sm:$0xff]
    %v1833 = vld [vmem:[%s1800 + $0x100] sm:$0xff]
    %v1834 = vld [vmem:[%s1800 + $0x108] sm:$0xff]
    %v1835 = vld [vmem:[%s1800 + $0x110] sm:$0xff]
    %v1836 = vld [vmem:[%s1800 + $0x118] sm:$0xff]
    %v1873 = vunpack.c.l.b16 %v1801
    %v1874 = vunpack.c.h.b16 %v1801
    %v1875 = vunpack.c.l.b16 %v1802
    %v1876 = vunpack.c.h.b16 %v1802
    %v1877 = vunpack.c.l.b16 %v1803
    %v1878 = vunpack.c.h.b16 %v1803
    %v1879 = vunpack.c.l.b16 %v1804
    %v1880 = vunpack.c.h.b16 %v1804
    %v1881 = vunpack.c.l.b16 %v1805
    %v1882 = vunpack.c.h.b16 %v1805
    %v1883 = vunpack.c.l.b16 %v1806
    %v1884 = vunpack.c.h.b16 %v1806
    %v1885 = vunpack.c.l.b16 %v1807
    %v1886 = vunpack.c.h.b16 %v1807
    %v1887 = vunpack.c.l.b16 %v1808
    %v1888 = vunpack.c.h.b16 %v1808
    %v1889 = vunpack.c.l.b16 %v1809
    %v1890 = vunpack.c.h.b16 %v1809
    %v1891 = vunpack.c.l.b16 %v1810
    %v1892 = vunpack.c.h.b16 %v1810
    %v1893 = vunpack.c.l.b16 %v1811
    %v1894 = vunpack.c.h.b16 %v1811
    %v1895 = vunpack.c.l.b16 %v1812
    %v1896 = vunpack.c.h.b16 %v1812
    %v1897 = vunpack.c.l.b16 %v1813
    %v1898 = vunpack.c.h.b16 %v1813
    %v1899 = vunpack.c.l.b16 %v1814
    %v1900 = vunpack.c.h.b16 %v1814
    %v1901 = vunpack.c.l.b16 %v1815
    %v1902 = vunpack.c.h.b16 %v1815
    %v1903 = vunpack.c.l.b16 %v1816
    %v1904 = vunpack.c.h.b16 %v1816
    %v1905 = vunpack.c.l.b16 %v1817
    %v1906 = vunpack.c.h.b16 %v1817
    %v1907 = vunpack.c.l.b16 %v1818
    %v1908 = vunpack.c.h.b16 %v1818
    %v1909 = vunpack.c.l.b16 %v1819
    %v1910 = vunpack.c.h.b16 %v1819
    %v1911 = vunpack.c.l.b16 %v1820
    %v1912 = vunpack.c.h.b16 %v1820
    %v1913 = vunpack.c.l.b16 %v1821
    %v1914 = vunpack.c.h.b16 %v1821
    %v1915 = vunpack.c.l.b16 %v1822
    %v1916 = vunpack.c.h.b16 %v1822
    %v1917 = vunpack.c.l.b16 %v1823
    %v1918 = vunpack.c.h.b16 %v1823
    %v1919 = vunpack.c.l.b16 %v1824
    %v1920 = vunpack.c.h.b16 %v1824
    %v1921 = vunpack.c.l.b16 %v1825
    %v1922 = vunpack.c.h.b16 %v1825
    %v1923 = vunpack.c.l.b16 %v1826
    %v1924 = vunpack.c.h.b16 %v1826
    %v1925 = vunpack.c.l.b16 %v1827
    %v1926 = vunpack.c.h.b16 %v1827
    %v1927 = vunpack.c.l.b16 %v1828
    %v1928 = vunpack.c.h.b16 %v1828
    %v1929 = vunpack.c.l.b16 %v1829
    %v1930 = vunpack.c.h.b16 %v1829
    %v1931 = vunpack.c.l.b16 %v1830
    %v1932 = vunpack.c.h.b16 %v1830
    %v1933 = vunpack.c.l.b16 %v1831
    %v1934 = vunpack.c.h.b16 %v1831
    %v1935 = vunpack.c.l.b16 %v1832
    %v1936 = vunpack.c.h.b16 %v1832
    %v1937 = vunpack.c.l.b16 %v1833
    %v1938 = vunpack.c.h.b16 %v1833
    %v1939 = vunpack.c.l.b16 %v1834
    %v1940 = vunpack.c.h.b16 %v1834
    %v1941 = vunpack.c.l.b16 %v1835
    %v1942 = vunpack.c.h.b16 %v1835
    %v1943 = vunpack.c.l.b16 %v1836
    %v1944 = vunpack.c.h.b16 %v1836
    %v1945 = vpack.c.b16 %v1875, %v1873
    %v1946 = vpack.c.b16 %v1876, %v1874
    %v1947 = vpack.c.b16 %v1879, %v1877
    %v1948 = vpack.c.b16 %v1880, %v1878
    %v1949 = vpack.c.b16 %v1883, %v1881
    %v1950 = vpack.c.b16 %v1884, %v1882
    %v1951 = vpack.c.b16 %v1887, %v1885
    %v1952 = vpack.c.b16 %v1888, %v1886
    %v1953 = vpack.c.b16 %v1891, %v1889
    %v1954 = vpack.c.b16 %v1892, %v1890
    %v1955 = vpack.c.b16 %v1895, %v1893
    %v1956 = vpack.c.b16 %v1896, %v1894
    %v1957 = vpack.c.b16 %v1899, %v1897
    %v1958 = vpack.c.b16 %v1900, %v1898
    %v1959 = vpack.c.b16 %v1903, %v1901
    %v1960 = vpack.c.b16 %v1904, %v1902
    %v1961 = vpack.c.b16 %v1907, %v1905
    %v1962 = vpack.c.b16 %v1908, %v1906
    %v1963 = vpack.c.b16 %v1911, %v1909
    %v1964 = vpack.c.b16 %v1912, %v1910
    %v1965 = vpack.c.b16 %v1915, %v1913
    %v1966 = vpack.c.b16 %v1916, %v1914
    %v1967 = vpack.c.b16 %v1919, %v1917
    %v1968 = vpack.c.b16 %v1920, %v1918
    %v1969 = vpack.c.b16 %v1923, %v1921
    %v1970 = vpack.c.b16 %v1924, %v1922
    %v1971 = vpack.c.b16 %v1927, %v1925
    %v1972 = vpack.c.b16 %v1928, %v1926
    %v1973 = vpack.c.b16 %v1931, %v1929
    %v1974 = vpack.c.b16 %v1932, %v1930
    %v1975 = vpack.c.b16 %v1935, %v1933
    %v1976 = vpack.c.b16 %v1936, %v1934
    %v1977 = vpack.c.b16 %v1939, %v1937
    %v1978 = vpack.c.b16 %v1940, %v1938
    %v1979 = vpack.c.b16 %v1943, %v1941
    %v1980 = vpack.c.b16 %v1944, %v1942
    %2017 = vmatpush.bf16.msra.mxu0 %v1959
    %2018 = vmatpush.bf16.msra.mxu0 %v1957
    %2019 = vmatpush.bf16.msra.mxu0 %v1955
    %2020 = vmatpush.bf16.msra.mxu0 %v1953
    %2021 = vmatpush.bf16.msra.mxu0 %v1951
    %2022 = vmatpush.bf16.msra.mxu0 %v1949
    %2023 = vmatpush.bf16.msra.mxu0 %v1947
    %2024 = vmatpush.bf16.msra.mxu0 %v1945
    %2025 = vmatmul.bf16.gmra.mxu0 %v200
    %v2026 = vpop.f32.mrf.mxu0
    %v2027 = vadd.f32 0.0, %v2026
    %v2028 = vpop.f32.mrf.mxu0
    %v2029 = vadd.f32 0.0, %v2028
    %2030 = vmatmul.bf16.gmra.mxu0 %v203
    %v2031 = vpop.f32.mrf.mxu0
    %v2032 = vadd.f32 0.0, %v2031
    %v2033 = vpop.f32.mrf.mxu0
    %v2034 = vadd.f32 0.0, %v2033
    %2035 = vdwg.mxu0
    %2036 = vmatpush.bf16.msra.mxu0 %v1975
    %2037 = vmatpush.bf16.msra.mxu0 %v1973
    %2038 = vmatpush.bf16.msra.mxu0 %v1971
    %2039 = vmatpush.bf16.msra.mxu0 %v1969
    %2040 = vmatpush.bf16.msra.mxu0 %v1967
    %2041 = vmatpush.bf16.msra.mxu0 %v1965
    %2042 = vmatpush.bf16.msra.mxu0 %v1963
    %2043 = vmatpush.bf16.msra.mxu0 %v1961
    %2044 = vmatmul.bf16.gmra.mxu0 %v201
    %v2045 = vpop.f32.mrf.mxu0
    %v2046 = vadd.f32 %v2027, %v2045
    %v2047 = vpop.f32.mrf.mxu0
    %v2048 = vadd.f32 %v2029, %v2047
    %2049 = vmatmul.bf16.gmra.mxu0 %v204
    %v2050 = vpop.f32.mrf.mxu0
    %v2051 = vadd.f32 %v2032, %v2050
    %v2052 = vpop.f32.mrf.mxu0
    %v2053 = vadd.f32 %v2034, %v2052
    %2054 = vdwg.mxu0
    %2055 = vmatpush.bf16.msra.mxu0 0
    %2056 = vmatpush.bf16.msra.mxu0 0
    %2057 = vmatpush.bf16.msra.mxu0 0
    %2058 = vmatpush.bf16.msra.mxu0 0
    %2059 = vmatpush.bf16.msra.mxu0 0
    %2060 = vmatpush.bf16.msra.mxu0 0
    %2061 = vmatpush.bf16.msra.mxu0 %v1979
    %2062 = vmatpush.bf16.msra.mxu0 %v1977
    %2063 = vmatmul.bf16.gmra.mxu0 %v392
    %v2064 = vpop.f32.mrf.mxu0
    %v2065 = vadd.f32 %v2046, %v2064
    %v2066 = vpop.f32.mrf.mxu0
    %v2067 = vadd.f32 %v2048, %v2066
    %2068 = vmatmul.bf16.gmra.mxu0 %v395
    %v2069 = vpop.f32.mrf.mxu0
    %v2070 = vadd.f32 %v2051, %v2069
    %v2071 = vpop.f32.mrf.mxu0
    %v2072 = vadd.f32 %v2053, %v2071
    %2073 = vdwg.mxu0
    %2074 = vmatpush.bf16.msra.mxu0 %v1960
    %2075 = vmatpush.bf16.msra.mxu0 %v1958
    %2076 = vmatpush.bf16.msra.mxu0 %v1956
    %2077 = vmatpush.bf16.msra.mxu0 %v1954
    %2078 = vmatpush.bf16.msra.mxu0 %v1952
    %2079 = vmatpush.bf16.msra.mxu0 %v1950
    %2080 = vmatpush.bf16.msra.mxu0 %v1948
    %2081 = vmatpush.bf16.msra.mxu0 %v1946
    %2082 = vmatmul.bf16.gmra.mxu0 %v200
    %v2083 = vpop.f32.mrf.mxu0
    %v2084 = vadd.f32 0.0, %v2083
    %v2085 = vpop.f32.mrf.mxu0
    %v2086 = vadd.f32 0.0, %v2085
    %2087 = vmatmul.bf16.gmra.mxu0 %v203
    %v2088 = vpop.f32.mrf.mxu0
    %v2089 = vadd.f32 0.0, %v2088
    %v2090 = vpop.f32.mrf.mxu0
    %v2091 = vadd.f32 0.0, %v2090
    %2092 = vdwg.mxu0
    %2093 = vmatpush.bf16.msra.mxu0 %v1976
    %2094 = vmatpush.bf16.msra.mxu0 %v1974
    %2095 = vmatpush.bf16.msra.mxu0 %v1972
    %2096 = vmatpush.bf16.msra.mxu0 %v1970
    %2097 = vmatpush.bf16.msra.mxu0 %v1968
    %2098 = vmatpush.bf16.msra.mxu0 %v1966
    %2099 = vmatpush.bf16.msra.mxu0 %v1964
    %2100 = vmatpush.bf16.msra.mxu0 %v1962
    %2101 = vmatmul.bf16.gmra.mxu0 %v201
    %v2102 = vpop.f32.mrf.mxu0
    %v2103 = vadd.f32 %v2084, %v2102
    %v2104 = vpop.f32.mrf.mxu0
    %v2105 = vadd.f32 %v2086, %v2104
    %2106 = vmatmul.bf16.gmra.mxu0 %v204
    %v2107 = vpop.f32.mrf.mxu0
    %v2108 = vadd.f32 %v2089, %v2107
    %v2109 = vpop.f32.mrf.mxu0
    %v2110 = vadd.f32 %v2091, %v2109
    %2111 = vdwg.mxu0
    %2112 = vmatpush.bf16.msra.mxu0 0
    %2113 = vmatpush.bf16.msra.mxu0 0
    %2114 = vmatpush.bf16.msra.mxu0 0
    %2115 = vmatpush.bf16.msra.mxu0 0
    %2116 = vmatpush.bf16.msra.mxu0 0
    %2117 = vmatpush.bf16.msra.mxu0 0
    %2118 = vmatpush.bf16.msra.mxu0 %v1980
    %2119 = vmatpush.bf16.msra.mxu0 %v1978
    %2120 = vmatmul.bf16.gmra.mxu0 %v392
    %v2121 = vpop.f32.mrf.mxu0
    %v2122 = vadd.f32 %v2103, %v2121
    %v2123 = vpop.f32.mrf.mxu0
    %v2124 = vadd.f32 %v2105, %v2123
    %2125 = vmatmul.bf16.gmra.mxu0 %v395
    %v2126 = vpop.f32.mrf.mxu0
    %v2127 = vadd.f32 %v2108, %v2126
    %v2128 = vpop.f32.mrf.mxu0
    %v2129 = vadd.f32 %v2110, %v2128
    %2130 = vdwg.mxu0
    %v2131 = vmul.f32 %v2065, %v514
    %v2132 = vmul.f32 %v2122, %v514
    %v2133 = vmul.f32 %v2067, %v519
    %v2134 = vmul.f32 %v2124, %v519
    %v2135 = vmul.f32 %v2070, %v524
    %v2136 = vmul.f32 %v2127, %v524
    %v2137 = vmul.f32 %v2072, %v529
    %v2138 = vmul.f32 %v2129, %v529
    %v2139 = vadd.f32 %v2131, %v541
    %v2140 = vadd.f32 %v2132, %v541
    %v2141 = vadd.f32 %v2133, %v545
    %v2142 = vadd.f32 %v2134, %v545
    %v2143 = vadd.f32 %v2135, %v549
    %v2144 = vadd.f32 %v2136, %v549
    %v2145 = vadd.f32 %v2137, %v553
    %v2146 = vadd.f32 %v2138, %v553
    %v2147 = vmax.f32 %v2139, 0.0
    %v2148 = vmax.f32 %v2140, 0.0
    %v2149 = vmax.f32 %v2141, 0.0
    %v2150 = vmax.f32 %v2142, 0.0
    %v2151 = vmax.f32 %v2143, 0.0
    %v2152 = vmax.f32 %v2144, 0.0
    %v2153 = vmax.f32 %v2145, 0.0
    %v2154 = vmax.f32 %v2146, 0.0
    %2155 = vst [vmem:[#allocation2 + $0x8] sm:$0xff] %v2147
    %2156 = vst [vmem:[#allocation2 + $0x10] sm:$0xff] %v2148
    %2157 = vst [vmem:[#allocation2 + $0x28] sm:$0xff] %v2149
    %2158 = vst [vmem:[#allocation2 + $0x30] sm:$0xff] %v2150
    %2159 = vst [vmem:[#allocation2 + $0x48] sm:$0xff] %v2151
    %2160 = vst [vmem:[#allocation2 + $0x50] sm:$0xff] %v2152
    %2161 = vst [vmem:[#allocation2 + $0x68] sm:$0xff] %v2153
    %2162 = vst [vmem:[#allocation2 + $0x70] sm:$0xff] %v2154
    %v2163 = vld [vmem:[#allocation2] sm:$0xff]
    %v2164 = vld [vmem:[#allocation2 + $0x8] sm:$0xff]
    %v2165 = vld [vmem:[#allocation2 + $0x10] sm:$0xff]
    %v2166 = vld [vmem:[#allocation2 + $0x18] sm:$0xff]
    %v2167 = vld [vmem:[#allocation2 + $0x20] sm:$0xff]
    %v2168 = vld [vmem:[#allocation2 + $0x28] sm:$0xff]
    %v2169 = vld [vmem:[#allocation2 + $0x30] sm:$0xff]
    %v2170 = vld [vmem:[#allocation2 + $0x38] sm:$0xff]
    %v2171 = vld [vmem:[#allocation2 + $0x40] sm:$0xff]
    %v2172 = vld [vmem:[#allocation2 + $0x48] sm:$0xff]
    %v2173 = vld [vmem:[#allocation2 + $0x50] sm:$0xff]
    %v2174 = vld [vmem:[#allocation2 + $0x58] sm:$0xff]
    %v2175 = vld [vmem:[#allocation2 + $0x60] sm:$0xff]
    %v2176 = vld [vmem:[#allocation2 + $0x68] sm:$0xff]
    %v2177 = vld [vmem:[#allocation2 + $0x70] sm:$0xff]
    %v2178 = vld [vmem:[#allocation2 + $0x78] sm:$0xff]
    %v2179 = vmul.f32 %v2163, %v599
    %v2180 = vmul.f32 %v2164, %v603
    %v2181 = vmul.f32 %v2165, %v601
    %v2182 = vmul.f32 %v2167, %v599
    %v2183 = vmul.f32 %v2168, %v603
    %v2184 = vmul.f32 %v2169, %v601
    %v2185 = vmul.f32 %v2171, %v599
    %v2186 = vmul.f32 %v2172, %v603
    %v2187 = vmul.f32 %v2173, %v601
    %v2188 = vmul.f32 %v2175, %v599
    %v2189 = vmul.f32 %v2176, %v603
    %v2190 = vmul.f32 %v2177, %v601
    %2203 = vrot.lane.b32.xlu0 %v2179, 17
    %v2204 = vpop.permute.xlu0 %2203
    %2205 = vrot.lane.b32.xlu0 %v2180, 17
    %v2206 = vpop.permute.xlu0 %2205
    %2207 = vrot.lane.b32.xlu0 %v2181, 17
    %v2208 = vpop.permute.xlu0 %2207
    %2209 = vrot.lane.b32.xlu0 %v2182, 17
    %v2210 = vpop.permute.xlu0 %2209
    %2211 = vrot.lane.b32.xlu0 %v2183, 17
    %v2212 = vpop.permute.xlu0 %2211
    %2213 = vrot.lane.b32.xlu0 %v2184, 17
    %v2214 = vpop.permute.xlu0 %2213
    %2215 = vrot.lane.b32.xlu0 %v2185, 17
    %v2216 = vpop.permute.xlu0 %2215
    %2217 = vrot.lane.b32.xlu0 %v2186, 17
    %v2218 = vpop.permute.xlu0 %2217
    %2219 = vrot.lane.b32.xlu0 %v2187, 17
    %v2220 = vpop.permute.xlu0 %2219
    %2221 = vrot.lane.b32.xlu0 %v2188, 17
    %v2222 = vpop.permute.xlu0 %2221
    %2223 = vrot.lane.b32.xlu0 %v2189, 17
    %v2224 = vpop.permute.xlu0 %2223
    %2225 = vrot.lane.b32.xlu0 %v2190, 17
    %v2226 = vpop.permute.xlu0 %2225
    %v2227 = vsel %vm655, %v2204, %v2206
    %v2228 = vsel %vm655, %v2206, %v2208
    %v2229 = vsel %vm655, %v2210, %v2212
    %v2230 = vsel %vm655, %v2212, %v2214
    %v2231 = vsel %vm655, %v2216, %v2218
    %v2232 = vsel %vm655, %v2218, %v2220
    %v2233 = vsel %vm655, %v2222, %v2224
    %v2234 = vsel %vm655, %v2224, %v2226
    %2243 = vst [vmem:[#allocation3] sm:$0xff] %v2227
    %2244 = vst [vmem:[#allocation3 + $0x8] sm:$0xff] %v2228
    %2245 = vst [vmem:[#allocation3 + $0x10] sm:$0xff] %v2229
    %2246 = vst [vmem:[#allocation3 + $0x18] sm:$0xff] %v2230
    %2247 = vst [vmem:[#allocation3 + $0x20] sm:$0xff] %v2231
    %2248 = vst [vmem:[#allocation3 + $0x28] sm:$0xff] %v2232
    %2249 = vst [vmem:[#allocation3 + $0x30] sm:$0xff] %v2233
    %2250 = vst [vmem:[#allocation3 + $0x38] sm:$0xff] %v2234
    %v2251 = vmul.f32 %v2163, %v684
    %v2252 = vmul.f32 %v2164, %v688
    %v2253 = vmul.f32 %v2165, %v686
    %v2254 = vmul.f32 %v2167, %v684
    %v2255 = vmul.f32 %v2168, %v688
    %v2256 = vmul.f32 %v2169, %v686
    %v2257 = vmul.f32 %v2171, %v684
    %v2258 = vmul.f32 %v2172, %v688
    %v2259 = vmul.f32 %v2173, %v686
    %v2260 = vmul.f32 %v2175, %v684
    %v2261 = vmul.f32 %v2176, %v688
    %v2262 = vmul.f32 %v2177, %v686
    %2275 = vrot.lane.b32.xlu0 %v2251, 16
    %v2276 = vpop.permute.xlu0 %2275
    %2277 = vrot.lane.b32.xlu0 %v2252, 16
    %v2278 = vpop.permute.xlu0 %2277
    %2279 = vrot.lane.b32.xlu0 %v2253, 16
    %v2280 = vpop.permute.xlu0 %2279
    %2281 = vrot.lane.b32.xlu0 %v2254, 16
    %v2282 = vpop.permute.xlu0 %2281
    %2283 = vrot.lane.b32.xlu0 %v2255, 16
    %v2284 = vpop.permute.xlu0 %2283
    %2285 = vrot.lane.b32.xlu0 %v2256, 16
    %v2286 = vpop.permute.xlu0 %2285
    %2287 = vrot.lane.b32.xlu0 %v2257, 16
    %v2288 = vpop.permute.xlu0 %2287
    %2289 = vrot.lane.b32.xlu0 %v2258, 16
    %v2290 = vpop.permute.xlu0 %2289
    %2291 = vrot.lane.b32.xlu0 %v2259, 16
    %v2292 = vpop.permute.xlu0 %2291
    %2293 = vrot.lane.b32.xlu0 %v2260, 16
    %v2294 = vpop.permute.xlu0 %2293
    %2295 = vrot.lane.b32.xlu0 %v2261, 16
    %v2296 = vpop.permute.xlu0 %2295
    %2297 = vrot.lane.b32.xlu0 %v2262, 16
    %v2298 = vpop.permute.xlu0 %2297
    %v2299 = vsel %vm740, %v2276, %v2278
    %v2300 = vsel %vm740, %v2278, %v2280
    %v2301 = vsel %vm740, %v2282, %v2284
    %v2302 = vsel %vm740, %v2284, %v2286
    %v2303 = vsel %vm740, %v2288, %v2290
    %v2304 = vsel %vm740, %v2290, %v2292
    %v2305 = vsel %vm740, %v2294, %v2296
    %v2306 = vsel %vm740, %v2296, %v2298
    %2315 = vst [vmem:[#allocation3 + $0x40] sm:$0xff] %v2299
    %2316 = vst [vmem:[#allocation3 + $0x48] sm:$0xff] %v2300
    %2317 = vst [vmem:[#allocation3 + $0x50] sm:$0xff] %v2301
    %2318 = vst [vmem:[#allocation3 + $0x58] sm:$0xff] %v2302
    %2319 = vst [vmem:[#allocation3 + $0x60] sm:$0xff] %v2303
    %2320 = vst [vmem:[#allocation3 + $0x68] sm:$0xff] %v2304
    %2321 = vst [vmem:[#allocation3 + $0x70] sm:$0xff] %v2305
    %2322 = vst [vmem:[#allocation3 + $0x78] sm:$0xff] %v2306
    %v2323 = vmul.f32 %v2163, %v769
    %v2324 = vmul.f32 %v2164, %v773
    %v2325 = vmul.f32 %v2165, %v771
    %v2326 = vmul.f32 %v2167, %v769
    %v2327 = vmul.f32 %v2168, %v773
    %v2328 = vmul.f32 %v2169, %v771
    %v2329 = vmul.f32 %v2171, %v769
    %v2330 = vmul.f32 %v2172, %v773
    %v2331 = vmul.f32 %v2173, %v771
    %v2332 = vmul.f32 %v2175, %v769
    %v2333 = vmul.f32 %v2176, %v773
    %v2334 = vmul.f32 %v2177, %v771
    %2347 = vrot.lane.b32.xlu0 %v2323, 15
    %v2348 = vpop.permute.xlu0 %2347
    %2349 = vrot.lane.b32.xlu0 %v2324, 15
    %v2350 = vpop.permute.xlu0 %2349
    %2351 = vrot.lane.b32.xlu0 %v2325, 15
    %v2352 = vpop.permute.xlu0 %2351
    %2353 = vrot.lane.b32.xlu0 %v2326, 15
    %v2354 = vpop.permute.xlu0 %2353
    %2355 = vrot.lane.b32.xlu0 %v2327, 15
    %v2356 = vpop.permute.xlu0 %2355
    %2357 = vrot.lane.b32.xlu0 %v2328, 15
    %v2358 = vpop.permute.xlu0 %2357
    %2359 = vrot.lane.b32.xlu0 %v2329, 15
    %v2360 = vpop.permute.xlu0 %2359
    %2361 = vrot.lane.b32.xlu0 %v2330, 15
    %v2362 = vpop.permute.xlu0 %2361
    %2363 = vrot.lane.b32.xlu0 %v2331, 15
    %v2364 = vpop.permute.xlu0 %2363
    %2365 = vrot.lane.b32.xlu0 %v2332, 15
    %v2366 = vpop.permute.xlu0 %2365
    %2367 = vrot.lane.b32.xlu0 %v2333, 15
    %v2368 = vpop.permute.xlu0 %2367
    %2369 = vrot.lane.b32.xlu0 %v2334, 15
    %v2370 = vpop.permute.xlu0 %2369
    %v2371 = vsel %vm825, %v2348, %v2350
    %v2372 = vsel %vm825, %v2350, %v2352
    %v2373 = vsel %vm825, %v2354, %v2356
    %v2374 = vsel %vm825, %v2356, %v2358
    %v2375 = vsel %vm825, %v2360, %v2362
    %v2376 = vsel %vm825, %v2362, %v2364
    %v2377 = vsel %vm825, %v2366, %v2368
    %v2378 = vsel %vm825, %v2368, %v2370
    %2387 = vst [vmem:[#allocation3 + $0x80] sm:$0xff] %v2371
    %2388 = vst [vmem:[#allocation3 + $0x88] sm:$0xff] %v2372
    %2389 = vst [vmem:[#allocation3 + $0x90] sm:$0xff] %v2373
    %2390 = vst [vmem:[#allocation3 + $0x98] sm:$0xff] %v2374
    %2391 = vst [vmem:[#allocation3 + $0xa0] sm:$0xff] %v2375
    %2392 = vst [vmem:[#allocation3 + $0xa8] sm:$0xff] %v2376
    %2393 = vst [vmem:[#allocation3 + $0xb0] sm:$0xff] %v2377
    %2394 = vst [vmem:[#allocation3 + $0xb8] sm:$0xff] %v2378
    %v2395 = vmul.f32 %v2163, %v854
    %v2396 = vmul.f32 %v2164, %v858
    %v2397 = vmul.f32 %v2165, %v856
    %v2398 = vmul.f32 %v2167, %v854
    %v2399 = vmul.f32 %v2168, %v858
    %v2400 = vmul.f32 %v2169, %v856
    %v2401 = vmul.f32 %v2171, %v854
    %v2402 = vmul.f32 %v2172, %v858
    %v2403 = vmul.f32 %v2173, %v856
    %v2404 = vmul.f32 %v2175, %v854
    %v2405 = vmul.f32 %v2176, %v858
    %v2406 = vmul.f32 %v2177, %v856
    %2419 = vrot.lane.b32.xlu0 %v2395, 1
    %v2420 = vpop.permute.xlu0 %2419
    %2421 = vrot.lane.b32.xlu0 %v2396, 1
    %v2422 = vpop.permute.xlu0 %2421
    %2423 = vrot.lane.b32.xlu0 %v2397, 1
    %v2424 = vpop.permute.xlu0 %2423
    %2425 = vrot.lane.b32.xlu0 %v2398, 1
    %v2426 = vpop.permute.xlu0 %2425
    %2427 = vrot.lane.b32.xlu0 %v2399, 1
    %v2428 = vpop.permute.xlu0 %2427
    %2429 = vrot.lane.b32.xlu0 %v2400, 1
    %v2430 = vpop.permute.xlu0 %2429
    %2431 = vrot.lane.b32.xlu0 %v2401, 1
    %v2432 = vpop.permute.xlu0 %2431
    %2433 = vrot.lane.b32.xlu0 %v2402, 1
    %v2434 = vpop.permute.xlu0 %2433
    %2435 = vrot.lane.b32.xlu0 %v2403, 1
    %v2436 = vpop.permute.xlu0 %2435
    %2437 = vrot.lane.b32.xlu0 %v2404, 1
    %v2438 = vpop.permute.xlu0 %2437
    %2439 = vrot.lane.b32.xlu0 %v2405, 1
    %v2440 = vpop.permute.xlu0 %2439
    %2441 = vrot.lane.b32.xlu0 %v2406, 1
    %v2442 = vpop.permute.xlu0 %2441
    %v2443 = vsel %vm910, %v2420, %v2422
    %v2444 = vsel %vm910, %v2422, %v2424
    %v2445 = vsel %vm910, %v2426, %v2428
    %v2446 = vsel %vm910, %v2428, %v2430
    %v2447 = vsel %vm910, %v2432, %v2434
    %v2448 = vsel %vm910, %v2434, %v2436
    %v2449 = vsel %vm910, %v2438, %v2440
    %v2450 = vsel %vm910, %v2440, %v2442
    %2459 = vst [vmem:[#allocation3 + $0xc0] sm:$0xff] %v2443
    %2460 = vst [vmem:[#allocation3 + $0xc8] sm:$0xff] %v2444
    %2461 = vst [vmem:[#allocation3 + $0xd0] sm:$0xff] %v2445
    %2462 = vst [vmem:[#allocation3 + $0xd8] sm:$0xff] %v2446
    %2463 = vst [vmem:[#allocation3 + $0xe0] sm:$0xff] %v2447
    %2464 = vst [vmem:[#allocation3 + $0xe8] sm:$0xff] %v2448
    %2465 = vst [vmem:[#allocation3 + $0xf0] sm:$0xff] %v2449
    %2466 = vst [vmem:[#allocation3 + $0xf8] sm:$0xff] %v2450
    %2467 = vst [vmem:[#allocation3 + $0x100] sm:$0xff] %v2164
    %2468 = vst [vmem:[#allocation3 + $0x108] sm:$0xff] %v2165
    %2469 = vst [vmem:[#allocation3 + $0x110] sm:$0xff] %v2168
    %2470 = vst [vmem:[#allocation3 + $0x118] sm:$0xff] %v2169
    %2471 = vst [vmem:[#allocation3 + $0x120] sm:$0xff] %v2172
    %2472 = vst [vmem:[#allocation3 + $0x128] sm:$0xff] %v2173
    %2473 = vst [vmem:[#allocation3 + $0x130] sm:$0xff] %v2176
    %2474 = vst [vmem:[#allocation3 + $0x138] sm:$0xff] %v2177
    %v2475 = vmul.f32 %v2164, %v947
    %v2476 = vmul.f32 %v2165, %v950
    %v2477 = vmul.f32 %v2166, %v949
    %v2478 = vmul.f32 %v2168, %v947
    %v2479 = vmul.f32 %v2169, %v950
    %v2480 = vmul.f32 %v2170, %v949
    %v2481 = vmul.f32 %v2172, %v947
    %v2482 = vmul.f32 %v2173, %v950
    %v2483 = vmul.f32 %v2174, %v949
    %v2484 = vmul.f32 %v2176, %v947
    %v2485 = vmul.f32 %v2177, %v950
    %v2486 = vmul.f32 %v2178, %v949
    %2499 = vrot.lane.b32.xlu0 %v2475, 127
    %v2500 = vpop.permute.xlu0 %2499
    %2501 = vrot.lane.b32.xlu0 %v2476, 127
    %v2502 = vpop.permute.xlu0 %2501
    %2503 = vrot.lane.b32.xlu0 %v2477, 127
    %v2504 = vpop.permute.xlu0 %2503
    %2505 = vrot.lane.b32.xlu0 %v2478, 127
    %v2506 = vpop.permute.xlu0 %2505
    %2507 = vrot.lane.b32.xlu0 %v2479, 127
    %v2508 = vpop.permute.xlu0 %2507
    %2509 = vrot.lane.b32.xlu0 %v2480, 127
    %v2510 = vpop.permute.xlu0 %2509
    %2511 = vrot.lane.b32.xlu0 %v2481, 127
    %v2512 = vpop.permute.xlu0 %2511
    %2513 = vrot.lane.b32.xlu0 %v2482, 127
    %v2514 = vpop.permute.xlu0 %2513
    %2515 = vrot.lane.b32.xlu0 %v2483, 127
    %v2516 = vpop.permute.xlu0 %2515
    %2517 = vrot.lane.b32.xlu0 %v2484, 127
    %v2518 = vpop.permute.xlu0 %2517
    %2519 = vrot.lane.b32.xlu0 %v2485, 127
    %v2520 = vpop.permute.xlu0 %2519
    %2521 = vrot.lane.b32.xlu0 %v2486, 127
    %v2522 = vpop.permute.xlu0 %2521
    %v2523 = vsel %vm857, %v2500, %v2502
    %v2524 = vsel %vm857, %v2502, %v2504
    %v2525 = vsel %vm857, %v2506, %v2508
    %v2526 = vsel %vm857, %v2508, %v2510
    %v2527 = vsel %vm857, %v2512, %v2514
    %v2528 = vsel %vm857, %v2514, %v2516
    %v2529 = vsel %vm857, %v2518, %v2520
    %v2530 = vsel %vm857, %v2520, %v2522
    %2539 = vst [vmem:[#allocation3 + $0x140] sm:$0xff] %v2523
    %2540 = vst [vmem:[#allocation3 + $0x148] sm:$0xff] %v2524
    %2541 = vst [vmem:[#allocation3 + $0x150] sm:$0xff] %v2525
    %2542 = vst [vmem:[#allocation3 + $0x158] sm:$0xff] %v2526
    %2543 = vst [vmem:[#allocation3 + $0x160] sm:$0xff] %v2527
    %2544 = vst [vmem:[#allocation3 + $0x168] sm:$0xff] %v2528
    %2545 = vst [vmem:[#allocation3 + $0x170] sm:$0xff] %v2529
    %2546 = vst [vmem:[#allocation3 + $0x178] sm:$0xff] %v2530
    %v2547 = vmul.f32 %v2164, %v1030
    %v2548 = vmul.f32 %v2165, %v1033
    %v2549 = vmul.f32 %v2166, %v1032
    %v2550 = vmul.f32 %v2168, %v1030
    %v2551 = vmul.f32 %v2169, %v1033
    %v2552 = vmul.f32 %v2170, %v1032
    %v2553 = vmul.f32 %v2172, %v1030
    %v2554 = vmul.f32 %v2173, %v1033
    %v2555 = vmul.f32 %v2174, %v1032
    %v2556 = vmul.f32 %v2176, %v1030
    %v2557 = vmul.f32 %v2177, %v1033
    %v2558 = vmul.f32 %v2178, %v1032
    %2571 = vrot.lane.b32.xlu0 %v2547, 113
    %v2572 = vpop.permute.xlu0 %2571
    %2573 = vrot.lane.b32.xlu0 %v2548, 113
    %v2574 = vpop.permute.xlu0 %2573
    %2575 = vrot.lane.b32.xlu0 %v2549, 113
    %v2576 = vpop.permute.xlu0 %2575
    %2577 = vrot.lane.b32.xlu0 %v2550, 113
    %v2578 = vpop.permute.xlu0 %2577
    %2579 = vrot.lane.b32.xlu0 %v2551, 113
    %v2580 = vpop.permute.xlu0 %2579
    %2581 = vrot.lane.b32.xlu0 %v2552, 113
    %v2582 = vpop.permute.xlu0 %2581
    %2583 = vrot.lane.b32.xlu0 %v2553, 113
    %v2584 = vpop.permute.xlu0 %2583
    %2585 = vrot.lane.b32.xlu0 %v2554, 113
    %v2586 = vpop.permute.xlu0 %2585
    %2587 = vrot.lane.b32.xlu0 %v2555, 113
    %v2588 = vpop.permute.xlu0 %2587
    %2589 = vrot.lane.b32.xlu0 %v2556, 113
    %v2590 = vpop.permute.xlu0 %2589
    %2591 = vrot.lane.b32.xlu0 %v2557, 113
    %v2592 = vpop.permute.xlu0 %2591
    %2593 = vrot.lane.b32.xlu0 %v2558, 113
    %v2594 = vpop.permute.xlu0 %2593
    %v2595 = vsel %vm772, %v2572, %v2574
    %v2596 = vsel %vm772, %v2574, %v2576
    %v2597 = vsel %vm772, %v2578, %v2580
    %v2598 = vsel %vm772, %v2580, %v2582
    %v2599 = vsel %vm772, %v2584, %v2586
    %v2600 = vsel %vm772, %v2586, %v2588
    %v2601 = vsel %vm772, %v2590, %v2592
    %v2602 = vsel %vm772, %v2592, %v2594
    %2611 = vst [vmem:[#allocation3 + $0x180] sm:$0xff] %v2595
    %2612 = vst [vmem:[#allocation3 + $0x188] sm:$0xff] %v2596
    %2613 = vst [vmem:[#allocation3 + $0x190] sm:$0xff] %v2597
    %2614 = vst [vmem:[#allocation3 + $0x198] sm:$0xff] %v2598
    %2615 = vst [vmem:[#allocation3 + $0x1a0] sm:$0xff] %v2599
    %2616 = vst [vmem:[#allocation3 + $0x1a8] sm:$0xff] %v2600
    %2617 = vst [vmem:[#allocation3 + $0x1b0] sm:$0xff] %v2601
    %2618 = vst [vmem:[#allocation3 + $0x1b8] sm:$0xff] %v2602
    %v2619 = vmul.f32 %v2164, %v1113
    %v2620 = vmul.f32 %v2165, %v1116
    %v2621 = vmul.f32 %v2166, %v1115
    %v2622 = vmul.f32 %v2168, %v1113
    %v2623 = vmul.f32 %v2169, %v1116
    %v2624 = vmul.f32 %v2170, %v1115
    %v2625 = vmul.f32 %v2172, %v1113
    %v2626 = vmul.f32 %v2173, %v1116
    %v2627 = vmul.f32 %v2174, %v1115
    %v2628 = vmul.f32 %v2176, %v1113
    %v2629 = vmul.f32 %v2177, %v1116
    %v2630 = vmul.f32 %v2178, %v1115
    %2643 = vrot.lane.b32.xlu0 %v2619, 112
    %v2644 = vpop.permute.xlu0 %2643
    %2645 = vrot.lane.b32.xlu0 %v2620, 112
    %v2646 = vpop.permute.xlu0 %2645
    %2647 = vrot.lane.b32.xlu0 %v2621, 112
    %v2648 = vpop.permute.xlu0 %2647
    %2649 = vrot.lane.b32.xlu0 %v2622, 112
    %v2650 = vpop.permute.xlu0 %2649
    %2651 = vrot.lane.b32.xlu0 %v2623, 112
    %v2652 = vpop.permute.xlu0 %2651
    %2653 = vrot.lane.b32.xlu0 %v2624, 112
    %v2654 = vpop.permute.xlu0 %2653
    %2655 = vrot.lane.b32.xlu0 %v2625, 112
    %v2656 = vpop.permute.xlu0 %2655
    %2657 = vrot.lane.b32.xlu0 %v2626, 112
    %v2658 = vpop.permute.xlu0 %2657
    %2659 = vrot.lane.b32.xlu0 %v2627, 112
    %v2660 = vpop.permute.xlu0 %2659
    %2661 = vrot.lane.b32.xlu0 %v2628, 112
    %v2662 = vpop.permute.xlu0 %2661
    %2663 = vrot.lane.b32.xlu0 %v2629, 112
    %v2664 = vpop.permute.xlu0 %2663
    %2665 = vrot.lane.b32.xlu0 %v2630, 112
    %v2666 = vpop.permute.xlu0 %2665
    %v2667 = vsel %vm687, %v2644, %v2646
    %v2668 = vsel %vm687, %v2646, %v2648
    %v2669 = vsel %vm687, %v2650, %v2652
    %v2670 = vsel %vm687, %v2652, %v2654
    %v2671 = vsel %vm687, %v2656, %v2658
    %v2672 = vsel %vm687, %v2658, %v2660
    %v2673 = vsel %vm687, %v2662, %v2664
    %v2674 = vsel %vm687, %v2664, %v2666
    %2683 = vst [vmem:[#allocation3 + $0x1c0] sm:$0xff] %v2667
    %2684 = vst [vmem:[#allocation3 + $0x1c8] sm:$0xff] %v2668
    %2685 = vst [vmem:[#allocation3 + $0x1d0] sm:$0xff] %v2669
    %2686 = vst [vmem:[#allocation3 + $0x1d8] sm:$0xff] %v2670
    %2687 = vst [vmem:[#allocation3 + $0x1e0] sm:$0xff] %v2671
    %2688 = vst [vmem:[#allocation3 + $0x1e8] sm:$0xff] %v2672
    %2689 = vst [vmem:[#allocation3 + $0x1f0] sm:$0xff] %v2673
    %2690 = vst [vmem:[#allocation3 + $0x1f8] sm:$0xff] %v2674
    %v2691 = vmul.f32 %v2164, %v1196
    %v2692 = vmul.f32 %v2165, %v1199
    %v2693 = vmul.f32 %v2166, %v1198
    %v2694 = vmul.f32 %v2168, %v1196
    %v2695 = vmul.f32 %v2169, %v1199
    %v2696 = vmul.f32 %v2170, %v1198
    %v2697 = vmul.f32 %v2172, %v1196
    %v2698 = vmul.f32 %v2173, %v1199
    %v2699 = vmul.f32 %v2174, %v1198
    %v2700 = vmul.f32 %v2176, %v1196
    %v2701 = vmul.f32 %v2177, %v1199
    %v2702 = vmul.f32 %v2178, %v1198
    %2715 = vrot.lane.b32.xlu0 %v2691, 111
    %v2716 = vpop.permute.xlu0 %2715
    %2717 = vrot.lane.b32.xlu0 %v2692, 111
    %v2718 = vpop.permute.xlu0 %2717
    %2719 = vrot.lane.b32.xlu0 %v2693, 111
    %v2720 = vpop.permute.xlu0 %2719
    %2721 = vrot.lane.b32.xlu0 %v2694, 111
    %v2722 = vpop.permute.xlu0 %2721
    %2723 = vrot.lane.b32.xlu0 %v2695, 111
    %v2724 = vpop.permute.xlu0 %2723
    %2725 = vrot.lane.b32.xlu0 %v2696, 111
    %v2726 = vpop.permute.xlu0 %2725
    %2727 = vrot.lane.b32.xlu0 %v2697, 111
    %v2728 = vpop.permute.xlu0 %2727
    %2729 = vrot.lane.b32.xlu0 %v2698, 111
    %v2730 = vpop.permute.xlu0 %2729
    %2731 = vrot.lane.b32.xlu0 %v2699, 111
    %v2732 = vpop.permute.xlu0 %2731
    %2733 = vrot.lane.b32.xlu0 %v2700, 111
    %v2734 = vpop.permute.xlu0 %2733
    %2735 = vrot.lane.b32.xlu0 %v2701, 111
    %v2736 = vpop.permute.xlu0 %2735
    %2737 = vrot.lane.b32.xlu0 %v2702, 111
    %v2738 = vpop.permute.xlu0 %2737
    %v2739 = vsel %vm602, %v2716, %v2718
    %v2740 = vsel %vm602, %v2718, %v2720
    %v2741 = vsel %vm602, %v2722, %v2724
    %v2742 = vsel %vm602, %v2724, %v2726
    %v2743 = vsel %vm602, %v2728, %v2730
    %v2744 = vsel %vm602, %v2730, %v2732
    %v2745 = vsel %vm602, %v2734, %v2736
    %v2746 = vsel %vm602, %v2736, %v2738
    %2755 = vst [vmem:[#allocation3 + $0x200] sm:$0xff] %v2739
    %2756 = vst [vmem:[#allocation3 + $0x208] sm:$0xff] %v2740
    %2757 = vst [vmem:[#allocation3 + $0x210] sm:$0xff] %v2741
    %2758 = vst [vmem:[#allocation3 + $0x218] sm:$0xff] %v2742
    %2759 = vst [vmem:[#allocation3 + $0x220] sm:$0xff] %v2743
    %2760 = vst [vmem:[#allocation3 + $0x228] sm:$0xff] %v2744
    %2761 = vst [vmem:[#allocation3 + $0x230] sm:$0xff] %v2745
    %2762 = vst [vmem:[#allocation3 + $0x238] sm:$0xff] %v2746
    %v2763 = vld [vmem:[#allocation3] sm:$0xff]
    %v2764 = vld [vmem:[#allocation3 + $0x8] sm:$0xff]
    %v2765 = vld [vmem:[#allocation3 + $0x10] sm:$0xff]
    %v2766 = vld [vmem:[#allocation3 + $0x18] sm:$0xff]
    %v2767 = vld [vmem:[#allocation3 + $0x20] sm:$0xff]
    %v2768 = vld [vmem:[#allocation3 + $0x28] sm:$0xff]
    %v2769 = vld [vmem:[#allocation3 + $0x30] sm:$0xff]
    %v2770 = vld [vmem:[#allocation3 + $0x38] sm:$0xff]
    %v2771 = vld [vmem:[#allocation3 + $0x40] sm:$0xff]
    %v2772 = vld [vmem:[#allocation3 + $0x48] sm:$0xff]
    %v2773 = vld [vmem:[#allocation3 + $0x50] sm:$0xff]
    %v2774 = vld [vmem:[#allocation3 + $0x58] sm:$0xff]
    %v2775 = vld [vmem:[#allocation3 + $0x60] sm:$0xff]
    %v2776 = vld [vmem:[#allocation3 + $0x68] sm:$0xff]
    %v2777 = vld [vmem:[#allocation3 + $0x70] sm:$0xff]
    %v2778 = vld [vmem:[#allocation3 + $0x78] sm:$0xff]
    %v2779 = vld [vmem:[#allocation3 + $0x80] sm:$0xff]
    %v2780 = vld [vmem:[#allocation3 + $0x88] sm:$0xff]
    %v2781 = vld [vmem:[#allocation3 + $0x90] sm:$0xff]
    %v2782 = vld [vmem:[#allocation3 + $0x98] sm:$0xff]
    %v2783 = vld [vmem:[#allocation3 + $0xa0] sm:$0xff]
    %v2784 = vld [vmem:[#allocation3 + $0xa8] sm:$0xff]
    %v2785 = vld [vmem:[#allocation3 + $0xb0] sm:$0xff]
    %v2786 = vld [vmem:[#allocation3 + $0xb8] sm:$0xff]
    %v2787 = vld [vmem:[#allocation3 + $0xc0] sm:$0xff]
    %v2788 = vld [vmem:[#allocation3 + $0xc8] sm:$0xff]
    %v2789 = vld [vmem:[#allocation3 + $0xd0] sm:$0xff]
    %v2790 = vld [vmem:[#allocation3 + $0xd8] sm:$0xff]
    %v2791 = vld [vmem:[#allocation3 + $0xe0] sm:$0xff]
    %v2792 = vld [vmem:[#allocation3 + $0xe8] sm:$0xff]
    %v2793 = vld [vmem:[#allocation3 + $0xf0] sm:$0xff]
    %v2794 = vld [vmem:[#allocation3 + $0xf8] sm:$0xff]
    %v2795 = vld [vmem:[#allocation3 + $0x100] sm:$0xff]
    %v2796 = vld [vmem:[#allocation3 + $0x108] sm:$0xff]
    %v2797 = vld [vmem:[#allocation3 + $0x110] sm:$0xff]
    %v2798 = vld [vmem:[#allocation3 + $0x118] sm:$0xff]
    %v2799 = vld [vmem:[#allocation3 + $0x120] sm:$0xff]
    %v2800 = vld [vmem:[#allocation3 + $0x128] sm:$0xff]
    %v2801 = vld [vmem:[#allocation3 + $0x130] sm:$0xff]
    %v2802 = vld [vmem:[#allocation3 + $0x138] sm:$0xff]
    %v2803 = vld [vmem:[#allocation3 + $0x140] sm:$0xff]
    %v2804 = vld [vmem:[#allocation3 + $0x148] sm:$0xff]
    %v2805 = vld [vmem:[#allocation3 + $0x150] sm:$0xff]
    %v2806 = vld [vmem:[#allocation3 + $0x158] sm:$0xff]
    %v2807 = vld [vmem:[#allocation3 + $0x160] sm:$0xff]
    %v2808 = vld [vmem:[#allocation3 + $0x168] sm:$0xff]
    %v2809 = vld [vmem:[#allocation3 + $0x170] sm:$0xff]
    %v2810 = vld [vmem:[#allocation3 + $0x178] sm:$0xff]
    %v2811 = vld [vmem:[#allocation3 + $0x180] sm:$0xff]
    %v2812 = vld [vmem:[#allocation3 + $0x188] sm:$0xff]
    %v2813 = vld [vmem:[#allocation3 + $0x190] sm:$0xff]
    %v2814 = vld [vmem:[#allocation3 + $0x198] sm:$0xff]
    %v2815 = vld [vmem:[#allocation3 + $0x1a0] sm:$0xff]
    %v2816 = vld [vmem:[#allocation3 + $0x1a8] sm:$0xff]
    %v2817 = vld [vmem:[#allocation3 + $0x1b0] sm:$0xff]
    %v2818 = vld [vmem:[#allocation3 + $0x1b8] sm:$0xff]
    %v2819 = vld [vmem:[#allocation3 + $0x1c0] sm:$0xff]
    %v2820 = vld [vmem:[#allocation3 + $0x1c8] sm:$0xff]
    %v2821 = vld [vmem:[#allocation3 + $0x1d0] sm:$0xff]
    %v2822 = vld [vmem:[#allocation3 + $0x1d8] sm:$0xff]
    %v2823 = vld [vmem:[#allocation3 + $0x1e0] sm:$0xff]
    %v2824 = vld [vmem:[#allocation3 + $0x1e8] sm:$0xff]
    %v2825 = vld [vmem:[#allocation3 + $0x1f0] sm:$0xff]
    %v2826 = vld [vmem:[#allocation3 + $0x1f8] sm:$0xff]
    %v2827 = vld [vmem:[#allocation3 + $0x200] sm:$0xff]
    %v2828 = vld [vmem:[#allocation3 + $0x208] sm:$0xff]
    %v2829 = vld [vmem:[#allocation3 + $0x210] sm:$0xff]
    %v2830 = vld [vmem:[#allocation3 + $0x218] sm:$0xff]
    %v2831 = vld [vmem:[#allocation3 + $0x220] sm:$0xff]
    %v2832 = vld [vmem:[#allocation3 + $0x228] sm:$0xff]
    %v2833 = vld [vmem:[#allocation3 + $0x230] sm:$0xff]
    %v2834 = vld [vmem:[#allocation3 + $0x238] sm:$0xff]
    %2835 = vmatpush.msra.mxu0 %v2793
    %2836 = vmatpush.msra.mxu0 %v2791
    %2837 = vmatpush.msra.mxu0 %v2789
    %2838 = vmatpush.msra.mxu0 %v2787
    %2839 = vmatpush.msra.mxu0 %v2785
    %2840 = vmatpush.msra.mxu0 %v2783
    %2841 = vmatpush.msra.mxu0 %v2781
    %2842 = vmatpush.msra.mxu0 %v2779
    %2843 = vmatpush.msra.mxu0 %v2777
    %2844 = vmatpush.msra.mxu0 %v2775
    %2845 = vmatpush.msra.mxu0 %v2773
    %2846 = vmatpush.msra.mxu0 %v2771
    %2847 = vmatpush.msra.mxu0 %v2769
    %2848 = vmatpush.msra.mxu0 %v2767
    %2849 = vmatpush.msra.mxu0 %v2765
    %2850 = vmatpush.msra.mxu0 %v2763
    %2851 = vmatmul.f32.gmra.mxu0 %v124
    %v2852 = vpop.f32.mrf.mxu0
    %v2853 = vadd.f32 0.0, %v2852
    %2854 = vmatmul.f32.gmra.mxu0 %v127
    %v2855 = vpop.f32.mrf.mxu0
    %v2856 = vadd.f32 0.0, %v2855
    %2857 = vmatmul.f32.gmra.mxu0 %v130
    %v2858 = vpop.f32.mrf.mxu0
    %v2859 = vadd.f32 0.0, %v2858
    %2860 = vmatmul.f32.gmra.mxu0 %v133
    %v2861 = vpop.f32.mrf.mxu0
    %v2862 = vadd.f32 0.0, %v2861
    %2863 = vdwg.mxu0
    %2864 = vmatpush.msra.mxu0 %v2825
    %2865 = vmatpush.msra.mxu0 %v2823
    %2866 = vmatpush.msra.mxu0 %v2821
    %2867 = vmatpush.msra.mxu0 %v2819
    %2868 = vmatpush.msra.mxu0 %v2817
    %2869 = vmatpush.msra.mxu0 %v2815
    %2870 = vmatpush.msra.mxu0 %v2813
    %2871 = vmatpush.msra.mxu0 %v2811
    %2872 = vmatpush.msra.mxu0 %v2809
    %2873 = vmatpush.msra.mxu0 %v2807
    %2874 = vmatpush.msra.mxu0 %v2805
    %2875 = vmatpush.msra.mxu0 %v2803
    %2876 = vmatpush.msra.mxu0 %v2801
    %2877 = vmatpush.msra.mxu0 %v2799
    %2878 = vmatpush.msra.mxu0 %v2797
    %2879 = vmatpush.msra.mxu0 %v2795
    %2880 = vmatmul.f32.gmra.mxu0 %v125
    %v2881 = vpop.f32.mrf.mxu0
    %v2882 = vadd.f32 %v2853, %v2881
    %2883 = vmatmul.f32.gmra.mxu0 %v128
    %v2884 = vpop.f32.mrf.mxu0
    %v2885 = vadd.f32 %v2856, %v2884
    %2886 = vmatmul.f32.gmra.mxu0 %v131
    %v2887 = vpop.f32.mrf.mxu0
    %v2888 = vadd.f32 %v2859, %v2887
    %2889 = vmatmul.f32.gmra.mxu0 %v134
    %v2890 = vpop.f32.mrf.mxu0
    %v2891 = vadd.f32 %v2862, %v2890
    %2892 = vdwg.mxu0
    %2893 = vmatpush.msra.mxu0 0.0
    %2894 = vmatpush.msra.mxu0 0.0
    %2895 = vmatpush.msra.mxu0 0.0
    %2896 = vmatpush.msra.mxu0 0.0
    %2897 = vmatpush.msra.mxu0 0.0
    %2898 = vmatpush.msra.mxu0 0.0
    %2899 = vmatpush.msra.mxu0 0.0
    %2900 = vmatpush.msra.mxu0 0.0
    %2901 = vmatpush.msra.mxu0 0.0
    %2902 = vmatpush.msra.mxu0 0.0
    %2903 = vmatpush.msra.mxu0 0.0
    %2904 = vmatpush.msra.mxu0 0.0
    %2905 = vmatpush.msra.mxu0 %v2833
    %2906 = vmatpush.msra.mxu0 %v2831
    %2907 = vmatpush.msra.mxu0 %v2829
    %2908 = vmatpush.msra.mxu0 %v2827
    %2909 = vmatmul.f32.gmra.mxu0 %v1348
    %v2910 = vpop.f32.mrf.mxu0
    %v2911 = vadd.f32 %v2882, %v2910
    %2912 = vmatmul.f32.gmra.mxu0 %v1351
    %v2913 = vpop.f32.mrf.mxu0
    %v2914 = vadd.f32 %v2885, %v2913
    %2915 = vmatmul.f32.gmra.mxu0 %v1354
    %v2916 = vpop.f32.mrf.mxu0
    %v2917 = vadd.f32 %v2888, %v2916
    %2918 = vmatmul.f32.gmra.mxu0 %v1357
    %v2919 = vpop.f32.mrf.mxu0
    %v2920 = vadd.f32 %v2891, %v2919
    %2921 = vdwg.mxu0
    %2922 = vmatpush.msra.mxu0 %v2794
    %2923 = vmatpush.msra.mxu0 %v2792
    %2924 = vmatpush.msra.mxu0 %v2790
    %2925 = vmatpush.msra.mxu0 %v2788
    %2926 = vmatpush.msra.mxu0 %v2786
    %2927 = vmatpush.msra.mxu0 %v2784
    %2928 = vmatpush.msra.mxu0 %v2782
    %2929 = vmatpush.msra.mxu0 %v2780
    %2930 = vmatpush.msra.mxu0 %v2778
    %2931 = vmatpush.msra.mxu0 %v2776
    %2932 = vmatpush.msra.mxu0 %v2774
    %2933 = vmatpush.msra.mxu0 %v2772
    %2934 = vmatpush.msra.mxu0 %v2770
    %2935 = vmatpush.msra.mxu0 %v2768
    %2936 = vmatpush.msra.mxu0 %v2766
    %2937 = vmatpush.msra.mxu0 %v2764
    %2938 = vmatmul.f32.gmra.mxu0 %v124
    %v2939 = vpop.f32.mrf.mxu0
    %v2940 = vadd.f32 0.0, %v2939
    %2941 = vmatmul.f32.gmra.mxu0 %v127
    %v2942 = vpop.f32.mrf.mxu0
    %v2943 = vadd.f32 0.0, %v2942
    %2944 = vmatmul.f32.gmra.mxu0 %v130
    %v2945 = vpop.f32.mrf.mxu0
    %v2946 = vadd.f32 0.0, %v2945
    %2947 = vmatmul.f32.gmra.mxu0 %v133
    %v2948 = vpop.f32.mrf.mxu0
    %v2949 = vadd.f32 0.0, %v2948
    %2950 = vdwg.mxu0
    %2951 = vmatpush.msra.mxu0 %v2826
    %2952 = vmatpush.msra.mxu0 %v2824
    %2953 = vmatpush.msra.mxu0 %v2822
    %2954 = vmatpush.msra.mxu0 %v2820
    %2955 = vmatpush.msra.mxu0 %v2818
    %2956 = vmatpush.msra.mxu0 %v2816
    %2957 = vmatpush.msra.mxu0 %v2814
    %2958 = vmatpush.msra.mxu0 %v2812
    %2959 = vmatpush.msra.mxu0 %v2810
    %2960 = vmatpush.msra.mxu0 %v2808
    %2961 = vmatpush.msra.mxu0 %v2806
    %2962 = vmatpush.msra.mxu0 %v2804
    %2963 = vmatpush.msra.mxu0 %v2802
    %2964 = vmatpush.msra.mxu0 %v2800
    %2965 = vmatpush.msra.mxu0 %v2798
    %2966 = vmatpush.msra.mxu0 %v2796
    %2967 = vmatmul.f32.gmra.mxu0 %v125
    %v2968 = vpop.f32.mrf.mxu0
    %v2969 = vadd.f32 %v2940, %v2968
    %2970 = vmatmul.f32.gmra.mxu0 %v128
    %v2971 = vpop.f32.mrf.mxu0
    %v2972 = vadd.f32 %v2943, %v2971
    %2973 = vmatmul.f32.gmra.mxu0 %v131
    %v2974 = vpop.f32.mrf.mxu0
    %v2975 = vadd.f32 %v2946, %v2974
    %2976 = vmatmul.f32.gmra.mxu0 %v134
    %v2977 = vpop.f32.mrf.mxu0
    %v2978 = vadd.f32 %v2949, %v2977
    %2979 = vdwg.mxu0
    %2980 = vmatpush.msra.mxu0 0.0
    %2981 = vmatpush.msra.mxu0 0.0
    %2982 = vmatpush.msra.mxu0 0.0
    %2983 = vmatpush.msra.mxu0 0.0
    %2984 = vmatpush.msra.mxu0 0.0
    %2985 = vmatpush.msra.mxu0 0.0
    %2986 = vmatpush.msra.mxu0 0.0
    %2987 = vmatpush.msra.mxu0 0.0
    %2988 = vmatpush.msra.mxu0 0.0
    %2989 = vmatpush.msra.mxu0 0.0
    %2990 = vmatpush.msra.mxu0 0.0
    %2991 = vmatpush.msra.mxu0 0.0
    %2992 = vmatpush.msra.mxu0 %v2834
    %2993 = vmatpush.msra.mxu0 %v2832
    %2994 = vmatpush.msra.mxu0 %v2830
    %2995 = vmatpush.msra.mxu0 %v2828
    %2996 = vmatmul.f32.gmra.mxu0 %v1348
    %v2997 = vpop.f32.mrf.mxu0
    %v2998 = vadd.f32 %v2969, %v2997
    %2999 = vmatmul.f32.gmra.mxu0 %v1351
    %v3000 = vpop.f32.mrf.mxu0
    %v3001 = vadd.f32 %v2972, %v3000
    %3002 = vmatmul.f32.gmra.mxu0 %v1354
    %v3003 = vpop.f32.mrf.mxu0
    %v3004 = vadd.f32 %v2975, %v3003
    %3005 = vmatmul.f32.gmra.mxu0 %v1357
    %v3006 = vpop.f32.mrf.mxu0
    %v3007 = vadd.f32 %v2978, %v3006
    %3008 = vdwg.mxu0
    %v3009 = vmul.f32 %v2911, %v1535
    %v3010 = vmul.f32 %v2998, %v1535
    %v3011 = vmul.f32 %v2914, %v1539
    %v3012 = vmul.f32 %v3001, %v1539
    %v3013 = vmul.f32 %v2917, %v1543
    %v3014 = vmul.f32 %v3004, %v1543
    %v3015 = vmul.f32 %v2920, %v1547
    %v3016 = vmul.f32 %v3007, %v1547
    %v3017 = vadd.f32 %v3009, %v1559
    %v3018 = vadd.f32 %v3010, %v1559
    %v3019 = vadd.f32 %v3011, %v1563
    %v3020 = vadd.f32 %v3012, %v1563
    %v3021 = vadd.f32 %v3013, %v1567
    %v3022 = vadd.f32 %v3014, %v1567
    %v3023 = vadd.f32 %v3015, %v1571
    %v3024 = vadd.f32 %v3016, %v1571
    %s3025 = scalar_lea.vmem [#allocation7], 64
    %v3026 = vld [vmem:[%s3025] sm:$0xff]
    %v3027 = vld [vmem:[%s3025 + $0x8] sm:$0xff]
    %v3028 = vld [vmem:[%s3025 + $0x10] sm:$0xff]
    %v3029 = vld [vmem:[%s3025 + $0x18] sm:$0xff]
    %v3030 = vld [vmem:[%s3025 + $0x20] sm:$0xff]
    %v3031 = vld [vmem:[%s3025 + $0x28] sm:$0xff]
    %v3032 = vld [vmem:[%s3025 + $0x30] sm:$0xff]
    %v3033 = vld [vmem:[%s3025 + $0x38] sm:$0xff]
    %v3034 = vadd.f32 %v3017, %v3026
    %v3035 = vadd.f32 %v3018, %v3027
    %v3036 = vadd.f32 %v3019, %v3028
    %v3037 = vadd.f32 %v3020, %v3029
    %v3038 = vadd.f32 %v3021, %v3030
    %v3039 = vadd.f32 %v3022, %v3031
    %v3040 = vadd.f32 %v3023, %v3032
    %v3041 = vadd.f32 %v3024, %v3033
    %v3042 = vmax.f32 %v3034, 0.0
    %v3043 = vmax.f32 %v3035, 0.0
    %v3044 = vmax.f32 %v3036, 0.0
    %v3045 = vmax.f32 %v3037, 0.0
    %v3046 = vmax.f32 %v3038, 0.0
    %v3047 = vmax.f32 %v3039, 0.0
    %v3048 = vmax.f32 %v3040, 0.0
    %v3049 = vmax.f32 %v3041, 0.0
    %v3050 = vadd.f32 %v3042, %v3043
    %3051 = vadd.xlane.f32.xlu0 %v3050
    %v3052 = vpop.xlane.xlu0 %3051
    %v3053 = vadd.f32 %v3044, %v3045
    %3054 = vadd.xlane.f32.xlu0 %v3053
    %v3055 = vpop.xlane.xlu0 %3054
    %v3056 = vadd.f32 %v3046, %v3047
    %3057 = vadd.xlane.f32.xlu0 %v3056
    %v3058 = vpop.xlane.xlu0 %3057
    %v3059 = vadd.f32 %v3048, %v3049
    %3060 = vadd.xlane.f32.xlu0 %v3059
    %v3061 = vpop.xlane.xlu0 %3060
    %v3062 = vmul.f32 %v3052, 0.00390625
    %v3063 = vmul.f32 %v3055, 0.00390625
    %v3064 = vmul.f32 %v3058, 0.00390625
    %v3065 = vmul.f32 %v3061, 0.00390625
    %v3066 = vmul.f32 %v111, %v3062
    %v3067 = vmul.f32 %v112, %v3063
    %v3068 = vmul.f32 %v113, %v3064
    %v3069 = vmul.f32 %v114, %v3065
    %v3070 = vsel %vm1625, %v3066, 0.0
    %v3071 = vsel %vm1625, %v3067, 0.0
    %v3072 = vadd.f32 %v3070, %v3071
    %v3073 = vsel %vm1625, %v3068, 0.0
    %v3074 = vadd.f32 %v3072, %v3073
    %v3075 = vsel %vm1625, %v3069, 0.0
    %v3076 = vadd.f32 %v3074, %v3075
    %v3077 = vrot.slane %v3076, 4
    %v3078 = vadd.f32 %v3076, %v3077
    %v3079 = vrot.slane %v3078, 2
    %v3080 = vadd.f32 %v3078, %v3079
    %v3081 = vrot.slane %v3080, 1
    %v3082 = vadd.f32 %v3080, %v3081
    %v3083 = vadd.f32 %v3082, %v1642
    %v3084 = vmax.f32 %v3083, 0.0
    %v3085 = vperm.slane %v3084, 0
    %3087 = vrot.lane.b32.xlu0 %v3085, 2
    %v3088 = vpop.permute.xlu0 %3087
    %v3090 = vmul.f32 %v111, %v3088
    %v3091 = vmul.f32 %v112, %v3088
    %v3092 = vmul.f32 %v113, %v3088
    %v3093 = vmul.f32 %v114, %v3088
    %3098 = vrot.lane.b32.xlu0 %v3090, 121
    %v3099 = vpop.permute.xlu0 %3098
    %3100 = vrot.lane.b32.xlu0 %v3091, 121
    %v3101 = vpop.permute.xlu0 %3100
    %3102 = vrot.lane.b32.xlu0 %v3092, 121
    %v3103 = vpop.permute.xlu0 %3102
    %3104 = vrot.lane.b32.xlu0 %v3093, 121
    %v3105 = vpop.permute.xlu0 %3104
    %v3110 = vsel %vm1671, %v3099, 0.0
    %3111 = vadd.xlane.f32.xlu0 %v3110
    %v3112 = vpop.xlane.xlu0 %3111
    %v3113 = vsel %vm1671, %v3101, 0.0
    %3114 = vadd.xlane.f32.xlu0 %v3113
    %v3115 = vpop.xlane.xlu0 %3114
    %v3116 = vsel %vm1671, %v3103, 0.0
    %3117 = vadd.xlane.f32.xlu0 %v3116
    %v3118 = vpop.xlane.xlu0 %3117
    %v3119 = vsel %vm1671, %v3105, 0.0
    %3120 = vadd.xlane.f32.xlu0 %v3119
    %v3121 = vpop.xlane.xlu0 %3120
    %v3122 = vadd.f32 %v3112, %v111
    %v3123 = vadd.f32 %v3115, %v112
    %v3124 = vadd.f32 %v3118, %v113
    %v3125 = vadd.f32 %v3121, %v114
    %v3126 = vsub.f32 0.0, %v3122
    %v3127 = vsub.f32 0.0, %v3123
    %v3128 = vsub.f32 0.0, %v3124
    %v3129 = vsub.f32 0.0, %v3125
    %v3130 = vmul.f32 %v3126, 1.442695
    %v3131 = vpow.pop %v3130
    %v3132 = vmul.f32 %v3127, 1.442695
    %v3133 = vpow.pop %v3132
    %v3134 = vmul.f32 %v3128, 1.442695
    %v3135 = vpow.pop %v3134
    %v3136 = vmul.f32 %v3129, 1.442695
    %v3137 = vpow.pop %v3136
    %v3138 = vadd.f32 %v3131, 1.0
    %v3139 = vadd.f32 %v3133, 1.0
    %v3140 = vadd.f32 %v3135, 1.0
    %v3141 = vadd.f32 %v3137, 1.0
    %v3142 = vrcp.pop %v3138
    %v3143 = vmul.f32 %v3138, %v3142
    %v3144 = vsub.f32 1.0, %v3143
    %v3145 = vmul.f32 %v3142, %v3144
    %v3146 = vadd.f32 %v3142, %v3145
    %vm3147 = vweird.f32 %v3138
    %vm3148 = vweird.f32 %v3142
    %vm3149 = vmor %vm3147, %vm3148
    %v3150 = vsel %vm3149, %v3142, %v3146
    %v3151 = vand.u32 2147483647, %v3138
    %vm3152 = vcmp.eq.f32.partialorder %v3151, 8.507059e+37
    %v3153 = vand.u32 %v3138, 2147483648
    %v3154 = vor.u32 1.1754944e-38, %v3153
    %v3155 = vsel %vm3152, %v3154, %v3150
    %v3156 = vmul.f32 1.0, %v3155
    %v3157 = vrcp.pop %v3139
    %v3158 = vmul.f32 %v3139, %v3157
    %v3159 = vsub.f32 1.0, %v3158
    %v3160 = vmul.f32 %v3157, %v3159
    %v3161 = vadd.f32 %v3157, %v3160
    %vm3162 = vweird.f32 %v3139
    %vm3163 = vweird.f32 %v3157
    %vm3164 = vmor %vm3162, %vm3163
    %v3165 = vsel %vm3164, %v3157, %v3161
    %v3166 = vand.u32 2147483647, %v3139
    %vm3167 = vcmp.eq.f32.partialorder %v3166, 8.507059e+37
    %v3168 = vand.u32 %v3139, 2147483648
    %v3169 = vor.u32 1.1754944e-38, %v3168
    %v3170 = vsel %vm3167, %v3169, %v3165
    %v3171 = vmul.f32 1.0, %v3170
    %v3172 = vrcp.pop %v3140
    %v3173 = vmul.f32 %v3140, %v3172
    %v3174 = vsub.f32 1.0, %v3173
    %v3175 = vmul.f32 %v3172, %v3174
    %v3176 = vadd.f32 %v3172, %v3175
    %vm3177 = vweird.f32 %v3140
    %vm3178 = vweird.f32 %v3172
    %vm3179 = vmor %vm3177, %vm3178
    %v3180 = vsel %vm3179, %v3172, %v3176
    %v3181 = vand.u32 2147483647, %v3140
    %vm3182 = vcmp.eq.f32.partialorder %v3181, 8.507059e+37
    %v3183 = vand.u32 %v3140, 2147483648
    %v3184 = vor.u32 1.1754944e-38, %v3183
    %v3185 = vsel %vm3182, %v3184, %v3180
    %v3186 = vmul.f32 1.0, %v3185
    %v3187 = vrcp.pop %v3141
    %v3188 = vmul.f32 %v3141, %v3187
    %v3189 = vsub.f32 1.0, %v3188
    %v3190 = vmul.f32 %v3187, %v3189
    %v3191 = vadd.f32 %v3187, %v3190
    %vm3192 = vweird.f32 %v3141
    %vm3193 = vweird.f32 %v3187
    %vm3194 = vmor %vm3192, %vm3193
    %v3195 = vsel %vm3194, %v3187, %v3191
    %v3196 = vand.u32 2147483647, %v3141
    %vm3197 = vcmp.eq.f32.partialorder %v3196, 8.507059e+37
    %v3198 = vand.u32 %v3141, 2147483648
    %v3199 = vor.u32 1.1754944e-38, %v3198
    %v3200 = vsel %vm3197, %v3199, %v3195
    %v3201 = vmul.f32 1.0, %v3200
    %3203 = vset.pattern.permute.xlu0 4
    %3204 = vperm.xlu0 %3203, %v3156
    %v3205 = vpop.permute.xlu0 %3204
    %3208 = vset.pattern.permute.xlu0 4
    %3209 = vperm.xlu0 %3208, %v3171
    %v3210 = vpop.permute.xlu0 %3209
    %3213 = vset.pattern.permute.xlu0 4
    %3214 = vperm.xlu0 %3213, %v3186
    %v3215 = vpop.permute.xlu0 %3214
    %3218 = vset.pattern.permute.xlu0 4
    %3219 = vperm.xlu0 %3218, %v3201
    %v3220 = vpop.permute.xlu0 %3219
    %v3222 = vmul.f32 %v3042, %v3205
    %v3223 = vmul.f32 %v3043, %v3205
    %v3224 = vmul.f32 %v3044, %v3210
    %v3225 = vmul.f32 %v3045, %v3210
    %v3226 = vmul.f32 %v3046, %v3215
    %v3227 = vmul.f32 %v3047, %v3215
    %v3228 = vmul.f32 %v3048, %v3220
    %v3229 = vmul.f32 %v3049, %v3220
    %s3230 = scalar_lea.vmem [#allocation12], 64
    %3231 = vst [vmem:[%s3230] sm:$0xff] %v3222
    %3232 = vst [vmem:[%s3230 + $0x8] sm:$0xff] %v3223
    %3233 = vst [vmem:[%s3230 + $0x10] sm:$0xff] %v3224
    %3234 = vst [vmem:[%s3230 + $0x18] sm:$0xff] %v3225
    %3235 = vst [vmem:[%s3230 + $0x20] sm:$0xff] %v3226
    %3236 = vst [vmem:[%s3230 + $0x28] sm:$0xff] %v3227
    %3237 = vst [vmem:[%s3230 + $0x30] sm:$0xff] %v3228
    %3238 = vst [vmem:[%s3230 + $0x38] sm:$0xff] %v3229
    // Predicated region
    $region50: #{tpu_custom_call.1} parent=1 // pred_check
      _
    $region51: #{tpu_custom_call.1} parent=1 // pred_check_branch
      %3240 = sbr.rel (0) target = $region53
    $region52: #{tpu_custom_call.1} parent=1 // pred_region
      %3242 = vsyncadd [#allocation6], 0
      %s3243 = sshll.u32 [#allocation12], 4
      %s3244 = int_to_ptr.vmem [resolvable:$true] %s3243
      %s3245 = sshll.u32 %s7, 4
      %s3246 = int_to_ptr.hbm [resolvable:$true] %s3245
      %3251 = dma.vmem_to_hbm [thread:$0]  %s3244, 2048, %s3246, [#allocation6], 256, 256, 16
    $region53: #{tpu_custom_call.1} parent=1 // pred_fallthru
      _
    // Predicated region
    $region54: #{tpu_custom_call.1} parent=1 // pred_check
      _
    $region55: #{tpu_custom_call.1} parent=1 // pred_check_branch
      %3253 = sbr.rel (0) target = $region57
    $region56: #{tpu_custom_call.1} parent=1 // pred_region
      %3255 = dma.done [#allocation6], 2048
    $region57: #{tpu_custom_call.1} parent=1 // pred_fallthru
      _
    %3256 = vsyncpa [#allocation5], 1
    %3257 = vsyncpa [#allocation8], 1
    %3258 = vsyncpa [#allocation11], 1
    %3259 = vsyncpa [#allocation6], 1

</llo_original>
